<compile_context>
chip_gen: v7x
topology: tpu7x:2x2x1
jax: 0.10.0
libtpu: 0.0.40
codegen_flags: <defaults>
</compile_context>

<pallas_src>
import math

import jax
import jax.numpy as jnp
from jax import lax
from jax.experimental import pallas as pl
from jax.experimental.pallas import tpu as pltpu

# ---- small synthetic "bert-base"-style config (real bert-base is 768/12/12) --------
VOCAB = 100
HIDDEN = 32
NUM_HEADS = 2
HEAD_DIM = HIDDEN // NUM_HEADS
FFN = 4 * HIDDEN
NUM_LAYERS = 2
MAX_POS = 16
NUM_TAGS = 5
LN_EPS = 1e-12
NEG_INF = -1e9  # additive attention-mask value

N_PER_LAYER = 12                                  # wqkv,bqkv,wo,bo,g1,b1,wi,bi,wo2,bo2,g2,b2
N_ENC = 2 + N_PER_LAYER * NUM_LAYERS + 2          # emb-LN params + layers + classifier


def _layer_norm(x, g, b, eps=LN_EPS):
    mu = jnp.mean(x, axis=-1, keepdims=True)
    var = jnp.mean((x - mu) ** 2, axis=-1, keepdims=True)
    return (x - mu) * lax.rsqrt(var + eps) * g + b


# ----------------------------- fused encoder (in-kernel helper) ----------------------
def _emissions(x_ref, bias_ref, enc_refs):
    """Embedding-LN + transformer layers + classifier, fully in VMEM. Returns (B*S, T)."""
    x = x_ref[...]                      # (B*S, H)
    bias = bias_ref[...]                # (B*S, B*S) block-diagonal + key-padding additive mask
    h = _layer_norm(x, enc_refs[0][...], enc_refs[1][...])
    scale = 1.0 / math.sqrt(HEAD_DIM)
    pos = 2
    for _ in range(NUM_LAYERS):
        (wqkv, bqkv, wo, bo, g1, b1, wi, bi, wo2, bo2, g2, b2) = [
            enc_refs[pos + j][...] for j in range(N_PER_LAYER)]
        pos += N_PER_LAYER
        # one fused QKV projection over the whole (B*S, H) slab
        qkv = jnp.dot(h, wqkv, preferred_element_type=jnp.float32) + bqkv   # (B*S, 3H)
        attn = jnp.zeros_like(h)
        for hh in range(NUM_HEADS):                                         # static unroll
            lo = hh * HEAD_DIM
            hi = lo + HEAD_DIM
            qh = qkv[:, lo:hi]
            kh = qkv[:, HIDDEN + lo:HIDDEN + hi]
            vh = qkv[:, 2 * HIDDEN + lo:2 * HIDDEN + hi]
            s = lax.dot_general(qh, kh, (((1,), (1,)), ((), ())),
                                preferred_element_type=jnp.float32) * scale  # (B*S, B*S)
            s = s + bias                         # masks cross-batch pairs & padded keys
            mx = jnp.max(s, axis=-1, keepdims=True)
            p = jnp.exp(s - mx)
            p = p / jnp.sum(p, axis=-1, keepdims=True)
            ctx = jnp.dot(p, vh, preferred_element_type=jnp.float32)        # (B*S, HD)
            attn = attn + jnp.dot(ctx, wo[lo:hi, :],
                                  preferred_element_type=jnp.float32)
        attn = attn + bo
        h1 = _layer_norm(h + attn, g1, b1)
        # TODO(synk): HF BERT uses exact erf-GELU; tanh-approx gelu kept (erf lowering untested on Mosaic).
        inter = jax.nn.gelu(jnp.dot(h1, wi, preferred_element_type=jnp.float32) + bi)
        ff = jnp.dot(inter, wo2, preferred_element_type=jnp.float32) + bo2
        h = _layer_norm(h1 + ff, g2, b2)
    cls_w = enc_refs[pos][...]
    cls_b = enc_refs[pos + 1][...]
    return jnp.dot(h, cls_w, preferred_element_type=jnp.float32) + cls_b    # (B*S, T)


# ----------------------------- fused forward kernels ---------------------------------
def _fused_nll_kernel(*refs):
    """Encoder + classifier + torchcrf NLL (reduction='mean'), single kernel."""
    x_ref, m_ref, bias_ref, tags_ref = refs[0], refs[1], refs[2], refs[3]
    enc_refs = refs[4:4 + N_ENC]
    start_ref, end_ref, trans_ref = refs[4 + N_ENC], refs[5 + N_ENC], refs[6 + N_ENC]
    out_ref = refs[-1]

    em = _emissions(x_ref, bias_ref, enc_refs)       # (B*S, T), stays in VMEM
    m = m_ref[...]                                   # (B, S) float {0,1}
    tags = tags_ref[...]                             # (B, S) int32
    start = start_ref[...]                           # (1, T)
    end = end_ref[...]                               # (1, T)
    trans = trans_ref[...]                           # (T, T)
    B_c, S_c = m.shape

    iota_t = lax.broadcasted_iota(jnp.int32, (1, NUM_TAGS), 1)
    exp_trans = jnp.exp(trans)                       # hoisted out of all loops
    llh_sum = jnp.zeros((1, 1), jnp.float32)

    # TODO(synk): torchcrf requires mask[:, 0] == 1 for every sequence; assumed, not validated.
    for b in range(B_c):                             # static, B is tiny
        base = b * S_c
        e0 = em[base:base + 1, :]                    # (1, T)
        oh = (tags[b:b + 1, 0:1] == iota_t).astype(jnp.float32)
        score = jnp.sum((start + e0) * oh, axis=1, keepdims=True)   # numerator (1,1)
        prev_oh = oh
        last_oh = oh
        alpha = start + e0                                          # denominator state (1,T)
        for i in range(1, S_c):
            e_i = em[base + i:base + i + 1, :]
            mi = m[b:b + 1, i:i + 1]
            oh = (tags[b:b + 1, i:i + 1] == iota_t).astype(jnp.float32)
            # numerator: one-hot matmul selects trans[tag_{i-1}, :] (no (T,T) broadcast)
            tr_row = jnp.dot(prev_oh, trans, preferred_element_type=jnp.float32)
            score = score + mi * jnp.sum((tr_row + e_i) * oh, axis=1, keepdims=True)
            prev_oh = oh
            last_oh = jnp.where(mi > 0.5, oh, last_oh)
            # denominator: forward recursion as exp-space matmul on the MXU
            amax = jnp.max(alpha, axis=1, keepdims=True)
            nxt = amax + jnp.log(jnp.dot(jnp.exp(alpha - amax), exp_trans,
                                         preferred_element_type=jnp.float32)) + e_i
            alpha = jnp.where(mi > 0.5, nxt, alpha)
        score = score + jnp.sum(end * last_oh, axis=1, keepdims=True)
        alpha = alpha + end
        amx = jnp.max(alpha, axis=1, keepdims=True)
        denom = jnp.log(jnp.sum(jnp.exp(alpha - amx), axis=1, keepdims=True)) + amx
        llh_sum = llh_sum + (score - denom)
    out_ref[...] = -(llh_sum / B_c)                  # mean over batch, negated


def _fused_decode_kernel(*refs):
    """Encoder + classifier + Viterbi decode; also emits per-sequence lengths."""
    x_ref, m_ref, bias_ref = refs[0], refs[1], refs[2]
    enc_refs = refs[3:3 + N_ENC]
    start_ref, end_ref, trans_ref = refs[3 + N_ENC], refs[4 + N_ENC], refs[5 + N_ENC]
    out_ref, lens_ref = refs[-2], refs[-1]

    em = _emissions(x_ref, bias_ref, enc_refs)       # (B*S, T)
    m = m_ref[...]
    start = start_ref[...]
    end = end_ref[...]
    trans = trans_ref[...]
    B_c, S_c = m.shape
    T_c = NUM_TAGS

    iota_prev = lax.broadcasted_iota(jnp.int32, (1, T_c, T_c), 1)
    iota_t2 = lax.broadcasted_iota(jnp.int32, (1, T_c), 1)
    col_iota = lax.broadcasted_iota(jnp.int32, (1, S_c), 1)
    trans3 = trans[None, :, :]                       # hoisted broadcast

    for b in range(B_c):                             # static, independent per sequence
        base = b * S_c
        score = start + em[base:base + 1, :]         # (1, T)
        history = []
        for i in range(1, S_c):
            mi = m[b:b + 1, i:i + 1]
            e_i = em[base + i:base + i + 1, :]
            nxt = score[:, :, None] + trans3 + e_i[:, None, :]          # (1, T, T)
            best = jnp.max(nxt, axis=1)                                 # (1, T)
            is_max = nxt == best[:, None, :]
            # TODO(synk): ties broken toward the lowest previous tag (torch.max tie-break is impl-defined).
            idx = jnp.min(jnp.where(is_max, iota_prev, T_c), axis=1)    # (1, T)
            idx = jnp.where(mi > 0.5, idx, iota_t2)                     # identity at padded steps
            score = jnp.where(mi > 0.5, best, score)
            history.append(idx)
        score = score + end
        smax = jnp.max(score, axis=1, keepdims=True)
        cur = jnp.min(jnp.where(score == smax, iota_t2, T_c),
                      axis=1, keepdims=True)                            # (1, 1)
        # accumulate the whole backtrace in registers; single row store at the end
        path = jnp.where(col_iota == (S_c - 1), cur, jnp.zeros((1, S_c), jnp.int32))
        for j in range(S_c - 2, -1, -1):
            cur_oh = (cur == iota_t2).astype(jnp.int32)
            cur = jnp.sum(history[j] * cur_oh, axis=1, keepdims=True)
            path = jnp.where(col_iota == j, cur, path)
        out_ref[b:b + 1, :] = path
    lens_ref[...] = jnp.sum(m, axis=1, keepdims=True).astype(jnp.int32)


# ----------------------------- parameters -------------------------------------------
def init_params(key):
    def nrm(k, shape, std=0.02):
        return (std * jax.random.normal(k, shape)).astype(jnp.float32)

    keys = jax.random.split(key, 4 + NUM_LAYERS)
    p = {}
    p["word_emb"] = nrm(keys[0], (VOCAB, HIDDEN))
    p["pos_emb"] = nrm(keys[1], (MAX_POS, HIDDEN))
    p["type_emb"] = nrm(keys[2], (2, HIDDEN))
    p["emb_g"] = jnp.ones((1, HIDDEN), jnp.float32)
    p["emb_b"] = jnp.zeros((1, HIDDEN), jnp.float32)
    layers = []
    for l in range(NUM_LAYERS):
        lk = jax.random.split(keys[3 + l], 6)
        layers.append(dict(
            # fused QKV projection weight (H, 3H)
            wqkv=jnp.concatenate([nrm(lk[0], (HIDDEN, HIDDEN)),
                                  nrm(lk[1], (HIDDEN, HIDDEN)),
                                  nrm(lk[2], (HIDDEN, HIDDEN))], axis=1),
            bqkv=jnp.zeros((1, 3 * HIDDEN), jnp.float32),
            wo=nrm(lk[3], (HIDDEN, HIDDEN)), bo=jnp.zeros((1, HIDDEN), jnp.float32),
            g1=jnp.ones((1, HIDDEN), jnp.float32), b1=jnp.zeros((1, HIDDEN), jnp.float32),
            wi=nrm(lk[4], (HIDDEN, FFN)), bi=jnp.zeros((1, FFN), jnp.float32),
            wo2=nrm(lk[5], (FFN, HIDDEN)), bo2=jnp.zeros((1, HIDDEN), jnp.float32),
            g2=jnp.ones((1, HIDDEN), jnp.float32), b2=jnp.zeros((1, HIDDEN), jnp.float32),
        ))
    p["layers"] = layers
    kc, ks, ke, kt = jax.random.split(keys[3 + NUM_LAYERS], 4)
    p["cls_w"] = nrm(kc, (HIDDEN, NUM_TAGS))
    p["cls_b"] = jnp.zeros((1, NUM_TAGS), jnp.float32)
    # torchcrf init: uniform(-0.1, 0.1)
    p["crf_start"] = jax.random.uniform(ks, (1, NUM_TAGS), jnp.float32, -0.1, 0.1)
    p["crf_end"] = jax.random.uniform(ke, (1, NUM_TAGS), jnp.float32, -0.1, 0.1)
    p["crf_trans"] = jax.random.uniform(kt, (NUM_TAGS, NUM_TAGS), jnp.float32, -0.1, 0.1)
    return p


def _flatten_params(p):
    flat = [p["emb_g"], p["emb_b"]]
    for lp in p["layers"]:
        flat += [lp["wqkv"], lp["bqkv"], lp["wo"], lp["bo"], lp["g1"], lp["b1"],
                 lp["wi"], lp["bi"], lp["wo2"], lp["bo2"], lp["g2"], lp["b2"]]
    flat += [p["cls_w"], p["cls_b"], p["crf_start"], p["crf_end"], p["crf_trans"]]
    return flat


# ----------------------------- jitted glue + pallas_call ------------------------------
def _embed(params, input_ids):
    B_, S_ = input_ids.shape
    pos = jnp.arange(S_)
    x = (params["word_emb"][input_ids]
         + params["pos_emb"][pos][None, :, :]
         + params["type_emb"][0][None, None, :])                 # (B, S, H) gather glue
    return x.reshape(B_ * S_, HIDDEN)


def _attention_bias(maskf):
    """Block-diagonal (same-batch) + key-padding additive mask, shape (B*S, B*S)."""
    B_, S_ = maskf.shape
    key_valid = maskf.reshape(1, B_ * S_) > 0.5
    batch_id = jnp.repeat(jnp.arange(B_), S_)
    same = batch_id[:, None] == batch_id[None, :]
    return jnp.where(same & key_valid, 0.0, NEG_INF).astype(jnp.float32)


@jax.jit
def _nll_fn(params, input_ids, maskf, tags):
    x2d = _embed(params, input_ids)
    bias = _attention_bias(maskf)
    nll = pl.pallas_call(
        _fused_nll_kernel,
        out_shape=jax.ShapeDtypeStruct((1, 1), jnp.float32),
    )(x2d, maskf, bias, tags, *_flatten_params(params))
    return nll[0, 0]


@jax.jit
def _decode_fn(params, input_ids, maskf):
    B_, S_ = input_ids.shape
    x2d = _embed(params, input_ids)
    bias = _attention_bias(maskf)
    return pl.pallas_call(
        _fused_decode_kernel,
        out_shape=(jax.ShapeDtypeStruct((B_, S_), jnp.int32),
                   jax.ShapeDtypeStruct((B_, 1), jnp.int32)),
    )(x2d, maskf, bias, *_flatten_params(params))


# ----------------------------- forward pass ------------------------------------------
def ner_bert_forward(params, input_ids, mask, tags=None):
    maskf = mask.astype(jnp.float32)
    if tags is not None:
        return _nll_fn(params, input_ids, maskf, tags.astype(jnp.int32))
    best, lens = _decode_fn(params, input_ids, maskf)
    best_h, lens_h = jax.device_get((best, lens))    # single host sync for both outputs
    return [best_h[b, :int(lens_h[b, 0])].tolist() for b in range(best_h.shape[0])]


# ----------------------------- main ---------------------------------------------------
if __name__ == "__main__":
    B_, S_ = 2, 8
    root = jax.random.PRNGKey(0)
    kparams, kid, ktag = jax.random.split(root, 3)
    params = init_params(kparams)

    input_ids = jax.random.randint(kid, (B_, S_), 0, VOCAB, dtype=jnp.int32)
    mask = jnp.array([[1, 1, 1, 1, 1, 1, 1, 1],
                      [1, 1, 1, 1, 1, 0, 0, 0]], dtype=jnp.float32)
    tags = jax.random.randint(ktag, (B_, S_), 0, NUM_TAGS, dtype=jnp.int32)

    # training branch: -crf(emissions, tags, mask, reduction='mean')
    nll = ner_bert_forward(params, input_ids, mask, tags)
    nll = jax.block_until_ready(nll)

    # inference branch: crf.decode(emissions, mask)
    preds = ner_bert_forward(params, input_ids, mask, None)

    assert bool(jnp.isfinite(nll)), "non-finite NLL"
    assert len(preds) == B_ and len(preds[0]) == 8 and len(preds[1]) == 5
    print("KERNEL_OK")
</pallas_src>

<mosaic_0001>
module attributes {stable_mosaic.version = 11 : i64} {
  func.func @_fused_nll_kernel(%arg0: memref<16x32xf32, #tpu.memory_space<vmem>>, %arg1: memref<2x8xf32, #tpu.memory_space<vmem>>, %arg2: memref<16x16xf32, #tpu.memory_space<vmem>>, %arg3: memref<2x8xi32, #tpu.memory_space<vmem>>, %arg4: memref<1x32xf32, #tpu.memory_space<vmem>>, %arg5: memref<1x32xf32, #tpu.memory_space<vmem>>, %arg6: memref<32x96xf32, #tpu.memory_space<vmem>>, %arg7: memref<1x96xf32, #tpu.memory_space<vmem>>, %arg8: memref<32x32xf32, #tpu.memory_space<vmem>>, %arg9: memref<1x32xf32, #tpu.memory_space<vmem>>, %arg10: memref<1x32xf32, #tpu.memory_space<vmem>>, %arg11: memref<1x32xf32, #tpu.memory_space<vmem>>, %arg12: memref<32x128xf32, #tpu.memory_space<vmem>>, %arg13: memref<1x128xf32, #tpu.memory_space<vmem>>, %arg14: memref<128x32xf32, #tpu.memory_space<vmem>>, %arg15: memref<1x32xf32, #tpu.memory_space<vmem>>, %arg16: memref<1x32xf32, #tpu.memory_space<vmem>>, %arg17: memref<1x32xf32, #tpu.memory_space<vmem>>, %arg18: memref<32x96xf32, #tpu.memory_space<vmem>>, %arg19: memref<1x96xf32, #tpu.memory_space<vmem>>, %arg20: memref<32x32xf32, #tpu.memory_space<vmem>>, %arg21: memref<1x32xf32, #tpu.memory_space<vmem>>, %arg22: memref<1x32xf32, #tpu.memory_space<vmem>>, %arg23: memref<1x32xf32, #tpu.memory_space<vmem>>, %arg24: memref<32x128xf32, #tpu.memory_space<vmem>>, %arg25: memref<1x128xf32, #tpu.memory_space<vmem>>, %arg26: memref<128x32xf32, #tpu.memory_space<vmem>>, %arg27: memref<1x32xf32, #tpu.memory_space<vmem>>, %arg28: memref<1x32xf32, #tpu.memory_space<vmem>>, %arg29: memref<1x32xf32, #tpu.memory_space<vmem>>, %arg30: memref<32x5xf32, #tpu.memory_space<vmem>>, %arg31: memref<1x5xf32, #tpu.memory_space<vmem>>, %arg32: memref<1x5xf32, #tpu.memory_space<vmem>>, %arg33: memref<1x5xf32, #tpu.memory_space<vmem>>, %arg34: memref<5x5xf32, #tpu.memory_space<vmem>>, %arg35: memref<1x1xf32, #tpu.memory_space<vmem>>) attributes {dimension_semantics = [], scalar_prefetch = 0 : i64, scratch_operands = 0 : i64, tpu.core_type = #tpu.core_type<tc>} {
    %c0 = arith.constant 0 : index
    %c0_0 = arith.constant 0 : index
    %0 = vector.load %arg0[%c0, %c0_0] : memref<16x32xf32, #tpu.memory_space<vmem>>, vector<16x32xf32>
    %c0_1 = arith.constant 0 : index
    %c0_2 = arith.constant 0 : index
    %1 = vector.load %arg2[%c0_1, %c0_2] : memref<16x16xf32, #tpu.memory_space<vmem>>, vector<16x16xf32>
    %c0_3 = arith.constant 0 : index
    %c0_4 = arith.constant 0 : index
    %2 = vector.load %arg4[%c0_3, %c0_4] : memref<1x32xf32, #tpu.memory_space<vmem>>, vector<1x32xf32>
    %c0_5 = arith.constant 0 : index
    %c0_6 = arith.constant 0 : index
    %3 = vector.load %arg5[%c0_5, %c0_6] : memref<1x32xf32, #tpu.memory_space<vmem>>, vector<1x32xf32>
    %cst = arith.constant dense<0.000000e+00> : vector<16xf32>
    %4 = vector.multi_reduction <add>, %0, %cst [1] : vector<16x32xf32> to vector<16xf32>
    %5 = vector.shape_cast %4 : vector<16xf32> to vector<16x1xf32>
    %cst_7 = arith.constant 3.200000e+01 : f32
    %6 = vector.broadcast %cst_7 : f32 to vector<16x1xf32>
    %7 = arith.divf %5, %6 : vector<16x1xf32>
    %8 = vector.broadcast %7 : vector<16x1xf32> to vector<16x32xf32>
    %9 = arith.subf %0, %8 : vector<16x32xf32>
    %10 = arith.mulf %9, %9 : vector<16x32xf32>
    %cst_8 = arith.constant dense<0.000000e+00> : vector<16xf32>
    %11 = vector.multi_reduction <add>, %10, %cst_8 [1] : vector<16x32xf32> to vector<16xf32>
    %12 = vector.shape_cast %11 : vector<16xf32> to vector<16x1xf32>
    %cst_9 = arith.constant 3.200000e+01 : f32
    %13 = vector.broadcast %cst_9 : f32 to vector<16x1xf32>
    %14 = arith.divf %12, %13 : vector<16x1xf32>
    %15 = vector.broadcast %7 : vector<16x1xf32> to vector<16x32xf32>
    %16 = arith.subf %0, %15 : vector<16x32xf32>
    %cst_10 = arith.constant 9.99999996E-13 : f32
    %17 = vector.broadcast %cst_10 : f32 to vector<16x1xf32>
    %18 = arith.addf %14, %17 : vector<16x1xf32>
    %19 = math.rsqrt %18 : vector<16x1xf32>
    %20 = vector.broadcast %19 : vector<16x1xf32> to vector<16x32xf32>
    %21 = arith.mulf %16, %20 : vector<16x32xf32>
    %22 = vector.broadcast %2 : vector<1x32xf32> to vector<16x32xf32>
    %23 = arith.mulf %21, %22 : vector<16x32xf32>
    %24 = vector.broadcast %3 : vector<1x32xf32> to vector<16x32xf32>
    %25 = arith.addf %23, %24 : vector<16x32xf32>
    %c0_11 = arith.constant 0 : index
    %c0_12 = arith.constant 0 : index
    %26 = vector.load %arg6[%c0_11, %c0_12] : memref<32x96xf32, #tpu.memory_space<vmem>>, vector<32x96xf32>
    %c0_13 = arith.constant 0 : index
    %c0_14 = arith.constant 0 : index
    %27 = vector.load %arg7[%c0_13, %c0_14] : memref<1x96xf32, #tpu.memory_space<vmem>>, vector<1x96xf32>
    %c0_15 = arith.constant 0 : index
    %c0_16 = arith.constant 0 : index
    %28 = vector.load %arg8[%c0_15, %c0_16] : memref<32x32xf32, #tpu.memory_space<vmem>>, vector<32x32xf32>
    %c0_17 = arith.constant 0 : index
    %c0_18 = arith.constant 0 : index
    %29 = vector.load %arg9[%c0_17, %c0_18] : memref<1x32xf32, #tpu.memory_space<vmem>>, vector<1x32xf32>
    %c0_19 = arith.constant 0 : index
    %c0_20 = arith.constant 0 : index
    %30 = vector.load %arg10[%c0_19, %c0_20] : memref<1x32xf32, #tpu.memory_space<vmem>>, vector<1x32xf32>
    %c0_21 = arith.constant 0 : index
    %c0_22 = arith.constant 0 : index
    %31 = vector.load %arg11[%c0_21, %c0_22] : memref<1x32xf32, #tpu.memory_space<vmem>>, vector<1x32xf32>
    %c0_23 = arith.constant 0 : index
    %c0_24 = arith.constant 0 : index
    %32 = vector.load %arg12[%c0_23, %c0_24] : memref<32x128xf32, #tpu.memory_space<vmem>>, vector<32x128xf32>
    %c0_25 = arith.constant 0 : index
    %c0_26 = arith.constant 0 : index
    %33 = vector.load %arg13[%c0_25, %c0_26] : memref<1x128xf32, #tpu.memory_space<vmem>>, vector<1x128xf32>
    %c0_27 = arith.constant 0 : index
    %c0_28 = arith.constant 0 : index
    %34 = vector.load %arg14[%c0_27, %c0_28] : memref<128x32xf32, #tpu.memory_space<vmem>>, vector<128x32xf32>
    %c0_29 = arith.constant 0 : index
    %c0_30 = arith.constant 0 : index
    %35 = vector.load %arg15[%c0_29, %c0_30] : memref<1x32xf32, #tpu.memory_space<vmem>>, vector<1x32xf32>
    %c0_31 = arith.constant 0 : index
    %c0_32 = arith.constant 0 : index
    %36 = vector.load %arg16[%c0_31, %c0_32] : memref<1x32xf32, #tpu.memory_space<vmem>>, vector<1x32xf32>
    %c0_33 = arith.constant 0 : index
    %c0_34 = arith.constant 0 : index
    %37 = vector.load %arg17[%c0_33, %c0_34] : memref<1x32xf32, #tpu.memory_space<vmem>>, vector<1x32xf32>
    %cst_35 = arith.constant dense<0.000000e+00> : vector<16x96xf32>
    %38 = tpu.matmul %25, %26, %cst_35 {dimension_numbers = #tpu.dot_dimension_numbers<[1], [0], [0], [1], [0, 0, 1, 1], [], []>} : vector<16x32xf32>, vector<32x96xf32>, vector<16x96xf32> -> vector<16x96xf32>
    %39 = vector.broadcast %27 : vector<1x96xf32> to vector<16x96xf32>
    %40 = arith.addf %38, %39 : vector<16x96xf32>
    %cst_36 = arith.constant 0.000000e+00 : f32
    %41 = vector.broadcast %cst_36 : f32 to vector<16x32xf32>
    %42 = vector.extract_strided_slice %40 {offsets = [0, 0], sizes = [16, 16], strides = [1, 1]} : vector<16x96xf32> to vector<16x16xf32>
    %43 = vector.extract_strided_slice %40 {offsets = [0, 32], sizes = [16, 16], strides = [1, 1]} : vector<16x96xf32> to vector<16x16xf32>
    %44 = vector.extract_strided_slice %40 {offsets = [0, 64], sizes = [16, 16], strides = [1, 1]} : vector<16x96xf32> to vector<16x16xf32>
    %cst_37 = arith.constant dense<0.000000e+00> : vector<16x16xf32>
    %45 = tpu.matmul %42, %43, %cst_37 {dimension_numbers = #tpu.dot_dimension_numbers<[1], [1], [0], [0], [0, 0, 1, 0], [], []>} : vector<16x16xf32>, vector<16x16xf32>, vector<16x16xf32> -> vector<16x16xf32>
    %cst_38 = arith.constant 2.500000e-01 : f32
    %46 = vector.broadcast %cst_38 : f32 to vector<16x16xf32>
    %47 = arith.mulf %45, %46 : vector<16x16xf32>
    %48 = arith.addf %47, %1 : vector<16x16xf32>
    %cst_39 = arith.constant dense<0xFF800000> : vector<16xf32>
    %49 = vector.multi_reduction <maximumf>, %48, %cst_39 [1] : vector<16x16xf32> to vector<16xf32>
    %50 = vector.shape_cast %49 : vector<16xf32> to vector<16x1xf32>
    %51 = vector.broadcast %50 : vector<16x1xf32> to vector<16x16xf32>
    %52 = arith.subf %48, %51 : vector<16x16xf32>
    %53 = math.exp %52 : vector<16x16xf32>
    %cst_40 = arith.constant dense<0.000000e+00> : vector<16xf32>
    %54 = vector.multi_reduction <add>, %53, %cst_40 [1] : vector<16x16xf32> to vector<16xf32>
    %55 = vector.shape_cast %54 : vector<16xf32> to vector<16x1xf32>
    %56 = vector.broadcast %55 : vector<16x1xf32> to vector<16x16xf32>
    %57 = arith.divf %53, %56 : vector<16x16xf32>
    %cst_41 = arith.constant dense<0.000000e+00> : vector<16x16xf32>
    %58 = tpu.matmul %57, %44, %cst_41 {dimension_numbers = #tpu.dot_dimension_numbers<[1], [0], [0], [1], [0, 0, 1, 1], [], []>} : vector<16x16xf32>, vector<16x16xf32>, vector<16x16xf32> -> vector<16x16xf32>
    %59 = vector.extract_strided_slice %28 {offsets = [0, 0], sizes = [16, 32], strides = [1, 1]} : vector<32x32xf32> to vector<16x32xf32>
    %cst_42 = arith.constant dense<0.000000e+00> : vector<16x32xf32>
    %60 = tpu.matmul %58, %59, %cst_42 {dimension_numbers = #tpu.dot_dimension_numbers<[1], [0], [0], [1], [0, 0, 1, 1], [], []>} : vector<16x16xf32>, vector<16x32xf32>, vector<16x32xf32> -> vector<16x32xf32>
    %61 = arith.addf %41, %60 : vector<16x32xf32>
    %62 = vector.extract_strided_slice %40 {offsets = [0, 16], sizes = [16, 16], strides = [1, 1]} : vector<16x96xf32> to vector<16x16xf32>
    %63 = vector.extract_strided_slice %40 {offsets = [0, 48], sizes = [16, 16], strides = [1, 1]} : vector<16x96xf32> to vector<16x16xf32>
    %64 = vector.extract_strided_slice %40 {offsets = [0, 80], sizes = [16, 16], strides = [1, 1]} : vector<16x96xf32> to vector<16x16xf32>
    %cst_43 = arith.constant dense<0.000000e+00> : vector<16x16xf32>
    %65 = tpu.matmul %62, %63, %cst_43 {dimension_numbers = #tpu.dot_dimension_numbers<[1], [1], [0], [0], [0, 0, 1, 0], [], []>} : vector<16x16xf32>, vector<16x16xf32>, vector<16x16xf32> -> vector<16x16xf32>
    %cst_44 = arith.constant 2.500000e-01 : f32
    %66 = vector.broadcast %cst_44 : f32 to vector<16x16xf32>
    %67 = arith.mulf %65, %66 : vector<16x16xf32>
    %68 = arith.addf %67, %1 : vector<16x16xf32>
    %cst_45 = arith.constant dense<0xFF800000> : vector<16xf32>
    %69 = vector.multi_reduction <maximumf>, %68, %cst_45 [1] : vector<16x16xf32> to vector<16xf32>
    %70 = vector.shape_cast %69 : vector<16xf32> to vector<16x1xf32>
    %71 = vector.broadcast %70 : vector<16x1xf32> to vector<16x16xf32>
    %72 = arith.subf %68, %71 : vector<16x16xf32>
    %73 = math.exp %72 : vector<16x16xf32>
    %cst_46 = arith.constant dense<0.000000e+00> : vector<16xf32>
    %74 = vector.multi_reduction <add>, %73, %cst_46 [1] : vector<16x16xf32> to vector<16xf32>
    %75 = vector.shape_cast %74 : vector<16xf32> to vector<16x1xf32>
    %76 = vector.broadcast %75 : vector<16x1xf32> to vector<16x16xf32>
    %77 = arith.divf %73, %76 : vector<16x16xf32>
    %cst_47 = arith.constant dense<0.000000e+00> : vector<16x16xf32>
    %78 = tpu.matmul %77, %64, %cst_47 {dimension_numbers = #tpu.dot_dimension_numbers<[1], [0], [0], [1], [0, 0, 1, 1], [], []>} : vector<16x16xf32>, vector<16x16xf32>, vector<16x16xf32> -> vector<16x16xf32>
    %79 = vector.extract_strided_slice %28 {offsets = [16, 0], sizes = [16, 32], strides = [1, 1]} : vector<32x32xf32> to vector<16x32xf32>
    %cst_48 = arith.constant dense<0.000000e+00> : vector<16x32xf32>
    %80 = tpu.matmul %78, %79, %cst_48 {dimension_numbers = #tpu.dot_dimension_numbers<[1], [0], [0], [1], [0, 0, 1, 1], [], []>} : vector<16x16xf32>, vector<16x32xf32>, vector<16x32xf32> -> vector<16x32xf32>
    %81 = arith.addf %61, %80 : vector<16x32xf32>
    %82 = vector.broadcast %29 : vector<1x32xf32> to vector<16x32xf32>
    %83 = arith.addf %81, %82 : vector<16x32xf32>
    %84 = arith.addf %25, %83 : vector<16x32xf32>
    %cst_49 = arith.constant dense<0.000000e+00> : vector<16xf32>
    %85 = vector.multi_reduction <add>, %84, %cst_49 [1] : vector<16x32xf32> to vector<16xf32>
    %86 = vector.shape_cast %85 : vector<16xf32> to vector<16x1xf32>
    %cst_50 = arith.constant 3.200000e+01 : f32
    %87 = vector.broadcast %cst_50 : f32 to vector<16x1xf32>
    %88 = arith.divf %86, %87 : vector<16x1xf32>
    %89 = vector.broadcast %88 : vector<16x1xf32> to vector<16x32xf32>
    %90 = arith.subf %84, %89 : vector<16x32xf32>
    %91 = arith.mulf %90, %90 : vector<16x32xf32>
    %cst_51 = arith.constant dense<0.000000e+00> : vector<16xf32>
    %92 = vector.multi_reduction <add>, %91, %cst_51 [1] : vector<16x32xf32> to vector<16xf32>
    %93 = vector.shape_cast %92 : vector<16xf32> to vector<16x1xf32>
    %cst_52 = arith.constant 3.200000e+01 : f32
    %94 = vector.broadcast %cst_52 : f32 to vector<16x1xf32>
    %95 = arith.divf %93, %94 : vector<16x1xf32>
    %96 = vector.broadcast %88 : vector<16x1xf32> to vector<16x32xf32>
    %97 = arith.subf %84, %96 : vector<16x32xf32>
    %cst_53 = arith.constant 9.99999996E-13 : f32
    %98 = vector.broadcast %cst_53 : f32 to vector<16x1xf32>
    %99 = arith.addf %95, %98 : vector<16x1xf32>
    %100 = math.rsqrt %99 : vector<16x1xf32>
    %101 = vector.broadcast %100 : vector<16x1xf32> to vector<16x32xf32>
    %102 = arith.mulf %97, %101 : vector<16x32xf32>
    %103 = vector.broadcast %30 : vector<1x32xf32> to vector<16x32xf32>
    %104 = arith.mulf %102, %103 : vector<16x32xf32>
    %105 = vector.broadcast %31 : vector<1x32xf32> to vector<16x32xf32>
    %106 = arith.addf %104, %105 : vector<16x32xf32>
    %cst_54 = arith.constant dense<0.000000e+00> : vector<16x128xf32>
    %107 = tpu.matmul %106, %32, %cst_54 {dimension_numbers = #tpu.dot_dimension_numbers<[1], [0], [0], [1], [0, 0, 1, 1], [], []>} : vector<16x32xf32>, vector<32x128xf32>, vector<16x128xf32> -> vector<16x128xf32>
    %108 = vector.broadcast %33 : vector<1x128xf32> to vector<16x128xf32>
    %109 = arith.addf %107, %108 : vector<16x128xf32>
    %110 = arith.mulf %109, %109 : vector<16x128xf32>
    %111 = arith.mulf %109, %110 : vector<16x128xf32>
    %cst_55 = arith.constant 4.471500e-02 : f32
    %112 = vector.broadcast %cst_55 : f32 to vector<16x128xf32>
    %113 = arith.mulf %112, %111 : vector<16x128xf32>
    %114 = arith.addf %109, %113 : vector<16x128xf32>
    %cst_56 = arith.constant 0.797884583 : f32
    %115 = vector.broadcast %cst_56 : f32 to vector<16x128xf32>
    %116 = arith.mulf %115, %114 : vector<16x128xf32>
    %117 = math.tanh %116 : vector<16x128xf32>
    %cst_57 = arith.constant 1.000000e+00 : f32
    %118 = vector.broadcast %cst_57 : f32 to vector<16x128xf32>
    %119 = arith.addf %118, %117 : vector<16x128xf32>
    %cst_58 = arith.constant 5.000000e-01 : f32
    %120 = vector.broadcast %cst_58 : f32 to vector<16x128xf32>
    %121 = arith.mulf %120, %119 : vector<16x128xf32>
    %122 = arith.mulf %109, %121 : vector<16x128xf32>
    %cst_59 = arith.constant dense<0.000000e+00> : vector<16x32xf32>
    %123 = tpu.matmul %122, %34, %cst_59 {dimension_numbers = #tpu.dot_dimension_numbers<[1], [0], [0], [1], [0, 0, 1, 1], [], []>} : vector<16x128xf32>, vector<128x32xf32>, vector<16x32xf32> -> vector<16x32xf32>
    %124 = vector.broadcast %35 : vector<1x32xf32> to vector<16x32xf32>
    %125 = arith.addf %123, %124 : vector<16x32xf32>
    %126 = arith.addf %106, %125 : vector<16x32xf32>
    %cst_60 = arith.constant dense<0.000000e+00> : vector<16xf32>
    %127 = vector.multi_reduction <add>, %126, %cst_60 [1] : vector<16x32xf32> to vector<16xf32>
    %128 = vector.shape_cast %127 : vector<16xf32> to vector<16x1xf32>
    %cst_61 = arith.constant 3.200000e+01 : f32
    %129 = vector.broadcast %cst_61 : f32 to vector<16x1xf32>
    %130 = arith.divf %128, %129 : vector<16x1xf32>
    %131 = vector.broadcast %130 : vector<16x1xf32> to vector<16x32xf32>
    %132 = arith.subf %126, %131 : vector<16x32xf32>
    %133 = arith.mulf %132, %132 : vector<16x32xf32>
    %cst_62 = arith.constant dense<0.000000e+00> : vector<16xf32>
    %134 = vector.multi_reduction <add>, %133, %cst_62 [1] : vector<16x32xf32> to vector<16xf32>
    %135 = vector.shape_cast %134 : vector<16xf32> to vector<16x1xf32>
    %cst_63 = arith.constant 3.200000e+01 : f32
    %136 = vector.broadcast %cst_63 : f32 to vector<16x1xf32>
    %137 = arith.divf %135, %136 : vector<16x1xf32>
    %138 = vector.broadcast %130 : vector<16x1xf32> to vector<16x32xf32>
    %139 = arith.subf %126, %138 : vector<16x32xf32>
    %cst_64 = arith.constant 9.99999996E-13 : f32
    %140 = vector.broadcast %cst_64 : f32 to vector<16x1xf32>
    %141 = arith.addf %137, %140 : vector<16x1xf32>
    %142 = math.rsqrt %141 : vector<16x1xf32>
    %143 = vector.broadcast %142 : vector<16x1xf32> to vector<16x32xf32>
    %144 = arith.mulf %139, %143 : vector<16x32xf32>
    %145 = vector.broadcast %36 : vector<1x32xf32> to vector<16x32xf32>
    %146 = arith.mulf %144, %145 : vector<16x32xf32>
    %147 = vector.broadcast %37 : vector<1x32xf32> to vector<16x32xf32>
    %148 = arith.addf %146, %147 : vector<16x32xf32>
    %c0_65 = arith.constant 0 : index
    %c0_66 = arith.constant 0 : index
    %149 = vector.load %arg18[%c0_65, %c0_66] : memref<32x96xf32, #tpu.memory_space<vmem>>, vector<32x96xf32>
    %c0_67 = arith.constant 0 : index
    %c0_68 = arith.constant 0 : index
    %150 = vector.load %arg19[%c0_67, %c0_68] : memref<1x96xf32, #tpu.memory_space<vmem>>, vector<1x96xf32>
    %c0_69 = arith.constant 0 : index
    %c0_70 = arith.constant 0 : index
    %151 = vector.load %arg20[%c0_69, %c0_70] : memref<32x32xf32, #tpu.memory_space<vmem>>, vector<32x32xf32>
    %c0_71 = arith.constant 0 : index
    %c0_72 = arith.constant 0 : index
    %152 = vector.load %arg21[%c0_71, %c0_72] : memref<1x32xf32, #tpu.memory_space<vmem>>, vector<1x32xf32>
    %c0_73 = arith.constant 0 : index
    %c0_74 = arith.constant 0 : index
    %153 = vector.load %arg22[%c0_73, %c0_74] : memref<1x32xf32, #tpu.memory_space<vmem>>, vector<1x32xf32>
    %c0_75 = arith.constant 0 : index
    %c0_76 = arith.constant 0 : index
    %154 = vector.load %arg23[%c0_75, %c0_76] : memref<1x32xf32, #tpu.memory_space<vmem>>, vector<1x32xf32>
    %c0_77 = arith.constant 0 : index
    %c0_78 = arith.constant 0 : index
    %155 = vector.load %arg24[%c0_77, %c0_78] : memref<32x128xf32, #tpu.memory_space<vmem>>, vector<32x128xf32>
    %c0_79 = arith.constant 0 : index
    %c0_80 = arith.constant 0 : index
    %156 = vector.load %arg25[%c0_79, %c0_80] : memref<1x128xf32, #tpu.memory_space<vmem>>, vector<1x128xf32>
    %c0_81 = arith.constant 0 : index
    %c0_82 = arith.constant 0 : index
    %157 = vector.load %arg26[%c0_81, %c0_82] : memref<128x32xf32, #tpu.memory_space<vmem>>, vector<128x32xf32>
    %c0_83 = arith.constant 0 : index
    %c0_84 = arith.constant 0 : index
    %158 = vector.load %arg27[%c0_83, %c0_84] : memref<1x32xf32, #tpu.memory_space<vmem>>, vector<1x32xf32>
    %c0_85 = arith.constant 0 : index
    %c0_86 = arith.constant 0 : index
    %159 = vector.load %arg28[%c0_85, %c0_86] : memref<1x32xf32, #tpu.memory_space<vmem>>, vector<1x32xf32>
    %c0_87 = arith.constant 0 : index
    %c0_88 = arith.constant 0 : index
    %160 = vector.load %arg29[%c0_87, %c0_88] : memref<1x32xf32, #tpu.memory_space<vmem>>, vector<1x32xf32>
    %cst_89 = arith.constant dense<0.000000e+00> : vector<16x96xf32>
    %161 = tpu.matmul %148, %149, %cst_89 {dimension_numbers = #tpu.dot_dimension_numbers<[1], [0], [0], [1], [0, 0, 1, 1], [], []>} : vector<16x32xf32>, vector<32x96xf32>, vector<16x96xf32> -> vector<16x96xf32>
    %162 = vector.broadcast %150 : vector<1x96xf32> to vector<16x96xf32>
    %163 = arith.addf %161, %162 : vector<16x96xf32>
    %cst_90 = arith.constant 0.000000e+00 : f32
    %164 = vector.broadcast %cst_90 : f32 to vector<16x32xf32>
    %165 = vector.extract_strided_slice %163 {offsets = [0, 0], sizes = [16, 16], strides = [1, 1]} : vector<16x96xf32> to vector<16x16xf32>
    %166 = vector.extract_strided_slice %163 {offsets = [0, 32], sizes = [16, 16], strides = [1, 1]} : vector<16x96xf32> to vector<16x16xf32>
    %167 = vector.extract_strided_slice %163 {offsets = [0, 64], sizes = [16, 16], strides = [1, 1]} : vector<16x96xf32> to vector<16x16xf32>
    %cst_91 = arith.constant dense<0.000000e+00> : vector<16x16xf32>
    %168 = tpu.matmul %165, %166, %cst_91 {dimension_numbers = #tpu.dot_dimension_numbers<[1], [1], [0], [0], [0, 0, 1, 0], [], []>} : vector<16x16xf32>, vector<16x16xf32>, vector<16x16xf32> -> vector<16x16xf32>
    %cst_92 = arith.constant 2.500000e-01 : f32
    %169 = vector.broadcast %cst_92 : f32 to vector<16x16xf32>
    %170 = arith.mulf %168, %169 : vector<16x16xf32>
    %171 = arith.addf %170, %1 : vector<16x16xf32>
    %cst_93 = arith.constant dense<0xFF800000> : vector<16xf32>
    %172 = vector.multi_reduction <maximumf>, %171, %cst_93 [1] : vector<16x16xf32> to vector<16xf32>
    %173 = vector.shape_cast %172 : vector<16xf32> to vector<16x1xf32>
    %174 = vector.broadcast %173 : vector<16x1xf32> to vector<16x16xf32>
    %175 = arith.subf %171, %174 : vector<16x16xf32>
    %176 = math.exp %175 : vector<16x16xf32>
    %cst_94 = arith.constant dense<0.000000e+00> : vector<16xf32>
    %177 = vector.multi_reduction <add>, %176, %cst_94 [1] : vector<16x16xf32> to vector<16xf32>
    %178 = vector.shape_cast %177 : vector<16xf32> to vector<16x1xf32>
    %179 = vector.broadcast %178 : vector<16x1xf32> to vector<16x16xf32>
    %180 = arith.divf %176, %179 : vector<16x16xf32>
    %cst_95 = arith.constant dense<0.000000e+00> : vector<16x16xf32>
    %181 = tpu.matmul %180, %167, %cst_95 {dimension_numbers = #tpu.dot_dimension_numbers<[1], [0], [0], [1], [0, 0, 1, 1], [], []>} : vector<16x16xf32>, vector<16x16xf32>, vector<16x16xf32> -> vector<16x16xf32>
    %182 = vector.extract_strided_slice %151 {offsets = [0, 0], sizes = [16, 32], strides = [1, 1]} : vector<32x32xf32> to vector<16x32xf32>
    %cst_96 = arith.constant dense<0.000000e+00> : vector<16x32xf32>
    %183 = tpu.matmul %181, %182, %cst_96 {dimension_numbers = #tpu.dot_dimension_numbers<[1], [0], [0], [1], [0, 0, 1, 1], [], []>} : vector<16x16xf32>, vector<16x32xf32>, vector<16x32xf32> -> vector<16x32xf32>
    %184 = arith.addf %164, %183 : vector<16x32xf32>
    %185 = vector.extract_strided_slice %163 {offsets = [0, 16], sizes = [16, 16], strides = [1, 1]} : vector<16x96xf32> to vector<16x16xf32>
    %186 = vector.extract_strided_slice %163 {offsets = [0, 48], sizes = [16, 16], strides = [1, 1]} : vector<16x96xf32> to vector<16x16xf32>
    %187 = vector.extract_strided_slice %163 {offsets = [0, 80], sizes = [16, 16], strides = [1, 1]} : vector<16x96xf32> to vector<16x16xf32>
    %cst_97 = arith.constant dense<0.000000e+00> : vector<16x16xf32>
    %188 = tpu.matmul %185, %186, %cst_97 {dimension_numbers = #tpu.dot_dimension_numbers<[1], [1], [0], [0], [0, 0, 1, 0], [], []>} : vector<16x16xf32>, vector<16x16xf32>, vector<16x16xf32> -> vector<16x16xf32>
    %cst_98 = arith.constant 2.500000e-01 : f32
    %189 = vector.broadcast %cst_98 : f32 to vector<16x16xf32>
    %190 = arith.mulf %188, %189 : vector<16x16xf32>
    %191 = arith.addf %190, %1 : vector<16x16xf32>
    %cst_99 = arith.constant dense<0xFF800000> : vector<16xf32>
    %192 = vector.multi_reduction <maximumf>, %191, %cst_99 [1] : vector<16x16xf32> to vector<16xf32>
    %193 = vector.shape_cast %192 : vector<16xf32> to vector<16x1xf32>
    %194 = vector.broadcast %193 : vector<16x1xf32> to vector<16x16xf32>
    %195 = arith.subf %191, %194 : vector<16x16xf32>
    %196 = math.exp %195 : vector<16x16xf32>
    %cst_100 = arith.constant dense<0.000000e+00> : vector<16xf32>
    %197 = vector.multi_reduction <add>, %196, %cst_100 [1] : vector<16x16xf32> to vector<16xf32>
    %198 = vector.shape_cast %197 : vector<16xf32> to vector<16x1xf32>
    %199 = vector.broadcast %198 : vector<16x1xf32> to vector<16x16xf32>
    %200 = arith.divf %196, %199 : vector<16x16xf32>
    %cst_101 = arith.constant dense<0.000000e+00> : vector<16x16xf32>
    %201 = tpu.matmul %200, %187, %cst_101 {dimension_numbers = #tpu.dot_dimension_numbers<[1], [0], [0], [1], [0, 0, 1, 1], [], []>} : vector<16x16xf32>, vector<16x16xf32>, vector<16x16xf32> -> vector<16x16xf32>
    %202 = vector.extract_strided_slice %151 {offsets = [16, 0], sizes = [16, 32], strides = [1, 1]} : vector<32x32xf32> to vector<16x32xf32>
    %cst_102 = arith.constant dense<0.000000e+00> : vector<16x32xf32>
    %203 = tpu.matmul %201, %202, %cst_102 {dimension_numbers = #tpu.dot_dimension_numbers<[1], [0], [0], [1], [0, 0, 1, 1], [], []>} : vector<16x16xf32>, vector<16x32xf32>, vector<16x32xf32> -> vector<16x32xf32>
    %204 = arith.addf %184, %203 : vector<16x32xf32>
    %205 = vector.broadcast %152 : vector<1x32xf32> to vector<16x32xf32>
    %206 = arith.addf %204, %205 : vector<16x32xf32>
    %207 = arith.addf %148, %206 : vector<16x32xf32>
    %cst_103 = arith.constant dense<0.000000e+00> : vector<16xf32>
    %208 = vector.multi_reduction <add>, %207, %cst_103 [1] : vector<16x32xf32> to vector<16xf32>
    %209 = vector.shape_cast %208 : vector<16xf32> to vector<16x1xf32>
    %cst_104 = arith.constant 3.200000e+01 : f32
    %210 = vector.broadcast %cst_104 : f32 to vector<16x1xf32>
    %211 = arith.divf %209, %210 : vector<16x1xf32>
    %212 = vector.broadcast %211 : vector<16x1xf32> to vector<16x32xf32>
    %213 = arith.subf %207, %212 : vector<16x32xf32>
    %214 = arith.mulf %213, %213 : vector<16x32xf32>
    %cst_105 = arith.constant dense<0.000000e+00> : vector<16xf32>
    %215 = vector.multi_reduction <add>, %214, %cst_105 [1] : vector<16x32xf32> to vector<16xf32>
    %216 = vector.shape_cast %215 : vector<16xf32> to vector<16x1xf32>
    %cst_106 = arith.constant 3.200000e+01 : f32
    %217 = vector.broadcast %cst_106 : f32 to vector<16x1xf32>
    %218 = arith.divf %216, %217 : vector<16x1xf32>
    %219 = vector.broadcast %211 : vector<16x1xf32> to vector<16x32xf32>
    %220 = arith.subf %207, %219 : vector<16x32xf32>
    %cst_107 = arith.constant 9.99999996E-13 : f32
    %221 = vector.broadcast %cst_107 : f32 to vector<16x1xf32>
    %222 = arith.addf %218, %221 : vector<16x1xf32>
    %223 = math.rsqrt %222 : vector<16x1xf32>
    %224 = vector.broadcast %223 : vector<16x1xf32> to vector<16x32xf32>
    %225 = arith.mulf %220, %224 : vector<16x32xf32>
    %226 = vector.broadcast %153 : vector<1x32xf32> to vector<16x32xf32>
    %227 = arith.mulf %225, %226 : vector<16x32xf32>
    %228 = vector.broadcast %154 : vector<1x32xf32> to vector<16x32xf32>
    %229 = arith.addf %227, %228 : vector<16x32xf32>
    %cst_108 = arith.constant dense<0.000000e+00> : vector<16x128xf32>
    %230 = tpu.matmul %229, %155, %cst_108 {dimension_numbers = #tpu.dot_dimension_numbers<[1], [0], [0], [1], [0, 0, 1, 1], [], []>} : vector<16x32xf32>, vector<32x128xf32>, vector<16x128xf32> -> vector<16x128xf32>
    %231 = vector.broadcast %156 : vector<1x128xf32> to vector<16x128xf32>
    %232 = arith.addf %230, %231 : vector<16x128xf32>
    %233 = arith.mulf %232, %232 : vector<16x128xf32>
    %234 = arith.mulf %232, %233 : vector<16x128xf32>
    %cst_109 = arith.constant 4.471500e-02 : f32
    %235 = vector.broadcast %cst_109 : f32 to vector<16x128xf32>
    %236 = arith.mulf %235, %234 : vector<16x128xf32>
    %237 = arith.addf %232, %236 : vector<16x128xf32>
    %cst_110 = arith.constant 0.797884583 : f32
    %238 = vector.broadcast %cst_110 : f32 to vector<16x128xf32>
    %239 = arith.mulf %238, %237 : vector<16x128xf32>
    %240 = math.tanh %239 : vector<16x128xf32>
    %cst_111 = arith.constant 1.000000e+00 : f32
    %241 = vector.broadcast %cst_111 : f32 to vector<16x128xf32>
    %242 = arith.addf %241, %240 : vector<16x128xf32>
    %cst_112 = arith.constant 5.000000e-01 : f32
    %243 = vector.broadcast %cst_112 : f32 to vector<16x128xf32>
    %244 = arith.mulf %243, %242 : vector<16x128xf32>
    %245 = arith.mulf %232, %244 : vector<16x128xf32>
    %cst_113 = arith.constant dense<0.000000e+00> : vector<16x32xf32>
    %246 = tpu.matmul %245, %157, %cst_113 {dimension_numbers = #tpu.dot_dimension_numbers<[1], [0], [0], [1], [0, 0, 1, 1], [], []>} : vector<16x128xf32>, vector<128x32xf32>, vector<16x32xf32> -> vector<16x32xf32>
    %247 = vector.broadcast %158 : vector<1x32xf32> to vector<16x32xf32>
    %248 = arith.addf %246, %247 : vector<16x32xf32>
    %249 = arith.addf %229, %248 : vector<16x32xf32>
    %cst_114 = arith.constant dense<0.000000e+00> : vector<16xf32>
    %250 = vector.multi_reduction <add>, %249, %cst_114 [1] : vector<16x32xf32> to vector<16xf32>
    %251 = vector.shape_cast %250 : vector<16xf32> to vector<16x1xf32>
    %cst_115 = arith.constant 3.200000e+01 : f32
    %252 = vector.broadcast %cst_115 : f32 to vector<16x1xf32>
    %253 = arith.divf %251, %252 : vector<16x1xf32>
    %254 = vector.broadcast %253 : vector<16x1xf32> to vector<16x32xf32>
    %255 = arith.subf %249, %254 : vector<16x32xf32>
    %256 = arith.mulf %255, %255 : vector<16x32xf32>
    %cst_116 = arith.constant dense<0.000000e+00> : vector<16xf32>
    %257 = vector.multi_reduction <add>, %256, %cst_116 [1] : vector<16x32xf32> to vector<16xf32>
    %258 = vector.shape_cast %257 : vector<16xf32> to vector<16x1xf32>
    %cst_117 = arith.constant 3.200000e+01 : f32
    %259 = vector.broadcast %cst_117 : f32 to vector<16x1xf32>
    %260 = arith.divf %258, %259 : vector<16x1xf32>
    %261 = vector.broadcast %253 : vector<16x1xf32> to vector<16x32xf32>
    %262 = arith.subf %249, %261 : vector<16x32xf32>
    %cst_118 = arith.constant 9.99999996E-13 : f32
    %263 = vector.broadcast %cst_118 : f32 to vector<16x1xf32>
    %264 = arith.addf %260, %263 : vector<16x1xf32>
    %265 = math.rsqrt %264 : vector<16x1xf32>
    %266 = vector.broadcast %265 : vector<16x1xf32> to vector<16x32xf32>
    %267 = arith.mulf %262, %266 : vector<16x32xf32>
    %268 = vector.broadcast %159 : vector<1x32xf32> to vector<16x32xf32>
    %269 = arith.mulf %267, %268 : vector<16x32xf32>
    %270 = vector.broadcast %160 : vector<1x32xf32> to vector<16x32xf32>
    %271 = arith.addf %269, %270 : vector<16x32xf32>
    %c0_119 = arith.constant 0 : index
    %c0_120 = arith.constant 0 : index
    %272 = vector.load %arg30[%c0_119, %c0_120] : memref<32x5xf32, #tpu.memory_space<vmem>>, vector<32x5xf32>
    %c0_121 = arith.constant 0 : index
    %c0_122 = arith.constant 0 : index
    %273 = vector.load %arg31[%c0_121, %c0_122] : memref<1x5xf32, #tpu.memory_space<vmem>>, vector<1x5xf32>
    %cst_123 = arith.constant dense<0.000000e+00> : vector<16x5xf32>
    %274 = tpu.matmul %271, %272, %cst_123 {dimension_numbers = #tpu.dot_dimension_numbers<[1], [0], [0], [1], [0, 0, 1, 1], [], []>} : vector<16x32xf32>, vector<32x5xf32>, vector<16x5xf32> -> vector<16x5xf32>
    %275 = vector.broadcast %273 : vector<1x5xf32> to vector<16x5xf32>
    %276 = arith.addf %274, %275 : vector<16x5xf32>
    %c0_124 = arith.constant 0 : index
    %c0_125 = arith.constant 0 : index
    %277 = vector.load %arg1[%c0_124, %c0_125] : memref<2x8xf32, #tpu.memory_space<vmem>>, vector<2x8xf32>
    %c0_126 = arith.constant 0 : index
    %c0_127 = arith.constant 0 : index
    %278 = vector.load %arg3[%c0_126, %c0_127] : memref<2x8xi32, #tpu.memory_space<vmem>>, vector<2x8xi32>
    %c0_128 = arith.constant 0 : index
    %c0_129 = arith.constant 0 : index
    %279 = vector.load %arg32[%c0_128, %c0_129] : memref<1x5xf32, #tpu.memory_space<vmem>>, vector<1x5xf32>
    %c0_130 = arith.constant 0 : index
    %c0_131 = arith.constant 0 : index
    %280 = vector.load %arg33[%c0_130, %c0_131] : memref<1x5xf32, #tpu.memory_space<vmem>>, vector<1x5xf32>
    %c0_132 = arith.constant 0 : index
    %c0_133 = arith.constant 0 : index
    %281 = vector.load %arg34[%c0_132, %c0_133] : memref<5x5xf32, #tpu.memory_space<vmem>>, vector<5x5xf32>
    %282 = tpu.iota {dimensions = array<i32: 1>} : vector<1x5xi32>
    %283 = math.exp %281 : vector<5x5xf32>
    %cst_134 = arith.constant 0.000000e+00 : f32
    %284 = vector.broadcast %cst_134 : f32 to vector<1x1xf32>
    %285 = vector.extract_strided_slice %276 {offsets = [0, 0], sizes = [1, 5], strides = [1, 1]} : vector<16x5xf32> to vector<1x5xf32>
    %286 = vector.extract_strided_slice %278 {offsets = [0, 0], sizes = [1, 1], strides = [1, 1]} : vector<2x8xi32> to vector<1x1xi32>
    %287 = vector.broadcast %286 : vector<1x1xi32> to vector<1x5xi32>
    %288 = arith.cmpi eq, %287, %282 : vector<1x5xi32>
    %289 = arith.extui %288 : vector<1x5xi1> to vector<1x5xi32>
    %290 = arith.sitofp %289 : vector<1x5xi32> to vector<1x5xf32>
    %291 = arith.addf %279, %285 : vector<1x5xf32>
    %292 = arith.mulf %291, %290 : vector<1x5xf32>
    %cst_135 = arith.constant dense<0.000000e+00> : vector<1xf32>
    %293 = vector.multi_reduction <add>, %292, %cst_135 [1] : vector<1x5xf32> to vector<1xf32>
    %294 = vector.shape_cast %293 : vector<1xf32> to vector<1x1xf32>
    %295 = arith.addf %279, %285 : vector<1x5xf32>
    %296 = vector.extract_strided_slice %276 {offsets = [1, 0], sizes = [1, 5], strides = [1, 1]} : vector<16x5xf32> to vector<1x5xf32>
    %297 = vector.extract_strided_slice %277 {offsets = [0, 1], sizes = [1, 1], strides = [1, 1]} : vector<2x8xf32> to vector<1x1xf32>
    %298 = vector.extract_strided_slice %278 {offsets = [0, 1], sizes = [1, 1], strides = [1, 1]} : vector<2x8xi32> to vector<1x1xi32>
    %299 = vector.broadcast %298 : vector<1x1xi32> to vector<1x5xi32>
    %300 = arith.cmpi eq, %299, %282 : vector<1x5xi32>
    %301 = arith.extui %300 : vector<1x5xi1> to vector<1x5xi32>
    %302 = arith.sitofp %301 : vector<1x5xi32> to vector<1x5xf32>
    %cst_136 = arith.constant dense<0.000000e+00> : vector<1x5xf32>
    %303 = tpu.matmul %290, %281, %cst_136 {dimension_numbers = #tpu.dot_dimension_numbers<[1], [0], [0], [1], [0, 0, 1, 1], [], []>} : vector<1x5xf32>, vector<5x5xf32>, vector<1x5xf32> -> vector<1x5xf32>
    %304 = arith.addf %303, %296 : vector<1x5xf32>
    %305 = arith.mulf %304, %302 : vector<1x5xf32>
    %cst_137 = arith.constant dense<0.000000e+00> : vector<1xf32>
    %306 = vector.multi_reduction <add>, %305, %cst_137 [1] : vector<1x5xf32> to vector<1xf32>
    %307 = vector.shape_cast %306 : vector<1xf32> to vector<1x1xf32>
    %308 = arith.mulf %297, %307 : vector<1x1xf32>
    %309 = arith.addf %294, %308 : vector<1x1xf32>
    %cst_138 = arith.constant 5.000000e-01 : f32
    %310 = vector.broadcast %cst_138 : f32 to vector<1x1xf32>
    %311 = arith.cmpf ogt, %297, %310 : vector<1x1xf32>
    %312 = vector.shape_cast %311 : vector<1x1xi1> to vector<1x1xi1>
    %313 = vector.broadcast %312 : vector<1x1xi1> to vector<1x5xi1>
    %314 = arith.select %313, %302, %290 : vector<1x5xi1>, vector<1x5xf32>
    %cst_139 = arith.constant dense<0xFF800000> : vector<1xf32>
    %315 = vector.multi_reduction <maximumf>, %295, %cst_139 [1] : vector<1x5xf32> to vector<1xf32>
    %316 = vector.shape_cast %315 : vector<1xf32> to vector<1x1xf32>
    %317 = vector.broadcast %316 : vector<1x1xf32> to vector<1x5xf32>
    %318 = arith.subf %295, %317 : vector<1x5xf32>
    %319 = math.exp %318 : vector<1x5xf32>
    %cst_140 = arith.constant dense<0.000000e+00> : vector<1x5xf32>
    %320 = tpu.matmul %319, %283, %cst_140 {dimension_numbers = #tpu.dot_dimension_numbers<[1], [0], [0], [1], [0, 0, 1, 1], [], []>} : vector<1x5xf32>, vector<5x5xf32>, vector<1x5xf32> -> vector<1x5xf32>
    %321 = math.log %320 : vector<1x5xf32>
    %322 = vector.broadcast %316 : vector<1x1xf32> to vector<1x5xf32>
    %323 = arith.addf %322, %321 : vector<1x5xf32>
    %324 = arith.addf %323, %296 : vector<1x5xf32>
    %cst_141 = arith.constant 5.000000e-01 : f32
    %325 = vector.broadcast %cst_141 : f32 to vector<1x1xf32>
    %326 = arith.cmpf ogt, %297, %325 : vector<1x1xf32>
    %327 = vector.shape_cast %326 : vector<1x1xi1> to vector<1x1xi1>
    %328 = vector.broadcast %327 : vector<1x1xi1> to vector<1x5xi1>
    %329 = arith.select %328, %324, %295 : vector<1x5xi1>, vector<1x5xf32>
    %330 = vector.extract_strided_slice %276 {offsets = [2, 0], sizes = [1, 5], strides = [1, 1]} : vector<16x5xf32> to vector<1x5xf32>
    %331 = vector.extract_strided_slice %277 {offsets = [0, 2], sizes = [1, 1], strides = [1, 1]} : vector<2x8xf32> to vector<1x1xf32>
    %332 = vector.extract_strided_slice %278 {offsets = [0, 2], sizes = [1, 1], strides = [1, 1]} : vector<2x8xi32> to vector<1x1xi32>
    %333 = vector.broadcast %332 : vector<1x1xi32> to vector<1x5xi32>
    %334 = arith.cmpi eq, %333, %282 : vector<1x5xi32>
    %335 = arith.extui %334 : vector<1x5xi1> to vector<1x5xi32>
    %336 = arith.sitofp %335 : vector<1x5xi32> to vector<1x5xf32>
    %cst_142 = arith.constant dense<0.000000e+00> : vector<1x5xf32>
    %337 = tpu.matmul %302, %281, %cst_142 {dimension_numbers = #tpu.dot_dimension_numbers<[1], [0], [0], [1], [0, 0, 1, 1], [], []>} : vector<1x5xf32>, vector<5x5xf32>, vector<1x5xf32> -> vector<1x5xf32>
    %338 = arith.addf %337, %330 : vector<1x5xf32>
    %339 = arith.mulf %338, %336 : vector<1x5xf32>
    %cst_143 = arith.constant dense<0.000000e+00> : vector<1xf32>
    %340 = vector.multi_reduction <add>, %339, %cst_143 [1] : vector<1x5xf32> to vector<1xf32>
    %341 = vector.shape_cast %340 : vector<1xf32> to vector<1x1xf32>
    %342 = arith.mulf %331, %341 : vector<1x1xf32>
    %343 = arith.addf %309, %342 : vector<1x1xf32>
    %cst_144 = arith.constant 5.000000e-01 : f32
    %344 = vector.broadcast %cst_144 : f32 to vector<1x1xf32>
    %345 = arith.cmpf ogt, %331, %344 : vector<1x1xf32>
    %346 = vector.shape_cast %345 : vector<1x1xi1> to vector<1x1xi1>
    %347 = vector.broadcast %346 : vector<1x1xi1> to vector<1x5xi1>
    %348 = arith.select %347, %336, %314 : vector<1x5xi1>, vector<1x5xf32>
    %cst_145 = arith.constant dense<0xFF800000> : vector<1xf32>
    %349 = vector.multi_reduction <maximumf>, %329, %cst_145 [1] : vector<1x5xf32> to vector<1xf32>
    %350 = vector.shape_cast %349 : vector<1xf32> to vector<1x1xf32>
    %351 = vector.broadcast %350 : vector<1x1xf32> to vector<1x5xf32>
    %352 = arith.subf %329, %351 : vector<1x5xf32>
    %353 = math.exp %352 : vector<1x5xf32>
    %cst_146 = arith.constant dense<0.000000e+00> : vector<1x5xf32>
    %354 = tpu.matmul %353, %283, %cst_146 {dimension_numbers = #tpu.dot_dimension_numbers<[1], [0], [0], [1], [0, 0, 1, 1], [], []>} : vector<1x5xf32>, vector<5x5xf32>, vector<1x5xf32> -> vector<1x5xf32>
    %355 = math.log %354 : vector<1x5xf32>
    %356 = vector.broadcast %350 : vector<1x1xf32> to vector<1x5xf32>
    %357 = arith.addf %356, %355 : vector<1x5xf32>
    %358 = arith.addf %357, %330 : vector<1x5xf32>
    %cst_147 = arith.constant 5.000000e-01 : f32
    %359 = vector.broadcast %cst_147 : f32 to vector<1x1xf32>
    %360 = arith.cmpf ogt, %331, %359 : vector<1x1xf32>
    %361 = vector.shape_cast %360 : vector<1x1xi1> to vector<1x1xi1>
    %362 = vector.broadcast %361 : vector<1x1xi1> to vector<1x5xi1>
    %363 = arith.select %362, %358, %329 : vector<1x5xi1>, vector<1x5xf32>
    %364 = vector.extract_strided_slice %276 {offsets = [3, 0], sizes = [1, 5], strides = [1, 1]} : vector<16x5xf32> to vector<1x5xf32>
    %365 = vector.extract_strided_slice %277 {offsets = [0, 3], sizes = [1, 1], strides = [1, 1]} : vector<2x8xf32> to vector<1x1xf32>
    %366 = vector.extract_strided_slice %278 {offsets = [0, 3], sizes = [1, 1], strides = [1, 1]} : vector<2x8xi32> to vector<1x1xi32>
    %367 = vector.broadcast %366 : vector<1x1xi32> to vector<1x5xi32>
    %368 = arith.cmpi eq, %367, %282 : vector<1x5xi32>
    %369 = arith.extui %368 : vector<1x5xi1> to vector<1x5xi32>
    %370 = arith.sitofp %369 : vector<1x5xi32> to vector<1x5xf32>
    %cst_148 = arith.constant dense<0.000000e+00> : vector<1x5xf32>
    %371 = tpu.matmul %336, %281, %cst_148 {dimension_numbers = #tpu.dot_dimension_numbers<[1], [0], [0], [1], [0, 0, 1, 1], [], []>} : vector<1x5xf32>, vector<5x5xf32>, vector<1x5xf32> -> vector<1x5xf32>
    %372 = arith.addf %371, %364 : vector<1x5xf32>
    %373 = arith.mulf %372, %370 : vector<1x5xf32>
    %cst_149 = arith.constant dense<0.000000e+00> : vector<1xf32>
    %374 = vector.multi_reduction <add>, %373, %cst_149 [1] : vector<1x5xf32> to vector<1xf32>
    %375 = vector.shape_cast %374 : vector<1xf32> to vector<1x1xf32>
    %376 = arith.mulf %365, %375 : vector<1x1xf32>
    %377 = arith.addf %343, %376 : vector<1x1xf32>
    %cst_150 = arith.constant 5.000000e-01 : f32
    %378 = vector.broadcast %cst_150 : f32 to vector<1x1xf32>
    %379 = arith.cmpf ogt, %365, %378 : vector<1x1xf32>
    %380 = vector.shape_cast %379 : vector<1x1xi1> to vector<1x1xi1>
    %381 = vector.broadcast %380 : vector<1x1xi1> to vector<1x5xi1>
    %382 = arith.select %381, %370, %348 : vector<1x5xi1>, vector<1x5xf32>
    %cst_151 = arith.constant dense<0xFF800000> : vector<1xf32>
    %383 = vector.multi_reduction <maximumf>, %363, %cst_151 [1] : vector<1x5xf32> to vector<1xf32>
    %384 = vector.shape_cast %383 : vector<1xf32> to vector<1x1xf32>
    %385 = vector.broadcast %384 : vector<1x1xf32> to vector<1x5xf32>
    %386 = arith.subf %363, %385 : vector<1x5xf32>
    %387 = math.exp %386 : vector<1x5xf32>
    %cst_152 = arith.constant dense<0.000000e+00> : vector<1x5xf32>
    %388 = tpu.matmul %387, %283, %cst_152 {dimension_numbers = #tpu.dot_dimension_numbers<[1], [0], [0], [1], [0, 0, 1, 1], [], []>} : vector<1x5xf32>, vector<5x5xf32>, vector<1x5xf32> -> vector<1x5xf32>
    %389 = math.log %388 : vector<1x5xf32>
    %390 = vector.broadcast %384 : vector<1x1xf32> to vector<1x5xf32>
    %391 = arith.addf %390, %389 : vector<1x5xf32>
    %392 = arith.addf %391, %364 : vector<1x5xf32>
    %cst_153 = arith.constant 5.000000e-01 : f32
    %393 = vector.broadcast %cst_153 : f32 to vector<1x1xf32>
    %394 = arith.cmpf ogt, %365, %393 : vector<1x1xf32>
    %395 = vector.shape_cast %394 : vector<1x1xi1> to vector<1x1xi1>
    %396 = vector.broadcast %395 : vector<1x1xi1> to vector<1x5xi1>
    %397 = arith.select %396, %392, %363 : vector<1x5xi1>, vector<1x5xf32>
    %398 = vector.extract_strided_slice %276 {offsets = [4, 0], sizes = [1, 5], strides = [1, 1]} : vector<16x5xf32> to vector<1x5xf32>
    %399 = vector.extract_strided_slice %277 {offsets = [0, 4], sizes = [1, 1], strides = [1, 1]} : vector<2x8xf32> to vector<1x1xf32>
    %400 = vector.extract_strided_slice %278 {offsets = [0, 4], sizes = [1, 1], strides = [1, 1]} : vector<2x8xi32> to vector<1x1xi32>
    %401 = vector.broadcast %400 : vector<1x1xi32> to vector<1x5xi32>
    %402 = arith.cmpi eq, %401, %282 : vector<1x5xi32>
    %403 = arith.extui %402 : vector<1x5xi1> to vector<1x5xi32>
    %404 = arith.sitofp %403 : vector<1x5xi32> to vector<1x5xf32>
    %cst_154 = arith.constant dense<0.000000e+00> : vector<1x5xf32>
    %405 = tpu.matmul %370, %281, %cst_154 {dimension_numbers = #tpu.dot_dimension_numbers<[1], [0], [0], [1], [0, 0, 1, 1], [], []>} : vector<1x5xf32>, vector<5x5xf32>, vector<1x5xf32> -> vector<1x5xf32>
    %406 = arith.addf %405, %398 : vector<1x5xf32>
    %407 = arith.mulf %406, %404 : vector<1x5xf32>
    %cst_155 = arith.constant dense<0.000000e+00> : vector<1xf32>
    %408 = vector.multi_reduction <add>, %407, %cst_155 [1] : vector<1x5xf32> to vector<1xf32>
    %409 = vector.shape_cast %408 : vector<1xf32> to vector<1x1xf32>
    %410 = arith.mulf %399, %409 : vector<1x1xf32>
    %411 = arith.addf %377, %410 : vector<1x1xf32>
    %cst_156 = arith.constant 5.000000e-01 : f32
    %412 = vector.broadcast %cst_156 : f32 to vector<1x1xf32>
    %413 = arith.cmpf ogt, %399, %412 : vector<1x1xf32>
    %414 = vector.shape_cast %413 : vector<1x1xi1> to vector<1x1xi1>
    %415 = vector.broadcast %414 : vector<1x1xi1> to vector<1x5xi1>
    %416 = arith.select %415, %404, %382 : vector<1x5xi1>, vector<1x5xf32>
    %cst_157 = arith.constant dense<0xFF800000> : vector<1xf32>
    %417 = vector.multi_reduction <maximumf>, %397, %cst_157 [1] : vector<1x5xf32> to vector<1xf32>
    %418 = vector.shape_cast %417 : vector<1xf32> to vector<1x1xf32>
    %419 = vector.broadcast %418 : vector<1x1xf32> to vector<1x5xf32>
    %420 = arith.subf %397, %419 : vector<1x5xf32>
    %421 = math.exp %420 : vector<1x5xf32>
    %cst_158 = arith.constant dense<0.000000e+00> : vector<1x5xf32>
    %422 = tpu.matmul %421, %283, %cst_158 {dimension_numbers = #tpu.dot_dimension_numbers<[1], [0], [0], [1], [0, 0, 1, 1], [], []>} : vector<1x5xf32>, vector<5x5xf32>, vector<1x5xf32> -> vector<1x5xf32>
    %423 = math.log %422 : vector<1x5xf32>
    %424 = vector.broadcast %418 : vector<1x1xf32> to vector<1x5xf32>
    %425 = arith.addf %424, %423 : vector<1x5xf32>
    %426 = arith.addf %425, %398 : vector<1x5xf32>
    %cst_159 = arith.constant 5.000000e-01 : f32
    %427 = vector.broadcast %cst_159 : f32 to vector<1x1xf32>
    %428 = arith.cmpf ogt, %399, %427 : vector<1x1xf32>
    %429 = vector.shape_cast %428 : vector<1x1xi1> to vector<1x1xi1>
    %430 = vector.broadcast %429 : vector<1x1xi1> to vector<1x5xi1>
    %431 = arith.select %430, %426, %397 : vector<1x5xi1>, vector<1x5xf32>
    %432 = vector.extract_strided_slice %276 {offsets = [5, 0], sizes = [1, 5], strides = [1, 1]} : vector<16x5xf32> to vector<1x5xf32>
    %433 = vector.extract_strided_slice %277 {offsets = [0, 5], sizes = [1, 1], strides = [1, 1]} : vector<2x8xf32> to vector<1x1xf32>
    %434 = vector.extract_strided_slice %278 {offsets = [0, 5], sizes = [1, 1], strides = [1, 1]} : vector<2x8xi32> to vector<1x1xi32>
    %435 = vector.broadcast %434 : vector<1x1xi32> to vector<1x5xi32>
    %436 = arith.cmpi eq, %435, %282 : vector<1x5xi32>
    %437 = arith.extui %436 : vector<1x5xi1> to vector<1x5xi32>
    %438 = arith.sitofp %437 : vector<1x5xi32> to vector<1x5xf32>
    %cst_160 = arith.constant dense<0.000000e+00> : vector<1x5xf32>
    %439 = tpu.matmul %404, %281, %cst_160 {dimension_numbers = #tpu.dot_dimension_numbers<[1], [0], [0], [1], [0, 0, 1, 1], [], []>} : vector<1x5xf32>, vector<5x5xf32>, vector<1x5xf32> -> vector<1x5xf32>
    %440 = arith.addf %439, %432 : vector<1x5xf32>
    %441 = arith.mulf %440, %438 : vector<1x5xf32>
    %cst_161 = arith.constant dense<0.000000e+00> : vector<1xf32>
    %442 = vector.multi_reduction <add>, %441, %cst_161 [1] : vector<1x5xf32> to vector<1xf32>
    %443 = vector.shape_cast %442 : vector<1xf32> to vector<1x1xf32>
    %444 = arith.mulf %433, %443 : vector<1x1xf32>
    %445 = arith.addf %411, %444 : vector<1x1xf32>
    %cst_162 = arith.constant 5.000000e-01 : f32
    %446 = vector.broadcast %cst_162 : f32 to vector<1x1xf32>
    %447 = arith.cmpf ogt, %433, %446 : vector<1x1xf32>
    %448 = vector.shape_cast %447 : vector<1x1xi1> to vector<1x1xi1>
    %449 = vector.broadcast %448 : vector<1x1xi1> to vector<1x5xi1>
    %450 = arith.select %449, %438, %416 : vector<1x5xi1>, vector<1x5xf32>
    %cst_163 = arith.constant dense<0xFF800000> : vector<1xf32>
    %451 = vector.multi_reduction <maximumf>, %431, %cst_163 [1] : vector<1x5xf32> to vector<1xf32>
    %452 = vector.shape_cast %451 : vector<1xf32> to vector<1x1xf32>
    %453 = vector.broadcast %452 : vector<1x1xf32> to vector<1x5xf32>
    %454 = arith.subf %431, %453 : vector<1x5xf32>
    %455 = math.exp %454 : vector<1x5xf32>
    %cst_164 = arith.constant dense<0.000000e+00> : vector<1x5xf32>
    %456 = tpu.matmul %455, %283, %cst_164 {dimension_numbers = #tpu.dot_dimension_numbers<[1], [0], [0], [1], [0, 0, 1, 1], [], []>} : vector<1x5xf32>, vector<5x5xf32>, vector<1x5xf32> -> vector<1x5xf32>
    %457 = math.log %456 : vector<1x5xf32>
    %458 = vector.broadcast %452 : vector<1x1xf32> to vector<1x5xf32>
    %459 = arith.addf %458, %457 : vector<1x5xf32>
    %460 = arith.addf %459, %432 : vector<1x5xf32>
    %cst_165 = arith.constant 5.000000e-01 : f32
    %461 = vector.broadcast %cst_165 : f32 to vector<1x1xf32>
    %462 = arith.cmpf ogt, %433, %461 : vector<1x1xf32>
    %463 = vector.shape_cast %462 : vector<1x1xi1> to vector<1x1xi1>
    %464 = vector.broadcast %463 : vector<1x1xi1> to vector<1x5xi1>
    %465 = arith.select %464, %460, %431 : vector<1x5xi1>, vector<1x5xf32>
    %466 = vector.extract_strided_slice %276 {offsets = [6, 0], sizes = [1, 5], strides = [1, 1]} : vector<16x5xf32> to vector<1x5xf32>
    %467 = vector.extract_strided_slice %277 {offsets = [0, 6], sizes = [1, 1], strides = [1, 1]} : vector<2x8xf32> to vector<1x1xf32>
    %468 = vector.extract_strided_slice %278 {offsets = [0, 6], sizes = [1, 1], strides = [1, 1]} : vector<2x8xi32> to vector<1x1xi32>
    %469 = vector.broadcast %468 : vector<1x1xi32> to vector<1x5xi32>
    %470 = arith.cmpi eq, %469, %282 : vector<1x5xi32>
    %471 = arith.extui %470 : vector<1x5xi1> to vector<1x5xi32>
    %472 = arith.sitofp %471 : vector<1x5xi32> to vector<1x5xf32>
    %cst_166 = arith.constant dense<0.000000e+00> : vector<1x5xf32>
    %473 = tpu.matmul %438, %281, %cst_166 {dimension_numbers = #tpu.dot_dimension_numbers<[1], [0], [0], [1], [0, 0, 1, 1], [], []>} : vector<1x5xf32>, vector<5x5xf32>, vector<1x5xf32> -> vector<1x5xf32>
    %474 = arith.addf %473, %466 : vector<1x5xf32>
    %475 = arith.mulf %474, %472 : vector<1x5xf32>
    %cst_167 = arith.constant dense<0.000000e+00> : vector<1xf32>
    %476 = vector.multi_reduction <add>, %475, %cst_167 [1] : vector<1x5xf32> to vector<1xf32>
    %477 = vector.shape_cast %476 : vector<1xf32> to vector<1x1xf32>
    %478 = arith.mulf %467, %477 : vector<1x1xf32>
    %479 = arith.addf %445, %478 : vector<1x1xf32>
    %cst_168 = arith.constant 5.000000e-01 : f32
    %480 = vector.broadcast %cst_168 : f32 to vector<1x1xf32>
    %481 = arith.cmpf ogt, %467, %480 : vector<1x1xf32>
    %482 = vector.shape_cast %481 : vector<1x1xi1> to vector<1x1xi1>
    %483 = vector.broadcast %482 : vector<1x1xi1> to vector<1x5xi1>
    %484 = arith.select %483, %472, %450 : vector<1x5xi1>, vector<1x5xf32>
    %cst_169 = arith.constant dense<0xFF800000> : vector<1xf32>
    %485 = vector.multi_reduction <maximumf>, %465, %cst_169 [1] : vector<1x5xf32> to vector<1xf32>
    %486 = vector.shape_cast %485 : vector<1xf32> to vector<1x1xf32>
    %487 = vector.broadcast %486 : vector<1x1xf32> to vector<1x5xf32>
    %488 = arith.subf %465, %487 : vector<1x5xf32>
    %489 = math.exp %488 : vector<1x5xf32>
    %cst_170 = arith.constant dense<0.000000e+00> : vector<1x5xf32>
    %490 = tpu.matmul %489, %283, %cst_170 {dimension_numbers = #tpu.dot_dimension_numbers<[1], [0], [0], [1], [0, 0, 1, 1], [], []>} : vector<1x5xf32>, vector<5x5xf32>, vector<1x5xf32> -> vector<1x5xf32>
    %491 = math.log %490 : vector<1x5xf32>
    %492 = vector.broadcast %486 : vector<1x1xf32> to vector<1x5xf32>
    %493 = arith.addf %492, %491 : vector<1x5xf32>
    %494 = arith.addf %493, %466 : vector<1x5xf32>
    %cst_171 = arith.constant 5.000000e-01 : f32
    %495 = vector.broadcast %cst_171 : f32 to vector<1x1xf32>
    %496 = arith.cmpf ogt, %467, %495 : vector<1x1xf32>
    %497 = vector.shape_cast %496 : vector<1x1xi1> to vector<1x1xi1>
    %498 = vector.broadcast %497 : vector<1x1xi1> to vector<1x5xi1>
    %499 = arith.select %498, %494, %465 : vector<1x5xi1>, vector<1x5xf32>
    %500 = vector.extract_strided_slice %276 {offsets = [7, 0], sizes = [1, 5], strides = [1, 1]} : vector<16x5xf32> to vector<1x5xf32>
    %501 = vector.extract_strided_slice %277 {offsets = [0, 7], sizes = [1, 1], strides = [1, 1]} : vector<2x8xf32> to vector<1x1xf32>
    %502 = vector.extract_strided_slice %278 {offsets = [0, 7], sizes = [1, 1], strides = [1, 1]} : vector<2x8xi32> to vector<1x1xi32>
    %503 = vector.broadcast %502 : vector<1x1xi32> to vector<1x5xi32>
    %504 = arith.cmpi eq, %503, %282 : vector<1x5xi32>
    %505 = arith.extui %504 : vector<1x5xi1> to vector<1x5xi32>
    %506 = arith.sitofp %505 : vector<1x5xi32> to vector<1x5xf32>
    %cst_172 = arith.constant dense<0.000000e+00> : vector<1x5xf32>
    %507 = tpu.matmul %472, %281, %cst_172 {dimension_numbers = #tpu.dot_dimension_numbers<[1], [0], [0], [1], [0, 0, 1, 1], [], []>} : vector<1x5xf32>, vector<5x5xf32>, vector<1x5xf32> -> vector<1x5xf32>
    %508 = arith.addf %507, %500 : vector<1x5xf32>
    %509 = arith.mulf %508, %506 : vector<1x5xf32>
    %cst_173 = arith.constant dense<0.000000e+00> : vector<1xf32>
    %510 = vector.multi_reduction <add>, %509, %cst_173 [1] : vector<1x5xf32> to vector<1xf32>
    %511 = vector.shape_cast %510 : vector<1xf32> to vector<1x1xf32>
    %512 = arith.mulf %501, %511 : vector<1x1xf32>
    %513 = arith.addf %479, %512 : vector<1x1xf32>
    %cst_174 = arith.constant 5.000000e-01 : f32
    %514 = vector.broadcast %cst_174 : f32 to vector<1x1xf32>
    %515 = arith.cmpf ogt, %501, %514 : vector<1x1xf32>
    %516 = vector.shape_cast %515 : vector<1x1xi1> to vector<1x1xi1>
    %517 = vector.broadcast %516 : vector<1x1xi1> to vector<1x5xi1>
    %518 = arith.select %517, %506, %484 : vector<1x5xi1>, vector<1x5xf32>
    %cst_175 = arith.constant dense<0xFF800000> : vector<1xf32>
    %519 = vector.multi_reduction <maximumf>, %499, %cst_175 [1] : vector<1x5xf32> to vector<1xf32>
    %520 = vector.shape_cast %519 : vector<1xf32> to vector<1x1xf32>
    %521 = vector.broadcast %520 : vector<1x1xf32> to vector<1x5xf32>
    %522 = arith.subf %499, %521 : vector<1x5xf32>
    %523 = math.exp %522 : vector<1x5xf32>
    %cst_176 = arith.constant dense<0.000000e+00> : vector<1x5xf32>
    %524 = tpu.matmul %523, %283, %cst_176 {dimension_numbers = #tpu.dot_dimension_numbers<[1], [0], [0], [1], [0, 0, 1, 1], [], []>} : vector<1x5xf32>, vector<5x5xf32>, vector<1x5xf32> -> vector<1x5xf32>
    %525 = math.log %524 : vector<1x5xf32>
    %526 = vector.broadcast %520 : vector<1x1xf32> to vector<1x5xf32>
    %527 = arith.addf %526, %525 : vector<1x5xf32>
    %528 = arith.addf %527, %500 : vector<1x5xf32>
    %cst_177 = arith.constant 5.000000e-01 : f32
    %529 = vector.broadcast %cst_177 : f32 to vector<1x1xf32>
    %530 = arith.cmpf ogt, %501, %529 : vector<1x1xf32>
    %531 = vector.shape_cast %530 : vector<1x1xi1> to vector<1x1xi1>
    %532 = vector.broadcast %531 : vector<1x1xi1> to vector<1x5xi1>
    %533 = arith.select %532, %528, %499 : vector<1x5xi1>, vector<1x5xf32>
    %534 = arith.mulf %280, %518 : vector<1x5xf32>
    %cst_178 = arith.constant dense<0.000000e+00> : vector<1xf32>
    %535 = vector.multi_reduction <add>, %534, %cst_178 [1] : vector<1x5xf32> to vector<1xf32>
    %536 = vector.shape_cast %535 : vector<1xf32> to vector<1x1xf32>
    %537 = arith.addf %513, %536 : vector<1x1xf32>
    %538 = arith.addf %533, %280 : vector<1x5xf32>
    %cst_179 = arith.constant dense<0xFF800000> : vector<1xf32>
    %539 = vector.multi_reduction <maximumf>, %538, %cst_179 [1] : vector<1x5xf32> to vector<1xf32>
    %540 = vector.shape_cast %539 : vector<1xf32> to vector<1x1xf32>
    %541 = vector.broadcast %540 : vector<1x1xf32> to vector<1x5xf32>
    %542 = arith.subf %538, %541 : vector<1x5xf32>
    %543 = math.exp %542 : vector<1x5xf32>
    %cst_180 = arith.constant dense<0.000000e+00> : vector<1xf32>
    %544 = vector.multi_reduction <add>, %543, %cst_180 [1] : vector<1x5xf32> to vector<1xf32>
    %545 = vector.shape_cast %544 : vector<1xf32> to vector<1x1xf32>
    %546 = math.log %545 : vector<1x1xf32>
    %547 = arith.addf %546, %540 : vector<1x1xf32>
    %548 = arith.subf %537, %547 : vector<1x1xf32>
    %549 = arith.addf %284, %548 : vector<1x1xf32>
    %550 = vector.extract_strided_slice %276 {offsets = [8, 0], sizes = [1, 5], strides = [1, 1]} : vector<16x5xf32> to vector<1x5xf32>
    %551 = vector.extract_strided_slice %278 {offsets = [1, 0], sizes = [1, 1], strides = [1, 1]} : vector<2x8xi32> to vector<1x1xi32>
    %552 = vector.broadcast %551 : vector<1x1xi32> to vector<1x5xi32>
    %553 = arith.cmpi eq, %552, %282 : vector<1x5xi32>
    %554 = arith.extui %553 : vector<1x5xi1> to vector<1x5xi32>
    %555 = arith.sitofp %554 : vector<1x5xi32> to vector<1x5xf32>
    %556 = arith.addf %279, %550 : vector<1x5xf32>
    %557 = arith.mulf %556, %555 : vector<1x5xf32>
    %cst_181 = arith.constant dense<0.000000e+00> : vector<1xf32>
    %558 = vector.multi_reduction <add>, %557, %cst_181 [1] : vector<1x5xf32> to vector<1xf32>
    %559 = vector.shape_cast %558 : vector<1xf32> to vector<1x1xf32>
    %560 = arith.addf %279, %550 : vector<1x5xf32>
    %561 = vector.extract_strided_slice %276 {offsets = [9, 0], sizes = [1, 5], strides = [1, 1]} : vector<16x5xf32> to vector<1x5xf32>
    %562 = vector.extract_strided_slice %277 {offsets = [1, 1], sizes = [1, 1], strides = [1, 1]} : vector<2x8xf32> to vector<1x1xf32>
    %563 = vector.extract_strided_slice %278 {offsets = [1, 1], sizes = [1, 1], strides = [1, 1]} : vector<2x8xi32> to vector<1x1xi32>
    %564 = vector.broadcast %563 : vector<1x1xi32> to vector<1x5xi32>
    %565 = arith.cmpi eq, %564, %282 : vector<1x5xi32>
    %566 = arith.extui %565 : vector<1x5xi1> to vector<1x5xi32>
    %567 = arith.sitofp %566 : vector<1x5xi32> to vector<1x5xf32>
    %cst_182 = arith.constant dense<0.000000e+00> : vector<1x5xf32>
    %568 = tpu.matmul %555, %281, %cst_182 {dimension_numbers = #tpu.dot_dimension_numbers<[1], [0], [0], [1], [0, 0, 1, 1], [], []>} : vector<1x5xf32>, vector<5x5xf32>, vector<1x5xf32> -> vector<1x5xf32>
    %569 = arith.addf %568, %561 : vector<1x5xf32>
    %570 = arith.mulf %569, %567 : vector<1x5xf32>
    %cst_183 = arith.constant dense<0.000000e+00> : vector<1xf32>
    %571 = vector.multi_reduction <add>, %570, %cst_183 [1] : vector<1x5xf32> to vector<1xf32>
    %572 = vector.shape_cast %571 : vector<1xf32> to vector<1x1xf32>
    %573 = arith.mulf %562, %572 : vector<1x1xf32>
    %574 = arith.addf %559, %573 : vector<1x1xf32>
    %cst_184 = arith.constant 5.000000e-01 : f32
    %575 = vector.broadcast %cst_184 : f32 to vector<1x1xf32>
    %576 = arith.cmpf ogt, %562, %575 : vector<1x1xf32>
    %577 = vector.shape_cast %576 : vector<1x1xi1> to vector<1x1xi1>
    %578 = vector.broadcast %577 : vector<1x1xi1> to vector<1x5xi1>
    %579 = arith.select %578, %567, %555 : vector<1x5xi1>, vector<1x5xf32>
    %cst_185 = arith.constant dense<0xFF800000> : vector<1xf32>
    %580 = vector.multi_reduction <maximumf>, %560, %cst_185 [1] : vector<1x5xf32> to vector<1xf32>
    %581 = vector.shape_cast %580 : vector<1xf32> to vector<1x1xf32>
    %582 = vector.broadcast %581 : vector<1x1xf32> to vector<1x5xf32>
    %583 = arith.subf %560, %582 : vector<1x5xf32>
    %584 = math.exp %583 : vector<1x5xf32>
    %cst_186 = arith.constant dense<0.000000e+00> : vector<1x5xf32>
    %585 = tpu.matmul %584, %283, %cst_186 {dimension_numbers = #tpu.dot_dimension_numbers<[1], [0], [0], [1], [0, 0, 1, 1], [], []>} : vector<1x5xf32>, vector<5x5xf32>, vector<1x5xf32> -> vector<1x5xf32>
    %586 = math.log %585 : vector<1x5xf32>
    %587 = vector.broadcast %581 : vector<1x1xf32> to vector<1x5xf32>
    %588 = arith.addf %587, %586 : vector<1x5xf32>
    %589 = arith.addf %588, %561 : vector<1x5xf32>
    %cst_187 = arith.constant 5.000000e-01 : f32
    %590 = vector.broadcast %cst_187 : f32 to vector<1x1xf32>
    %591 = arith.cmpf ogt, %562, %590 : vector<1x1xf32>
    %592 = vector.shape_cast %591 : vector<1x1xi1> to vector<1x1xi1>
    %593 = vector.broadcast %592 : vector<1x1xi1> to vector<1x5xi1>
    %594 = arith.select %593, %589, %560 : vector<1x5xi1>, vector<1x5xf32>
    %595 = vector.extract_strided_slice %276 {offsets = [10, 0], sizes = [1, 5], strides = [1, 1]} : vector<16x5xf32> to vector<1x5xf32>
    %596 = vector.extract_strided_slice %277 {offsets = [1, 2], sizes = [1, 1], strides = [1, 1]} : vector<2x8xf32> to vector<1x1xf32>
    %597 = vector.extract_strided_slice %278 {offsets = [1, 2], sizes = [1, 1], strides = [1, 1]} : vector<2x8xi32> to vector<1x1xi32>
    %598 = vector.broadcast %597 : vector<1x1xi32> to vector<1x5xi32>
    %599 = arith.cmpi eq, %598, %282 : vector<1x5xi32>
    %600 = arith.extui %599 : vector<1x5xi1> to vector<1x5xi32>
    %601 = arith.sitofp %600 : vector<1x5xi32> to vector<1x5xf32>
    %cst_188 = arith.constant dense<0.000000e+00> : vector<1x5xf32>
    %602 = tpu.matmul %567, %281, %cst_188 {dimension_numbers = #tpu.dot_dimension_numbers<[1], [0], [0], [1], [0, 0, 1, 1], [], []>} : vector<1x5xf32>, vector<5x5xf32>, vector<1x5xf32> -> vector<1x5xf32>
    %603 = arith.addf %602, %595 : vector<1x5xf32>
    %604 = arith.mulf %603, %601 : vector<1x5xf32>
    %cst_189 = arith.constant dense<0.000000e+00> : vector<1xf32>
    %605 = vector.multi_reduction <add>, %604, %cst_189 [1] : vector<1x5xf32> to vector<1xf32>
    %606 = vector.shape_cast %605 : vector<1xf32> to vector<1x1xf32>
    %607 = arith.mulf %596, %606 : vector<1x1xf32>
    %608 = arith.addf %574, %607 : vector<1x1xf32>
    %cst_190 = arith.constant 5.000000e-01 : f32
    %609 = vector.broadcast %cst_190 : f32 to vector<1x1xf32>
    %610 = arith.cmpf ogt, %596, %609 : vector<1x1xf32>
    %611 = vector.shape_cast %610 : vector<1x1xi1> to vector<1x1xi1>
    %612 = vector.broadcast %611 : vector<1x1xi1> to vector<1x5xi1>
    %613 = arith.select %612, %601, %579 : vector<1x5xi1>, vector<1x5xf32>
    %cst_191 = arith.constant dense<0xFF800000> : vector<1xf32>
    %614 = vector.multi_reduction <maximumf>, %594, %cst_191 [1] : vector<1x5xf32> to vector<1xf32>
    %615 = vector.shape_cast %614 : vector<1xf32> to vector<1x1xf32>
    %616 = vector.broadcast %615 : vector<1x1xf32> to vector<1x5xf32>
    %617 = arith.subf %594, %616 : vector<1x5xf32>
    %618 = math.exp %617 : vector<1x5xf32>
    %cst_192 = arith.constant dense<0.000000e+00> : vector<1x5xf32>
    %619 = tpu.matmul %618, %283, %cst_192 {dimension_numbers = #tpu.dot_dimension_numbers<[1], [0], [0], [1], [0, 0, 1, 1], [], []>} : vector<1x5xf32>, vector<5x5xf32>, vector<1x5xf32> -> vector<1x5xf32>
    %620 = math.log %619 : vector<1x5xf32>
    %621 = vector.broadcast %615 : vector<1x1xf32> to vector<1x5xf32>
    %622 = arith.addf %621, %620 : vector<1x5xf32>
    %623 = arith.addf %622, %595 : vector<1x5xf32>
    %cst_193 = arith.constant 5.000000e-01 : f32
    %624 = vector.broadcast %cst_193 : f32 to vector<1x1xf32>
    %625 = arith.cmpf ogt, %596, %624 : vector<1x1xf32>
    %626 = vector.shape_cast %625 : vector<1x1xi1> to vector<1x1xi1>
    %627 = vector.broadcast %626 : vector<1x1xi1> to vector<1x5xi1>
    %628 = arith.select %627, %623, %594 : vector<1x5xi1>, vector<1x5xf32>
    %629 = vector.extract_strided_slice %276 {offsets = [11, 0], sizes = [1, 5], strides = [1, 1]} : vector<16x5xf32> to vector<1x5xf32>
    %630 = vector.extract_strided_slice %277 {offsets = [1, 3], sizes = [1, 1], strides = [1, 1]} : vector<2x8xf32> to vector<1x1xf32>
    %631 = vector.extract_strided_slice %278 {offsets = [1, 3], sizes = [1, 1], strides = [1, 1]} : vector<2x8xi32> to vector<1x1xi32>
    %632 = vector.broadcast %631 : vector<1x1xi32> to vector<1x5xi32>
    %633 = arith.cmpi eq, %632, %282 : vector<1x5xi32>
    %634 = arith.extui %633 : vector<1x5xi1> to vector<1x5xi32>
    %635 = arith.sitofp %634 : vector<1x5xi32> to vector<1x5xf32>
    %cst_194 = arith.constant dense<0.000000e+00> : vector<1x5xf32>
    %636 = tpu.matmul %601, %281, %cst_194 {dimension_numbers = #tpu.dot_dimension_numbers<[1], [0], [0], [1], [0, 0, 1, 1], [], []>} : vector<1x5xf32>, vector<5x5xf32>, vector<1x5xf32> -> vector<1x5xf32>
    %637 = arith.addf %636, %629 : vector<1x5xf32>
    %638 = arith.mulf %637, %635 : vector<1x5xf32>
    %cst_195 = arith.constant dense<0.000000e+00> : vector<1xf32>
    %639 = vector.multi_reduction <add>, %638, %cst_195 [1] : vector<1x5xf32> to vector<1xf32>
    %640 = vector.shape_cast %639 : vector<1xf32> to vector<1x1xf32>
    %641 = arith.mulf %630, %640 : vector<1x1xf32>
    %642 = arith.addf %608, %641 : vector<1x1xf32>
    %cst_196 = arith.constant 5.000000e-01 : f32
    %643 = vector.broadcast %cst_196 : f32 to vector<1x1xf32>
    %644 = arith.cmpf ogt, %630, %643 : vector<1x1xf32>
    %645 = vector.shape_cast %644 : vector<1x1xi1> to vector<1x1xi1>
    %646 = vector.broadcast %645 : vector<1x1xi1> to vector<1x5xi1>
    %647 = arith.select %646, %635, %613 : vector<1x5xi1>, vector<1x5xf32>
    %cst_197 = arith.constant dense<0xFF800000> : vector<1xf32>
    %648 = vector.multi_reduction <maximumf>, %628, %cst_197 [1] : vector<1x5xf32> to vector<1xf32>
    %649 = vector.shape_cast %648 : vector<1xf32> to vector<1x1xf32>
    %650 = vector.broadcast %649 : vector<1x1xf32> to vector<1x5xf32>
    %651 = arith.subf %628, %650 : vector<1x5xf32>
    %652 = math.exp %651 : vector<1x5xf32>
    %cst_198 = arith.constant dense<0.000000e+00> : vector<1x5xf32>
    %653 = tpu.matmul %652, %283, %cst_198 {dimension_numbers = #tpu.dot_dimension_numbers<[1], [0], [0], [1], [0, 0, 1, 1], [], []>} : vector<1x5xf32>, vector<5x5xf32>, vector<1x5xf32> -> vector<1x5xf32>
    %654 = math.log %653 : vector<1x5xf32>
    %655 = vector.broadcast %649 : vector<1x1xf32> to vector<1x5xf32>
    %656 = arith.addf %655, %654 : vector<1x5xf32>
    %657 = arith.addf %656, %629 : vector<1x5xf32>
    %cst_199 = arith.constant 5.000000e-01 : f32
    %658 = vector.broadcast %cst_199 : f32 to vector<1x1xf32>
    %659 = arith.cmpf ogt, %630, %658 : vector<1x1xf32>
    %660 = vector.shape_cast %659 : vector<1x1xi1> to vector<1x1xi1>
    %661 = vector.broadcast %660 : vector<1x1xi1> to vector<1x5xi1>
    %662 = arith.select %661, %657, %628 : vector<1x5xi1>, vector<1x5xf32>
    %663 = vector.extract_strided_slice %276 {offsets = [12, 0], sizes = [1, 5], strides = [1, 1]} : vector<16x5xf32> to vector<1x5xf32>
    %664 = vector.extract_strided_slice %277 {offsets = [1, 4], sizes = [1, 1], strides = [1, 1]} : vector<2x8xf32> to vector<1x1xf32>
    %665 = vector.extract_strided_slice %278 {offsets = [1, 4], sizes = [1, 1], strides = [1, 1]} : vector<2x8xi32> to vector<1x1xi32>
    %666 = vector.broadcast %665 : vector<1x1xi32> to vector<1x5xi32>
    %667 = arith.cmpi eq, %666, %282 : vector<1x5xi32>
    %668 = arith.extui %667 : vector<1x5xi1> to vector<1x5xi32>
    %669 = arith.sitofp %668 : vector<1x5xi32> to vector<1x5xf32>
    %cst_200 = arith.constant dense<0.000000e+00> : vector<1x5xf32>
    %670 = tpu.matmul %635, %281, %cst_200 {dimension_numbers = #tpu.dot_dimension_numbers<[1], [0], [0], [1], [0, 0, 1, 1], [], []>} : vector<1x5xf32>, vector<5x5xf32>, vector<1x5xf32> -> vector<1x5xf32>
    %671 = arith.addf %670, %663 : vector<1x5xf32>
    %672 = arith.mulf %671, %669 : vector<1x5xf32>
    %cst_201 = arith.constant dense<0.000000e+00> : vector<1xf32>
    %673 = vector.multi_reduction <add>, %672, %cst_201 [1] : vector<1x5xf32> to vector<1xf32>
    %674 = vector.shape_cast %673 : vector<1xf32> to vector<1x1xf32>
    %675 = arith.mulf %664, %674 : vector<1x1xf32>
    %676 = arith.addf %642, %675 : vector<1x1xf32>
    %cst_202 = arith.constant 5.000000e-01 : f32
    %677 = vector.broadcast %cst_202 : f32 to vector<1x1xf32>
    %678 = arith.cmpf ogt, %664, %677 : vector<1x1xf32>
    %679 = vector.shape_cast %678 : vector<1x1xi1> to vector<1x1xi1>
    %680 = vector.broadcast %679 : vector<1x1xi1> to vector<1x5xi1>
    %681 = arith.select %680, %669, %647 : vector<1x5xi1>, vector<1x5xf32>
    %cst_203 = arith.constant dense<0xFF800000> : vector<1xf32>
    %682 = vector.multi_reduction <maximumf>, %662, %cst_203 [1] : vector<1x5xf32> to vector<1xf32>
    %683 = vector.shape_cast %682 : vector<1xf32> to vector<1x1xf32>
    %684 = vector.broadcast %683 : vector<1x1xf32> to vector<1x5xf32>
    %685 = arith.subf %662, %684 : vector<1x5xf32>
    %686 = math.exp %685 : vector<1x5xf32>
    %cst_204 = arith.constant dense<0.000000e+00> : vector<1x5xf32>
    %687 = tpu.matmul %686, %283, %cst_204 {dimension_numbers = #tpu.dot_dimension_numbers<[1], [0], [0], [1], [0, 0, 1, 1], [], []>} : vector<1x5xf32>, vector<5x5xf32>, vector<1x5xf32> -> vector<1x5xf32>
    %688 = math.log %687 : vector<1x5xf32>
    %689 = vector.broadcast %683 : vector<1x1xf32> to vector<1x5xf32>
    %690 = arith.addf %689, %688 : vector<1x5xf32>
    %691 = arith.addf %690, %663 : vector<1x5xf32>
    %cst_205 = arith.constant 5.000000e-01 : f32
    %692 = vector.broadcast %cst_205 : f32 to vector<1x1xf32>
    %693 = arith.cmpf ogt, %664, %692 : vector<1x1xf32>
    %694 = vector.shape_cast %693 : vector<1x1xi1> to vector<1x1xi1>
    %695 = vector.broadcast %694 : vector<1x1xi1> to vector<1x5xi1>
    %696 = arith.select %695, %691, %662 : vector<1x5xi1>, vector<1x5xf32>
    %697 = vector.extract_strided_slice %276 {offsets = [13, 0], sizes = [1, 5], strides = [1, 1]} : vector<16x5xf32> to vector<1x5xf32>
    %698 = vector.extract_strided_slice %277 {offsets = [1, 5], sizes = [1, 1], strides = [1, 1]} : vector<2x8xf32> to vector<1x1xf32>
    %699 = vector.extract_strided_slice %278 {offsets = [1, 5], sizes = [1, 1], strides = [1, 1]} : vector<2x8xi32> to vector<1x1xi32>
    %700 = vector.broadcast %699 : vector<1x1xi32> to vector<1x5xi32>
    %701 = arith.cmpi eq, %700, %282 : vector<1x5xi32>
    %702 = arith.extui %701 : vector<1x5xi1> to vector<1x5xi32>
    %703 = arith.sitofp %702 : vector<1x5xi32> to vector<1x5xf32>
    %cst_206 = arith.constant dense<0.000000e+00> : vector<1x5xf32>
    %704 = tpu.matmul %669, %281, %cst_206 {dimension_numbers = #tpu.dot_dimension_numbers<[1], [0], [0], [1], [0, 0, 1, 1], [], []>} : vector<1x5xf32>, vector<5x5xf32>, vector<1x5xf32> -> vector<1x5xf32>
    %705 = arith.addf %704, %697 : vector<1x5xf32>
    %706 = arith.mulf %705, %703 : vector<1x5xf32>
    %cst_207 = arith.constant dense<0.000000e+00> : vector<1xf32>
    %707 = vector.multi_reduction <add>, %706, %cst_207 [1] : vector<1x5xf32> to vector<1xf32>
    %708 = vector.shape_cast %707 : vector<1xf32> to vector<1x1xf32>
    %709 = arith.mulf %698, %708 : vector<1x1xf32>
    %710 = arith.addf %676, %709 : vector<1x1xf32>
    %cst_208 = arith.constant 5.000000e-01 : f32
    %711 = vector.broadcast %cst_208 : f32 to vector<1x1xf32>
    %712 = arith.cmpf ogt, %698, %711 : vector<1x1xf32>
    %713 = vector.shape_cast %712 : vector<1x1xi1> to vector<1x1xi1>
    %714 = vector.broadcast %713 : vector<1x1xi1> to vector<1x5xi1>
    %715 = arith.select %714, %703, %681 : vector<1x5xi1>, vector<1x5xf32>
    %cst_209 = arith.constant dense<0xFF800000> : vector<1xf32>
    %716 = vector.multi_reduction <maximumf>, %696, %cst_209 [1] : vector<1x5xf32> to vector<1xf32>
    %717 = vector.shape_cast %716 : vector<1xf32> to vector<1x1xf32>
    %718 = vector.broadcast %717 : vector<1x1xf32> to vector<1x5xf32>
    %719 = arith.subf %696, %718 : vector<1x5xf32>
    %720 = math.exp %719 : vector<1x5xf32>
    %cst_210 = arith.constant dense<0.000000e+00> : vector<1x5xf32>
    %721 = tpu.matmul %720, %283, %cst_210 {dimension_numbers = #tpu.dot_dimension_numbers<[1], [0], [0], [1], [0, 0, 1, 1], [], []>} : vector<1x5xf32>, vector<5x5xf32>, vector<1x5xf32> -> vector<1x5xf32>
    %722 = math.log %721 : vector<1x5xf32>
    %723 = vector.broadcast %717 : vector<1x1xf32> to vector<1x5xf32>
    %724 = arith.addf %723, %722 : vector<1x5xf32>
    %725 = arith.addf %724, %697 : vector<1x5xf32>
    %cst_211 = arith.constant 5.000000e-01 : f32
    %726 = vector.broadcast %cst_211 : f32 to vector<1x1xf32>
    %727 = arith.cmpf ogt, %698, %726 : vector<1x1xf32>
    %728 = vector.shape_cast %727 : vector<1x1xi1> to vector<1x1xi1>
    %729 = vector.broadcast %728 : vector<1x1xi1> to vector<1x5xi1>
    %730 = arith.select %729, %725, %696 : vector<1x5xi1>, vector<1x5xf32>
    %731 = vector.extract_strided_slice %276 {offsets = [14, 0], sizes = [1, 5], strides = [1, 1]} : vector<16x5xf32> to vector<1x5xf32>
    %732 = vector.extract_strided_slice %277 {offsets = [1, 6], sizes = [1, 1], strides = [1, 1]} : vector<2x8xf32> to vector<1x1xf32>
    %733 = vector.extract_strided_slice %278 {offsets = [1, 6], sizes = [1, 1], strides = [1, 1]} : vector<2x8xi32> to vector<1x1xi32>
    %734 = vector.broadcast %733 : vector<1x1xi32> to vector<1x5xi32>
    %735 = arith.cmpi eq, %734, %282 : vector<1x5xi32>
    %736 = arith.extui %735 : vector<1x5xi1> to vector<1x5xi32>
    %737 = arith.sitofp %736 : vector<1x5xi32> to vector<1x5xf32>
    %cst_212 = arith.constant dense<0.000000e+00> : vector<1x5xf32>
    %738 = tpu.matmul %703, %281, %cst_212 {dimension_numbers = #tpu.dot_dimension_numbers<[1], [0], [0], [1], [0, 0, 1, 1], [], []>} : vector<1x5xf32>, vector<5x5xf32>, vector<1x5xf32> -> vector<1x5xf32>
    %739 = arith.addf %738, %731 : vector<1x5xf32>
    %740 = arith.mulf %739, %737 : vector<1x5xf32>
    %cst_213 = arith.constant dense<0.000000e+00> : vector<1xf32>
    %741 = vector.multi_reduction <add>, %740, %cst_213 [1] : vector<1x5xf32> to vector<1xf32>
    %742 = vector.shape_cast %741 : vector<1xf32> to vector<1x1xf32>
    %743 = arith.mulf %732, %742 : vector<1x1xf32>
    %744 = arith.addf %710, %743 : vector<1x1xf32>
    %cst_214 = arith.constant 5.000000e-01 : f32
    %745 = vector.broadcast %cst_214 : f32 to vector<1x1xf32>
    %746 = arith.cmpf ogt, %732, %745 : vector<1x1xf32>
    %747 = vector.shape_cast %746 : vector<1x1xi1> to vector<1x1xi1>
    %748 = vector.broadcast %747 : vector<1x1xi1> to vector<1x5xi1>
    %749 = arith.select %748, %737, %715 : vector<1x5xi1>, vector<1x5xf32>
    %cst_215 = arith.constant dense<0xFF800000> : vector<1xf32>
    %750 = vector.multi_reduction <maximumf>, %730, %cst_215 [1] : vector<1x5xf32> to vector<1xf32>
    %751 = vector.shape_cast %750 : vector<1xf32> to vector<1x1xf32>
    %752 = vector.broadcast %751 : vector<1x1xf32> to vector<1x5xf32>
    %753 = arith.subf %730, %752 : vector<1x5xf32>
    %754 = math.exp %753 : vector<1x5xf32>
    %cst_216 = arith.constant dense<0.000000e+00> : vector<1x5xf32>
    %755 = tpu.matmul %754, %283, %cst_216 {dimension_numbers = #tpu.dot_dimension_numbers<[1], [0], [0], [1], [0, 0, 1, 1], [], []>} : vector<1x5xf32>, vector<5x5xf32>, vector<1x5xf32> -> vector<1x5xf32>
    %756 = math.log %755 : vector<1x5xf32>
    %757 = vector.broadcast %751 : vector<1x1xf32> to vector<1x5xf32>
    %758 = arith.addf %757, %756 : vector<1x5xf32>
    %759 = arith.addf %758, %731 : vector<1x5xf32>
    %cst_217 = arith.constant 5.000000e-01 : f32
    %760 = vector.broadcast %cst_217 : f32 to vector<1x1xf32>
    %761 = arith.cmpf ogt, %732, %760 : vector<1x1xf32>
    %762 = vector.shape_cast %761 : vector<1x1xi1> to vector<1x1xi1>
    %763 = vector.broadcast %762 : vector<1x1xi1> to vector<1x5xi1>
    %764 = arith.select %763, %759, %730 : vector<1x5xi1>, vector<1x5xf32>
    %765 = vector.extract_strided_slice %276 {offsets = [15, 0], sizes = [1, 5], strides = [1, 1]} : vector<16x5xf32> to vector<1x5xf32>
    %766 = vector.extract_strided_slice %277 {offsets = [1, 7], sizes = [1, 1], strides = [1, 1]} : vector<2x8xf32> to vector<1x1xf32>
    %767 = vector.extract_strided_slice %278 {offsets = [1, 7], sizes = [1, 1], strides = [1, 1]} : vector<2x8xi32> to vector<1x1xi32>
    %768 = vector.broadcast %767 : vector<1x1xi32> to vector<1x5xi32>
    %769 = arith.cmpi eq, %768, %282 : vector<1x5xi32>
    %770 = arith.extui %769 : vector<1x5xi1> to vector<1x5xi32>
    %771 = arith.sitofp %770 : vector<1x5xi32> to vector<1x5xf32>
    %cst_218 = arith.constant dense<0.000000e+00> : vector<1x5xf32>
    %772 = tpu.matmul %737, %281, %cst_218 {dimension_numbers = #tpu.dot_dimension_numbers<[1], [0], [0], [1], [0, 0, 1, 1], [], []>} : vector<1x5xf32>, vector<5x5xf32>, vector<1x5xf32> -> vector<1x5xf32>
    %773 = arith.addf %772, %765 : vector<1x5xf32>
    %774 = arith.mulf %773, %771 : vector<1x5xf32>
    %cst_219 = arith.constant dense<0.000000e+00> : vector<1xf32>
    %775 = vector.multi_reduction <add>, %774, %cst_219 [1] : vector<1x5xf32> to vector<1xf32>
    %776 = vector.shape_cast %775 : vector<1xf32> to vector<1x1xf32>
    %777 = arith.mulf %766, %776 : vector<1x1xf32>
    %778 = arith.addf %744, %777 : vector<1x1xf32>
    %cst_220 = arith.constant 5.000000e-01 : f32
    %779 = vector.broadcast %cst_220 : f32 to vector<1x1xf32>
    %780 = arith.cmpf ogt, %766, %779 : vector<1x1xf32>
    %781 = vector.shape_cast %780 : vector<1x1xi1> to vector<1x1xi1>
    %782 = vector.broadcast %781 : vector<1x1xi1> to vector<1x5xi1>
    %783 = arith.select %782, %771, %749 : vector<1x5xi1>, vector<1x5xf32>
    %cst_221 = arith.constant dense<0xFF800000> : vector<1xf32>
    %784 = vector.multi_reduction <maximumf>, %764, %cst_221 [1] : vector<1x5xf32> to vector<1xf32>
    %785 = vector.shape_cast %784 : vector<1xf32> to vector<1x1xf32>
    %786 = vector.broadcast %785 : vector<1x1xf32> to vector<1x5xf32>
    %787 = arith.subf %764, %786 : vector<1x5xf32>
    %788 = math.exp %787 : vector<1x5xf32>
    %cst_222 = arith.constant dense<0.000000e+00> : vector<1x5xf32>
    %789 = tpu.matmul %788, %283, %cst_222 {dimension_numbers = #tpu.dot_dimension_numbers<[1], [0], [0], [1], [0, 0, 1, 1], [], []>} : vector<1x5xf32>, vector<5x5xf32>, vector<1x5xf32> -> vector<1x5xf32>
    %790 = math.log %789 : vector<1x5xf32>
    %791 = vector.broadcast %785 : vector<1x1xf32> to vector<1x5xf32>
    %792 = arith.addf %791, %790 : vector<1x5xf32>
    %793 = arith.addf %792, %765 : vector<1x5xf32>
    %cst_223 = arith.constant 5.000000e-01 : f32
    %794 = vector.broadcast %cst_223 : f32 to vector<1x1xf32>
    %795 = arith.cmpf ogt, %766, %794 : vector<1x1xf32>
    %796 = vector.shape_cast %795 : vector<1x1xi1> to vector<1x1xi1>
    %797 = vector.broadcast %796 : vector<1x1xi1> to vector<1x5xi1>
    %798 = arith.select %797, %793, %764 : vector<1x5xi1>, vector<1x5xf32>
    %799 = arith.mulf %280, %783 : vector<1x5xf32>
    %cst_224 = arith.constant dense<0.000000e+00> : vector<1xf32>
    %800 = vector.multi_reduction <add>, %799, %cst_224 [1] : vector<1x5xf32> to vector<1xf32>
    %801 = vector.shape_cast %800 : vector<1xf32> to vector<1x1xf32>
    %802 = arith.addf %778, %801 : vector<1x1xf32>
    %803 = arith.addf %798, %280 : vector<1x5xf32>
    %cst_225 = arith.constant dense<0xFF800000> : vector<1xf32>
    %804 = vector.multi_reduction <maximumf>, %803, %cst_225 [1] : vector<1x5xf32> to vector<1xf32>
    %805 = vector.shape_cast %804 : vector<1xf32> to vector<1x1xf32>
    %806 = vector.broadcast %805 : vector<1x1xf32> to vector<1x5xf32>
    %807 = arith.subf %803, %806 : vector<1x5xf32>
    %808 = math.exp %807 : vector<1x5xf32>
    %cst_226 = arith.constant dense<0.000000e+00> : vector<1xf32>
    %809 = vector.multi_reduction <add>, %808, %cst_226 [1] : vector<1x5xf32> to vector<1xf32>
    %810 = vector.shape_cast %809 : vector<1xf32> to vector<1x1xf32>
    %811 = math.log %810 : vector<1x1xf32>
    %812 = arith.addf %811, %805 : vector<1x1xf32>
    %813 = arith.subf %802, %812 : vector<1x1xf32>
    %814 = arith.addf %549, %813 : vector<1x1xf32>
    %cst_227 = arith.constant 2.000000e+00 : f32
    %815 = vector.broadcast %cst_227 : f32 to vector<1x1xf32>
    %816 = arith.divf %814, %815 : vector<1x1xf32>
    %cst_228 = arith.constant 0.000000e+00 : f32
    %817 = vector.broadcast %cst_228 : f32 to vector<1x1xf32>
    %818 = arith.subf %817, %816 : vector<1x1xf32>
    %c0_229 = arith.constant 0 : index
    %c0_230 = arith.constant 0 : index
    %819 = vector.load %arg35[%c0_229, %c0_230] : memref<1x1xf32, #tpu.memory_space<vmem>>, vector<1x1xf32>
    tpu.vector_store %arg35[%c0_229, %c0_230], %818 {strides = array<i32>} : memref<1x1xf32, #tpu.memory_space<vmem>>, vector<1x1xf32>,
    return
  }
}

</mosaic_0001>

<llo_original>
// kernel: _nll_fn.1
$region0: #{_nll_fn.1}
  #allocation0 [shape = 'u32[]', space=smem, size = 0x4, offset = 0x4, fixed_abs, tag = 'smem constant byte address 0x4 - core index']
  #allocation1 [shape = 'u32[144,128]{1,0:T(1,128)}', space=vmem, size = 0x12000, scoped, tag = 'internal scratch']
  %s0 = inlined_call_operand.smem [shape: u32[36], index: -1, kind: input, shape index: {}]
  %s1 = sld [smem:[%s0]]
  %s2 = scalar_lea.smem %s0, 1
  %s3 = sld [smem:[%s2]]
  %s4 = scalar_lea.smem %s0, 2
  %s5 = sld [smem:[%s4]]
  %s6 = scalar_lea.smem %s0, 3
  %s7 = sld [smem:[%s6]]
  %s8 = scalar_lea.smem %s0, 4
  %s9 = sld [smem:[%s8]]
  %s10 = scalar_lea.smem %s0, 5
  %s11 = sld [smem:[%s10]]
  %s12 = scalar_lea.smem %s0, 6
  %s13 = sld [smem:[%s12]]
  %s14 = scalar_lea.smem %s0, 7
  %s15 = sld [smem:[%s14]]
  %s16 = scalar_lea.smem %s0, 8
  %s17 = sld [smem:[%s16]]
  %s18 = scalar_lea.smem %s0, 9
  %s19 = sld [smem:[%s18]]
  %s20 = scalar_lea.smem %s0, 10
  %s21 = sld [smem:[%s20]]
  %s22 = scalar_lea.smem %s0, 11
  %s23 = sld [smem:[%s22]]
  %s24 = scalar_lea.smem %s0, 12
  %s25 = sld [smem:[%s24]]
  %s26 = scalar_lea.smem %s0, 13
  %s27 = sld [smem:[%s26]]
  %s28 = scalar_lea.smem %s0, 14
  %s29 = sld [smem:[%s28]]
  %s30 = scalar_lea.smem %s0, 15
  %s31 = sld [smem:[%s30]]
  %s32 = scalar_lea.smem %s0, 16
  %s33 = sld [smem:[%s32]]
  %s34 = scalar_lea.smem %s0, 17
  %s35 = sld [smem:[%s34]]
  %s36 = scalar_lea.smem %s0, 18
  %s37 = sld [smem:[%s36]]
  %s38 = scalar_lea.smem %s0, 19
  %s39 = sld [smem:[%s38]]
  %s40 = scalar_lea.smem %s0, 20
  %s41 = sld [smem:[%s40]]
  %s42 = scalar_lea.smem %s0, 21
  %s43 = sld [smem:[%s42]]
  %s44 = scalar_lea.smem %s0, 22
  %s45 = sld [smem:[%s44]]
  %s46 = scalar_lea.smem %s0, 23
  %s47 = sld [smem:[%s46]]
  %s48 = scalar_lea.smem %s0, 24
  %s49 = sld [smem:[%s48]]
  %s50 = scalar_lea.smem %s0, 25
  %s51 = sld [smem:[%s50]]
  %s52 = scalar_lea.smem %s0, 26
  %s53 = sld [smem:[%s52]]
  %s54 = scalar_lea.smem %s0, 27
  %s55 = sld [smem:[%s54]]
  %s56 = scalar_lea.smem %s0, 28
  %s57 = sld [smem:[%s56]]
  %s58 = scalar_lea.smem %s0, 29
  %s59 = sld [smem:[%s58]]
  %s60 = scalar_lea.smem %s0, 30
  %s61 = sld [smem:[%s60]]
  %s62 = scalar_lea.smem %s0, 31
  %s63 = sld [smem:[%s62]]
  %s64 = scalar_lea.smem %s0, 32
  %s65 = sld [smem:[%s64]]
  %s66 = scalar_lea.smem %s0, 33
  %s67 = sld [smem:[%s66]]
  %s68 = scalar_lea.smem %s0, 34
  %s69 = sld [smem:[%s68]]
  %s70 = scalar_lea.smem %s0, 35
  %s71 = sld [smem:[%s70]]
  %s72 = sld [smem:[#allocation0]]
  $region150: #{_nll_fn.1} parent=0
    _
  %s74 = ssub.s32 1, %s72
  %s75 = scalar_select 0, %s74, %s72
  $region1: #{_nll_fn.1} parent=0
    #allocation2 [shape = 'u8[512]{0}', space=vmem, size = 0x400, scoped, tag = 'output window, operand 0, single buffered']
    #allocation3 [shape = 's32[1]{0}', space=sflag, size = 0x4, scoped, tag = 'scoped memory for _nll_fn.1']
    %76 = vsyncpa [#allocation3], 0
    // Predicated region
    $region2: #{_nll_fn.1} parent=1 // pred_check
      _
    $region3: #{_nll_fn.1} parent=1 // pred_check_branch
      %78 = sbr.rel (0) target = $region5
    $region4: #{_nll_fn.1} parent=1 // pred_region
      _
    $region5: #{_nll_fn.1} parent=1 // pred_fallthru
      _
    // Predicated region
    $region6: #{_nll_fn.1} parent=1 // pred_check
      _
    $region7: #{_nll_fn.1} parent=1 // pred_check_branch
      %80 = sbr.rel (0) target = $region9
    $region8: #{_nll_fn.1} parent=1 // pred_region
      _
    $region9: #{_nll_fn.1} parent=1 // pred_fallthru
      _
    // Predicated region
    $region10: #{_nll_fn.1} parent=1 // pred_check
      _
    $region11: #{_nll_fn.1} parent=1 // pred_check_branch
      %82 = sbr.rel (0) target = $region13
    $region12: #{_nll_fn.1} parent=1 // pred_region
      _
    $region13: #{_nll_fn.1} parent=1 // pred_fallthru
      _
    // Predicated region
    $region14: #{_nll_fn.1} parent=1 // pred_check
      _
    $region15: #{_nll_fn.1} parent=1 // pred_check_branch
      %84 = sbr.rel (0) target = $region17
    $region16: #{_nll_fn.1} parent=1 // pred_region
      _
    $region17: #{_nll_fn.1} parent=1 // pred_fallthru
      _
    // Predicated region
    $region18: #{_nll_fn.1} parent=1 // pred_check
      _
    $region19: #{_nll_fn.1} parent=1 // pred_check_branch
      %86 = sbr.rel (0) target = $region21
    $region20: #{_nll_fn.1} parent=1 // pred_region
      _
    $region21: #{_nll_fn.1} parent=1 // pred_fallthru
      _
    // Predicated region
    $region22: #{_nll_fn.1} parent=1 // pred_check
      _
    $region23: #{_nll_fn.1} parent=1 // pred_check_branch
      %88 = sbr.rel (0) target = $region25
    $region24: #{_nll_fn.1} parent=1 // pred_region
      _
    $region25: #{_nll_fn.1} parent=1 // pred_fallthru
      _
    // Predicated region
    $region26: #{_nll_fn.1} parent=1 // pred_check
      _
    $region27: #{_nll_fn.1} parent=1 // pred_check_branch
      %90 = sbr.rel (0) target = $region29
    $region28: #{_nll_fn.1} parent=1 // pred_region
      _
    $region29: #{_nll_fn.1} parent=1 // pred_fallthru
      _
    // Predicated region
    $region30: #{_nll_fn.1} parent=1 // pred_check
      _
    $region31: #{_nll_fn.1} parent=1 // pred_check_branch
      %92 = sbr.rel (0) target = $region33
    $region32: #{_nll_fn.1} parent=1 // pred_region
      _
    $region33: #{_nll_fn.1} parent=1 // pred_fallthru
      _
    // Predicated region
    $region34: #{_nll_fn.1} parent=1 // pred_check
      _
    $region35: #{_nll_fn.1} parent=1 // pred_check_branch
      %94 = sbr.rel (0) target = $region37
    $region36: #{_nll_fn.1} parent=1 // pred_region
      _
    $region37: #{_nll_fn.1} parent=1 // pred_fallthru
      _
    // Predicated region
    $region38: #{_nll_fn.1} parent=1 // pred_check
      _
    $region39: #{_nll_fn.1} parent=1 // pred_check_branch
      %96 = sbr.rel (0) target = $region41
    $region40: #{_nll_fn.1} parent=1 // pred_region
      _
    $region41: #{_nll_fn.1} parent=1 // pred_fallthru
      _
    // Predicated region
    $region42: #{_nll_fn.1} parent=1 // pred_check
      _
    $region43: #{_nll_fn.1} parent=1 // pred_check_branch
      %98 = sbr.rel (0) target = $region45
    $region44: #{_nll_fn.1} parent=1 // pred_region
      _
    $region45: #{_nll_fn.1} parent=1 // pred_fallthru
      _
    // Predicated region
    $region46: #{_nll_fn.1} parent=1 // pred_check
      _
    $region47: #{_nll_fn.1} parent=1 // pred_check_branch
      %100 = sbr.rel (0) target = $region49
    $region48: #{_nll_fn.1} parent=1 // pred_region
      _
    $region49: #{_nll_fn.1} parent=1 // pred_fallthru
      _
    // Predicated region
    $region50: #{_nll_fn.1} parent=1 // pred_check
      _
    $region51: #{_nll_fn.1} parent=1 // pred_check_branch
      %102 = sbr.rel (0) target = $region53
    $region52: #{_nll_fn.1} parent=1 // pred_region
      _
    $region53: #{_nll_fn.1} parent=1 // pred_fallthru
      _
    // Predicated region
    $region54: #{_nll_fn.1} parent=1 // pred_check
      _
    $region55: #{_nll_fn.1} parent=1 // pred_check_branch
      %104 = sbr.rel (0) target = $region57
    $region56: #{_nll_fn.1} parent=1 // pred_region
      _
    $region57: #{_nll_fn.1} parent=1 // pred_fallthru
      _
    // Predicated region
    $region58: #{_nll_fn.1} parent=1 // pred_check
      _
    $region59: #{_nll_fn.1} parent=1 // pred_check_branch
      %106 = sbr.rel (0) target = $region61
    $region60: #{_nll_fn.1} parent=1 // pred_region
      _
    $region61: #{_nll_fn.1} parent=1 // pred_fallthru
      _
    // Predicated region
    $region62: #{_nll_fn.1} parent=1 // pred_check
      _
    $region63: #{_nll_fn.1} parent=1 // pred_check_branch
      %108 = sbr.rel (0) target = $region65
    $region64: #{_nll_fn.1} parent=1 // pred_region
      _
    $region65: #{_nll_fn.1} parent=1 // pred_fallthru
      _
    // Predicated region
    $region66: #{_nll_fn.1} parent=1 // pred_check
      _
    $region67: #{_nll_fn.1} parent=1 // pred_check_branch
      %110 = sbr.rel (0) target = $region69
    $region68: #{_nll_fn.1} parent=1 // pred_region
      _
    $region69: #{_nll_fn.1} parent=1 // pred_fallthru
      _
    // Predicated region
    $region70: #{_nll_fn.1} parent=1 // pred_check
      _
    $region71: #{_nll_fn.1} parent=1 // pred_check_branch
      %112 = sbr.rel (0) target = $region73
    $region72: #{_nll_fn.1} parent=1 // pred_region
      _
    $region73: #{_nll_fn.1} parent=1 // pred_fallthru
      _
    // Predicated region
    $region74: #{_nll_fn.1} parent=1 // pred_check
      _
    $region75: #{_nll_fn.1} parent=1 // pred_check_branch
      %114 = sbr.rel (0) target = $region77
    $region76: #{_nll_fn.1} parent=1 // pred_region
      _
    $region77: #{_nll_fn.1} parent=1 // pred_fallthru
      _
    // Predicated region
    $region78: #{_nll_fn.1} parent=1 // pred_check
      _
    $region79: #{_nll_fn.1} parent=1 // pred_check_branch
      %116 = sbr.rel (0) target = $region81
    $region80: #{_nll_fn.1} parent=1 // pred_region
      _
    $region81: #{_nll_fn.1} parent=1 // pred_fallthru
      _
    // Predicated region
    $region82: #{_nll_fn.1} parent=1 // pred_check
      _
    $region83: #{_nll_fn.1} parent=1 // pred_check_branch
      %118 = sbr.rel (0) target = $region85
    $region84: #{_nll_fn.1} parent=1 // pred_region
      _
    $region85: #{_nll_fn.1} parent=1 // pred_fallthru
      _
    // Predicated region
    $region86: #{_nll_fn.1} parent=1 // pred_check
      _
    $region87: #{_nll_fn.1} parent=1 // pred_check_branch
      %120 = sbr.rel (0) target = $region89
    $region88: #{_nll_fn.1} parent=1 // pred_region
      _
    $region89: #{_nll_fn.1} parent=1 // pred_fallthru
      _
    // Predicated region
    $region90: #{_nll_fn.1} parent=1 // pred_check
      _
    $region91: #{_nll_fn.1} parent=1 // pred_check_branch
      %122 = sbr.rel (0) target = $region93
    $region92: #{_nll_fn.1} parent=1 // pred_region
      _
    $region93: #{_nll_fn.1} parent=1 // pred_fallthru
      _
    // Predicated region
    $region94: #{_nll_fn.1} parent=1 // pred_check
      _
    $region95: #{_nll_fn.1} parent=1 // pred_check_branch
      %124 = sbr.rel (0) target = $region97
    $region96: #{_nll_fn.1} parent=1 // pred_region
      _
    $region97: #{_nll_fn.1} parent=1 // pred_fallthru
      _
    // Predicated region
    $region98: #{_nll_fn.1} parent=1 // pred_check
      _
    $region99: #{_nll_fn.1} parent=1 // pred_check_branch
      %126 = sbr.rel (0) target = $region101
    $region100: #{_nll_fn.1} parent=1 // pred_region
      _
    $region101: #{_nll_fn.1} parent=1 // pred_fallthru
      _
    // Predicated region
    $region102: #{_nll_fn.1} parent=1 // pred_check
      _
    $region103: #{_nll_fn.1} parent=1 // pred_check_branch
      %128 = sbr.rel (0) target = $region105
    $region104: #{_nll_fn.1} parent=1 // pred_region
      _
    $region105: #{_nll_fn.1} parent=1 // pred_fallthru
      _
    // Predicated region
    $region106: #{_nll_fn.1} parent=1 // pred_check
      _
    $region107: #{_nll_fn.1} parent=1 // pred_check_branch
      %130 = sbr.rel (0) target = $region109
    $region108: #{_nll_fn.1} parent=1 // pred_region
      _
    $region109: #{_nll_fn.1} parent=1 // pred_fallthru
      _
    // Predicated region
    $region110: #{_nll_fn.1} parent=1 // pred_check
      _
    $region111: #{_nll_fn.1} parent=1 // pred_check_branch
      %132 = sbr.rel (0) target = $region113
    $region112: #{_nll_fn.1} parent=1 // pred_region
      _
    $region113: #{_nll_fn.1} parent=1 // pred_fallthru
      _
    // Predicated region
    $region114: #{_nll_fn.1} parent=1 // pred_check
      _
    $region115: #{_nll_fn.1} parent=1 // pred_check_branch
      %134 = sbr.rel (0) target = $region117
    $region116: #{_nll_fn.1} parent=1 // pred_region
      _
    $region117: #{_nll_fn.1} parent=1 // pred_fallthru
      _
    // Predicated region
    $region118: #{_nll_fn.1} parent=1 // pred_check
      _
    $region119: #{_nll_fn.1} parent=1 // pred_check_branch
      %136 = sbr.rel (0) target = $region121
    $region120: #{_nll_fn.1} parent=1 // pred_region
      _
    $region121: #{_nll_fn.1} parent=1 // pred_fallthru
      _
    // Predicated region
    $region122: #{_nll_fn.1} parent=1 // pred_check
      _
    $region123: #{_nll_fn.1} parent=1 // pred_check_branch
      %138 = sbr.rel (0) target = $region125
    $region124: #{_nll_fn.1} parent=1 // pred_region
      _
    $region125: #{_nll_fn.1} parent=1 // pred_fallthru
      _
    // Predicated region
    $region126: #{_nll_fn.1} parent=1 // pred_check
      _
    $region127: #{_nll_fn.1} parent=1 // pred_check_branch
      %140 = sbr.rel (0) target = $region129
    $region128: #{_nll_fn.1} parent=1 // pred_region
      _
    $region129: #{_nll_fn.1} parent=1 // pred_fallthru
      _
    // Predicated region
    $region130: #{_nll_fn.1} parent=1 // pred_check
      _
    $region131: #{_nll_fn.1} parent=1 // pred_check_branch
      %142 = sbr.rel (0) target = $region133
    $region132: #{_nll_fn.1} parent=1 // pred_region
      _
    $region133: #{_nll_fn.1} parent=1 // pred_fallthru
      _
    // Predicated region
    $region134: #{_nll_fn.1} parent=1 // pred_check
      _
    $region135: #{_nll_fn.1} parent=1 // pred_check_branch
      %144 = sbr.rel (0) target = $region137
    $region136: #{_nll_fn.1} parent=1 // pred_region
      _
    $region137: #{_nll_fn.1} parent=1 // pred_fallthru
      _
    // Predicated region
    $region138: #{_nll_fn.1} parent=1 // pred_check
      _
    $region139: #{_nll_fn.1} parent=1 // pred_check_branch
      %146 = sbr.rel (0) target = $region141
    $region140: #{_nll_fn.1} parent=1 // pred_region
      _
    $region141: #{_nll_fn.1} parent=1 // pred_fallthru
      _
    %v147 = vld [vmem:[%s1] sm:$0xff]
    %v148 = vld [vmem:[%s1 + $0x8] sm:$0xff]
    %v149 = vld [vmem:[%s5] sm:$0xff]
    %v150 = vld [vmem:[%s5 + $0x8] sm:$0xff]
    %v151 = vld [vmem:[%s9] sm:$0x1]
    %v152 = vld [vmem:[%s11] sm:$0x1]
    %vm153 = vcmask 261120
    %v154 = vsel %vm153, %v147, 0.0
    %155 = vadd.xlane.f32.xlu0 %v154
    %v156 = vpop.xlane.xlu0 %155
    %v157 = vsel %vm153, %v148, 0.0
    %158 = vadd.xlane.f32.xlu0 %v157
    %v159 = vpop.xlane.xlu0 %158
    %v160 = vrcp.pop 32.0
    %v161 = vmul.f32 %v156, %v160
    %v162 = vmul.f32 %v159, %v160
    %v163 = vsub.f32 %v147, %v161
    %v164 = vsub.f32 %v148, %v162
    %v165 = vmul.f32 %v163, %v163
    %v166 = vmul.f32 %v164, %v164
    %v167 = vsel %vm153, %v165, 0.0
    %168 = vadd.xlane.f32.xlu0 %v167
    %v169 = vpop.xlane.xlu0 %168
    %v170 = vsel %vm153, %v166, 0.0
    %171 = vadd.xlane.f32.xlu0 %v170
    %v172 = vpop.xlane.xlu0 %171
    %v173 = vmul.f32 %v169, %v160
    %v174 = vmul.f32 %v172, %v160
    %v175 = vadd.f32 %v173, 1e-12
    %v176 = vadd.f32 %v174, 1e-12
    %v177 = vrsqrt.pop %v175
    %v178 = vrsqrt.pop %v176
    %v179 = vmul.f32 %v163, %v177
    %v180 = vmul.f32 %v164, %v178
    %v182 = vlaneseq
    %v183 = vshrl.u32 %v182, 7
    %v184 = vsub.s32 0, %v183
    %v185 = vrot.slane %v151, %v184
    %v187 = vmul.f32 %v179, %v185
    %v188 = vmul.f32 %v180, %v185
    %v190 = vlaneseq
    %v191 = vshrl.u32 %v190, 7
    %v192 = vsub.s32 0, %v191
    %v193 = vrot.slane %v152, %v192
    %v195 = vadd.f32 %v187, %v193
    %v196 = vadd.f32 %v188, %v193
    %v197 = vld [vmem:[%s13] sm:$0xff]
    %v198 = vld [vmem:[%s13 + $0x8] sm:$0xff]
    %v199 = vld [vmem:[%s13 + $0x10] sm:$0xff]
    %v200 = vld [vmem:[%s13 + $0x18] sm:$0xff]
    %v201 = vld [vmem:[%s15] sm:$0x1]
    %v202 = vld [vmem:[%s17] sm:$0xff]
    %v203 = vld [vmem:[%s17 + $0x8] sm:$0xff]
    %v204 = vld [vmem:[%s17 + $0x10] sm:$0xff]
    %v205 = vld [vmem:[%s17 + $0x18] sm:$0xff]
    %v206 = vld [vmem:[%s19] sm:$0x1]
    %v207 = vld [vmem:[%s21] sm:$0x1]
    %v208 = vld [vmem:[%s23] sm:$0x1]
    %v209 = vld [vmem:[%s25] sm:$0xff]
    %v210 = vld [vmem:[%s25 + $0x8] sm:$0xff]
    %v211 = vld [vmem:[%s25 + $0x10] sm:$0xff]
    %v212 = vld [vmem:[%s25 + $0x18] sm:$0xff]
    %v213 = vld [vmem:[%s27] sm:$0x1]
    %v214 = vld [vmem:[%s29] sm:$0xff]
    %v215 = vld [vmem:[%s29 + $0x8] sm:$0xff]
    %v216 = vld [vmem:[%s29 + $0x10] sm:$0xff]
    %v217 = vld [vmem:[%s29 + $0x18] sm:$0xff]
    %v218 = vld [vmem:[%s29 + $0x20] sm:$0xff]
    %v219 = vld [vmem:[%s29 + $0x28] sm:$0xff]
    %v220 = vld [vmem:[%s29 + $0x30] sm:$0xff]
    %v221 = vld [vmem:[%s29 + $0x38] sm:$0xff]
    %v222 = vld [vmem:[%s29 + $0x40] sm:$0xff]
    %v223 = vld [vmem:[%s29 + $0x48] sm:$0xff]
    %v224 = vld [vmem:[%s29 + $0x50] sm:$0xff]
    %v225 = vld [vmem:[%s29 + $0x58] sm:$0xff]
    %v226 = vld [vmem:[%s29 + $0x60] sm:$0xff]
    %v227 = vld [vmem:[%s29 + $0x68] sm:$0xff]
    %v228 = vld [vmem:[%s29 + $0x70] sm:$0xff]
    %v229 = vld [vmem:[%s29 + $0x78] sm:$0xff]
    %v230 = vld [vmem:[%s31] sm:$0x1]
    %v231 = vld [vmem:[%s33] sm:$0x1]
    %v232 = vld [vmem:[%s35] sm:$0x1]
    %v234 = vlaneseq
    %v235 = vshrl.u32 %v234, 7
    %v236 = vsub.s32 0, %v235
    %v237 = vrot.slane %v201, %v236
    %v240 = vsel %vm153, %v195, 0
    %v243 = vsel %vm153, %v196, 0
    %245 = vmatprep.subr.mxu0 0.0
    %246 = vmatpush1.msra.mxu0 %v197
    %247 = vmatprep.subr.mxu0 0.0
    %248 = vmatpush1.msra.mxu0 %v198
    %249 = vmatprep.subr.mxu0 0.0
    %250 = vmatpush1.msra.mxu0 %v199
    %251 = vmatprep.subr.mxu0 0.0
    %252 = vmatpush1.msra.mxu0 %v200
    %253 = vmatprep.subr.mxu0 0.0
    %254 = vmatpush1.msra.mxu0 0.0
    %255 = vmatprep.subr.mxu0 0.0
    %256 = vmatpush1.msra.mxu0 0.0
    %257 = vmatprep.subr.mxu0 0.0
    %258 = vmatpush1.msra.mxu0 0.0
    %259 = vmatprep.subr.mxu0 0.0
    %260 = vmatpush1.msra.mxu0 0.0
    %261 = vmatprep.subr.mxu0 0.0
    %262 = vmatpush1.msra.mxu0 0.0
    %263 = vmatprep.subr.mxu0 0.0
    %264 = vmatpush1.msra.mxu0 0.0
    %265 = vmatprep.subr.mxu0 0.0
    %266 = vmatpush1.msra.mxu0 0.0
    %267 = vmatprep.subr.mxu0 0.0
    %268 = vmatpush1.msra.mxu0 0.0
    %269 = vmatprep.subr.mxu0 0.0
    %270 = vmatpush1.msra.mxu0 0.0
    %271 = vmatprep.subr.mxu0 0.0
    %272 = vmatpush1.msra.mxu0 0.0
    %273 = vmatprep.subr.mxu0 0.0
    %274 = vmatpush1.msra.mxu0 0.0
    %275 = vmatprep.subr.mxu0 0.0
    %276 = vmatpush1.msra.mxu0 0.0
    %277 = vmatprep.subr.mxu0 0.0
    %278 = vmatpush1.msra.mxu0 0.0
    %279 = vmatprep.subr.mxu0 0.0
    %280 = vmatpush1.msra.mxu0 0.0
    %281 = vmatprep.subr.mxu0 0.0
    %282 = vmatpush1.msra.mxu0 0.0
    %283 = vmatprep.subr.mxu0 0.0
    %284 = vmatpush1.msra.mxu0 0.0
    %285 = vmatprep.subr.mxu0 0.0
    %286 = vmatpush1.msra.mxu0 0.0
    %287 = vmatprep.subr.mxu0 0.0
    %288 = vmatpush1.msra.mxu0 0.0
    %289 = vmatprep.subr.mxu0 0.0
    %290 = vmatpush1.msra.mxu0 0.0
    %291 = vmatprep.subr.mxu0 0.0
    %292 = vmatpush1.msra.mxu0 0.0
    %293 = vmatprep.subr.mxu0 0.0
    %294 = vmatpush1.msra.mxu0 0.0
    %295 = vmatprep.subr.mxu0 0.0
    %296 = vmatpush1.msra.mxu0 0.0
    %297 = vmatprep.subr.mxu0 0.0
    %298 = vmatpush1.msra.mxu0 0.0
    %299 = vmatprep.subr.mxu0 0.0
    %300 = vmatpush1.msra.mxu0 0.0
    %301 = vmatprep.subr.mxu0 0.0
    %302 = vmatpush1.msra.mxu0 0.0
    %303 = vmatprep.subr.mxu0 0.0
    %304 = vmatpush1.msra.mxu0 0.0
    %305 = vmatprep.subr.mxu0 0.0
    %306 = vmatpush1.msra.mxu0 0.0
    %307 = vmatprep.subr.mxu0 0.0
    %308 = vmatpush1.msra.mxu0 0.0
    %309 = vmatprep.mubr.f32.mxu0 0.0
    %310 = vmatmul.mubr.f32.gmra.mrb[0].mxu0 %v240
    %v311 = vpop.f32.mrb[0].mxu0
    %v312 = vadd.f32 %v237, %v311
    %v313 = vpop.f32.mrb[0].mxu0
    %314 = vmatprep.mubr.f32.mxu0 0.0
    %315 = vmatmul.mubr.f32.gmra.mrb[0].mxu0 %v243
    %v316 = vpop.f32.mrb[0].mxu0
    %v317 = vadd.f32 %v237, %v316
    %v318 = vpop.f32.mrb[0].mxu0
    %319 = vdwg.mxu0
    %322 = vrot.lane.b32.xlu0 %v312, 96
    %v323 = vpop.permute.xlu0 %322
    %324 = vrot.lane.b32.xlu0 %v317, 96
    %v325 = vpop.permute.xlu0 %324
    %vm326 = vcmask 130048
    %v327 = vsel %vm326, %v312, 0
    %v329 = vsel %vm326, %v317, 0
    %v331 = vsel %vm326, %v323, 0
    %v333 = vsel %vm326, %v325, 0
    %335 = vmatprep.subr.mxu0 0.0
    %336 = vmatpush1.xpose.msra.mxu0 %v331
    %337 = vmatprep.subr.mxu0 0.0
    %338 = vmatpush1.xpose.msra.mxu0 %v333
    %339 = vmatprep.subr.mxu0 0.0
    %340 = vmatpush1.xpose.msra.mxu0 0.0
    %341 = vmatprep.subr.mxu0 0.0
    %342 = vmatpush1.xpose.msra.mxu0 0.0
    %343 = vmatprep.subr.mxu0 0.0
    %344 = vmatpush1.xpose.msra.mxu0 0.0
    %345 = vmatprep.subr.mxu0 0.0
    %346 = vmatpush1.xpose.msra.mxu0 0.0
    %347 = vmatprep.subr.mxu0 0.0
    %348 = vmatpush1.xpose.msra.mxu0 0.0
    %349 = vmatprep.subr.mxu0 0.0
    %350 = vmatpush1.xpose.msra.mxu0 0.0
    %351 = vmatprep.subr.mxu0 0.0
    %352 = vmatpush1.xpose.msra.mxu0 0.0
    %353 = vmatprep.subr.mxu0 0.0
    %354 = vmatpush1.xpose.msra.mxu0 0.0
    %355 = vmatprep.subr.mxu0 0.0
    %356 = vmatpush1.xpose.msra.mxu0 0.0
    %357 = vmatprep.subr.mxu0 0.0
    %358 = vmatpush1.xpose.msra.mxu0 0.0
    %359 = vmatprep.subr.mxu0 0.0
    %360 = vmatpush1.xpose.msra.mxu0 0.0
    %361 = vmatprep.subr.mxu0 0.0
    %362 = vmatpush1.xpose.msra.mxu0 0.0
    %363 = vmatprep.subr.mxu0 0.0
    %364 = vmatpush1.xpose.msra.mxu0 0.0
    %365 = vmatprep.subr.mxu0 0.0
    %366 = vmatpush1.xpose.msra.mxu0 0.0
    %367 = vmatprep.subr.mxu0 0.0
    %368 = vmatpush1.xpose.msra.mxu0 0.0
    %369 = vmatprep.subr.mxu0 0.0
    %370 = vmatpush1.xpose.msra.mxu0 0.0
    %371 = vmatprep.subr.mxu0 0.0
    %372 = vmatpush1.xpose.msra.mxu0 0.0
    %373 = vmatprep.subr.mxu0 0.0
    %374 = vmatpush1.xpose.msra.mxu0 0.0
    %375 = vmatprep.subr.mxu0 0.0
    %376 = vmatpush1.xpose.msra.mxu0 0.0
    %377 = vmatprep.subr.mxu0 0.0
    %378 = vmatpush1.xpose.msra.mxu0 0.0
    %379 = vmatprep.subr.mxu0 0.0
    %380 = vmatpush1.xpose.msra.mxu0 0.0
    %381 = vmatprep.subr.mxu0 0.0
    %382 = vmatpush1.xpose.msra.mxu0 0.0
    %383 = vmatprep.subr.mxu0 0.0
    %384 = vmatpush1.xpose.msra.mxu0 0.0
    %385 = vmatprep.subr.mxu0 0.0
    %386 = vmatpush1.xpose.msra.mxu0 0.0
    %387 = vmatprep.subr.mxu0 0.0
    %388 = vmatpush1.xpose.msra.mxu0 0.0
    %389 = vmatprep.subr.mxu0 0.0
    %390 = vmatpush1.xpose.msra.mxu0 0.0
    %391 = vmatprep.subr.mxu0 0.0
    %392 = vmatpush1.xpose.msra.mxu0 0.0
    %393 = vmatprep.subr.mxu0 0.0
    %394 = vmatpush1.xpose.msra.mxu0 0.0
    %395 = vmatprep.subr.mxu0 0.0
    %396 = vmatpush1.xpose.msra.mxu0 0.0
    %397 = vmatprep.subr.mxu0 0.0
    %398 = vmatpush1.xpose.msra.mxu0 0.0
    %399 = vmatprep.mubr.f32.mxu0 0.0
    %400 = vmatmul.mubr.f32.gmra.mrb[0].mxu0 %v327
    %v401 = vpop.f32.mrb[0].mxu0
    %v402 = vadd.f32 0.0, %v401
    %v403 = vpop.f32.mrb[0].mxu0
    %404 = vmatprep.mubr.f32.mxu0 0.0
    %405 = vmatmul.mubr.f32.gmra.mrb[0].mxu0 %v329
    %v406 = vpop.f32.mrb[0].mxu0
    %v407 = vadd.f32 0.0, %v406
    %v408 = vpop.f32.mrb[0].mxu0
    %409 = vdwg.mxu0
    %v410 = vmul.f32 %v402, 0.25
    %v411 = vmul.f32 %v407, 0.25
    %v412 = vadd.f32 %v410, %v149
    %v413 = vadd.f32 %v411, %v150
    %v414 = vsel %vm326, %v412, -inf
    %415 = vmax.xlane.f32.xlu0 %v414
    %v416 = vpop.xlane.xlu0 %415
    %v417 = vsel %vm326, %v413, -inf
    %418 = vmax.xlane.f32.xlu0 %v417
    %v419 = vpop.xlane.xlu0 %418
    %v420 = vsub.f32 %v412, %v416
    %v421 = vsub.f32 %v413, %v419
    %v422 = vmul.f32 %v420, 1.442695
    %v423 = vpow.pop %v422
    %v424 = vmul.f32 %v421, 1.442695
    %v425 = vpow.pop %v424
    %v426 = vsel %vm326, %v423, 0.0
    %427 = vadd.xlane.f32.xlu0 %v426
    %v428 = vpop.xlane.xlu0 %427
    %v429 = vsel %vm326, %v425, 0.0
    %430 = vadd.xlane.f32.xlu0 %v429
    %v431 = vpop.xlane.xlu0 %430
    %v432 = vrcp.pop %v428
    %v433 = vmul.f32 %v423, %v432
    %v434 = vrcp.pop %v431
    %v435 = vmul.f32 %v425, %v434
    %436 = vrot.lane.b32.xlu0 %v312, 64
    %v437 = vpop.permute.xlu0 %436
    %438 = vrot.lane.b32.xlu0 %v317, 64
    %v439 = vpop.permute.xlu0 %438
    %v443 = vsel %vm326, %v433, 0
    %v446 = vsel %vm326, %v435, 0
    %448 = vmatprep.subr.mxu0 0.0
    %449 = vmatpush1.msra.mxu0 %v437
    %450 = vmatprep.subr.mxu0 0.0
    %451 = vmatpush1.msra.mxu0 %v439
    %452 = vmatprep.subr.mxu0 0.0
    %453 = vmatpush1.msra.mxu0 0.0
    %454 = vmatprep.subr.mxu0 0.0
    %455 = vmatpush1.msra.mxu0 0.0
    %456 = vmatprep.subr.mxu0 0.0
    %457 = vmatpush1.msra.mxu0 0.0
    %458 = vmatprep.subr.mxu0 0.0
    %459 = vmatpush1.msra.mxu0 0.0
    %460 = vmatprep.subr.mxu0 0.0
    %461 = vmatpush1.msra.mxu0 0.0
    %462 = vmatprep.subr.mxu0 0.0
    %463 = vmatpush1.msra.mxu0 0.0
    %464 = vmatprep.subr.mxu0 0.0
    %465 = vmatpush1.msra.mxu0 0.0
    %466 = vmatprep.subr.mxu0 0.0
    %467 = vmatpush1.msra.mxu0 0.0
    %468 = vmatprep.subr.mxu0 0.0
    %469 = vmatpush1.msra.mxu0 0.0
    %470 = vmatprep.subr.mxu0 0.0
    %471 = vmatpush1.msra.mxu0 0.0
    %472 = vmatprep.subr.mxu0 0.0
    %473 = vmatpush1.msra.mxu0 0.0
    %474 = vmatprep.subr.mxu0 0.0
    %475 = vmatpush1.msra.mxu0 0.0
    %476 = vmatprep.subr.mxu0 0.0
    %477 = vmatpush1.msra.mxu0 0.0
    %478 = vmatprep.subr.mxu0 0.0
    %479 = vmatpush1.msra.mxu0 0.0
    %480 = vmatprep.subr.mxu0 0.0
    %481 = vmatpush1.msra.mxu0 0.0
    %482 = vmatprep.subr.mxu0 0.0
    %483 = vmatpush1.msra.mxu0 0.0
    %484 = vmatprep.subr.mxu0 0.0
    %485 = vmatpush1.msra.mxu0 0.0
    %486 = vmatprep.subr.mxu0 0.0
    %487 = vmatpush1.msra.mxu0 0.0
    %488 = vmatprep.subr.mxu0 0.0
    %489 = vmatpush1.msra.mxu0 0.0
    %490 = vmatprep.subr.mxu0 0.0
    %491 = vmatpush1.msra.mxu0 0.0
    %492 = vmatprep.subr.mxu0 0.0
    %493 = vmatpush1.msra.mxu0 0.0
    %494 = vmatprep.subr.mxu0 0.0
    %495 = vmatpush1.msra.mxu0 0.0
    %496 = vmatprep.subr.mxu0 0.0
    %497 = vmatpush1.msra.mxu0 0.0
    %498 = vmatprep.subr.mxu0 0.0
    %499 = vmatpush1.msra.mxu0 0.0
    %500 = vmatprep.subr.mxu0 0.0
    %501 = vmatpush1.msra.mxu0 0.0
    %502 = vmatprep.subr.mxu0 0.0
    %503 = vmatpush1.msra.mxu0 0.0
    %504 = vmatprep.subr.mxu0 0.0
    %505 = vmatpush1.msra.mxu0 0.0
    %506 = vmatprep.subr.mxu0 0.0
    %507 = vmatpush1.msra.mxu0 0.0
    %508 = vmatprep.subr.mxu0 0.0
    %509 = vmatpush1.msra.mxu0 0.0
    %510 = vmatprep.subr.mxu0 0.0
    %511 = vmatpush1.msra.mxu0 0.0
    %512 = vmatprep.mubr.f32.mxu0 0.0
    %513 = vmatmul.mubr.f32.gmra.mrb[0].mxu0 %v443
    %v514 = vpop.f32.mrb[0].mxu0
    %v515 = vadd.f32 0.0, %v514
    %v516 = vpop.f32.mrb[0].mxu0
    %517 = vmatprep.mubr.f32.mxu0 0.0
    %518 = vmatmul.mubr.f32.gmra.mrb[0].mxu0 %v446
    %v519 = vpop.f32.mrb[0].mxu0
    %v520 = vadd.f32 0.0, %v519
    %v521 = vpop.f32.mrb[0].mxu0
    %522 = vdwg.mxu0
    %523 = vrot.lane.b32.xlu0 %v312, 112
    %v524 = vpop.permute.xlu0 %523
    %525 = vrot.lane.b32.xlu0 %v317, 112
    %v526 = vpop.permute.xlu0 %525
    %527 = vrot.lane.b32.xlu0 %v312, 80
    %v528 = vpop.permute.xlu0 %527
    %529 = vrot.lane.b32.xlu0 %v317, 80
    %v530 = vpop.permute.xlu0 %529
    %v531 = vsel %vm326, %v524, 0
    %v533 = vsel %vm326, %v526, 0
    %v535 = vsel %vm326, %v528, 0
    %v537 = vsel %vm326, %v530, 0
    %539 = vmatprep.subr.mxu0 0.0
    %540 = vmatpush1.xpose.msra.mxu0 %v535
    %541 = vmatprep.subr.mxu0 0.0
    %542 = vmatpush1.xpose.msra.mxu0 %v537
    %543 = vmatprep.subr.mxu0 0.0
    %544 = vmatpush1.xpose.msra.mxu0 0.0
    %545 = vmatprep.subr.mxu0 0.0
    %546 = vmatpush1.xpose.msra.mxu0 0.0
    %547 = vmatprep.subr.mxu0 0.0
    %548 = vmatpush1.xpose.msra.mxu0 0.0
    %549 = vmatprep.subr.mxu0 0.0
    %550 = vmatpush1.xpose.msra.mxu0 0.0
    %551 = vmatprep.subr.mxu0 0.0
    %552 = vmatpush1.xpose.msra.mxu0 0.0
    %553 = vmatprep.subr.mxu0 0.0
    %554 = vmatpush1.xpose.msra.mxu0 0.0
    %555 = vmatprep.subr.mxu0 0.0
    %556 = vmatpush1.xpose.msra.mxu0 0.0
    %557 = vmatprep.subr.mxu0 0.0
    %558 = vmatpush1.xpose.msra.mxu0 0.0
    %559 = vmatprep.subr.mxu0 0.0
    %560 = vmatpush1.xpose.msra.mxu0 0.0
    %561 = vmatprep.subr.mxu0 0.0
    %562 = vmatpush1.xpose.msra.mxu0 0.0
    %563 = vmatprep.subr.mxu0 0.0
    %564 = vmatpush1.xpose.msra.mxu0 0.0
    %565 = vmatprep.subr.mxu0 0.0
    %566 = vmatpush1.xpose.msra.mxu0 0.0
    %567 = vmatprep.subr.mxu0 0.0
    %568 = vmatpush1.xpose.msra.mxu0 0.0
    %569 = vmatprep.subr.mxu0 0.0
    %570 = vmatpush1.xpose.msra.mxu0 0.0
    %571 = vmatprep.subr.mxu0 0.0
    %572 = vmatpush1.xpose.msra.mxu0 0.0
    %573 = vmatprep.subr.mxu0 0.0
    %574 = vmatpush1.xpose.msra.mxu0 0.0
    %575 = vmatprep.subr.mxu0 0.0
    %576 = vmatpush1.xpose.msra.mxu0 0.0
    %577 = vmatprep.subr.mxu0 0.0
    %578 = vmatpush1.xpose.msra.mxu0 0.0
    %579 = vmatprep.subr.mxu0 0.0
    %580 = vmatpush1.xpose.msra.mxu0 0.0
    %581 = vmatprep.subr.mxu0 0.0
    %582 = vmatpush1.xpose.msra.mxu0 0.0
    %583 = vmatprep.subr.mxu0 0.0
    %584 = vmatpush1.xpose.msra.mxu0 0.0
    %585 = vmatprep.subr.mxu0 0.0
    %586 = vmatpush1.xpose.msra.mxu0 0.0
    %587 = vmatprep.subr.mxu0 0.0
    %588 = vmatpush1.xpose.msra.mxu0 0.0
    %589 = vmatprep.subr.mxu0 0.0
    %590 = vmatpush1.xpose.msra.mxu0 0.0
    %591 = vmatprep.subr.mxu0 0.0
    %592 = vmatpush1.xpose.msra.mxu0 0.0
    %593 = vmatprep.subr.mxu0 0.0
    %594 = vmatpush1.xpose.msra.mxu0 0.0
    %595 = vmatprep.subr.mxu0 0.0
    %596 = vmatpush1.xpose.msra.mxu0 0.0
    %597 = vmatprep.subr.mxu0 0.0
    %598 = vmatpush1.xpose.msra.mxu0 0.0
    %599 = vmatprep.subr.mxu0 0.0
    %600 = vmatpush1.xpose.msra.mxu0 0.0
    %601 = vmatprep.subr.mxu0 0.0
    %602 = vmatpush1.xpose.msra.mxu0 0.0
    %603 = vmatprep.mubr.f32.mxu0 0.0
    %604 = vmatmul.mubr.f32.gmra.mrb[0].mxu0 %v531
    %v605 = vpop.f32.mrb[0].mxu0
    %v606 = vadd.f32 0.0, %v605
    %v607 = vpop.f32.mrb[0].mxu0
    %608 = vmatprep.mubr.f32.mxu0 0.0
    %609 = vmatmul.mubr.f32.gmra.mrb[0].mxu0 %v533
    %v610 = vpop.f32.mrb[0].mxu0
    %v611 = vadd.f32 0.0, %v610
    %v612 = vpop.f32.mrb[0].mxu0
    %613 = vdwg.mxu0
    %v614 = vmul.f32 %v606, 0.25
    %v615 = vmul.f32 %v611, 0.25
    %v616 = vadd.f32 %v614, %v149
    %v617 = vadd.f32 %v615, %v150
    %v618 = vsel %vm326, %v616, -inf
    %619 = vmax.xlane.f32.xlu0 %v618
    %v620 = vpop.xlane.xlu0 %619
    %v621 = vsel %vm326, %v617, -inf
    %622 = vmax.xlane.f32.xlu0 %v621
    %v623 = vpop.xlane.xlu0 %622
    %v624 = vsub.f32 %v616, %v620
    %v625 = vsub.f32 %v617, %v623
    %v626 = vmul.f32 %v624, 1.442695
    %v627 = vpow.pop %v626
    %v628 = vmul.f32 %v625, 1.442695
    %v629 = vpow.pop %v628
    %v630 = vsel %vm326, %v627, 0.0
    %631 = vadd.xlane.f32.xlu0 %v630
    %v632 = vpop.xlane.xlu0 %631
    %v633 = vsel %vm326, %v629, 0.0
    %634 = vadd.xlane.f32.xlu0 %v633
    %v635 = vpop.xlane.xlu0 %634
    %v636 = vrcp.pop %v632
    %v637 = vmul.f32 %v627, %v636
    %v638 = vrcp.pop %v635
    %v639 = vmul.f32 %v629, %v638
    %640 = vrot.lane.b32.xlu0 %v312, 48
    %v641 = vpop.permute.xlu0 %640
    %642 = vrot.lane.b32.xlu0 %v317, 48
    %v643 = vpop.permute.xlu0 %642
    %v647 = vsel %vm326, %v637, 0
    %v650 = vsel %vm326, %v639, 0
    %652 = vmatprep.subr.mxu0 0.0
    %653 = vmatpush1.msra.mxu0 %v641
    %654 = vmatprep.subr.mxu0 0.0
    %655 = vmatpush1.msra.mxu0 %v643
    %656 = vmatprep.subr.mxu0 0.0
    %657 = vmatpush1.msra.mxu0 0.0
    %658 = vmatprep.subr.mxu0 0.0
    %659 = vmatpush1.msra.mxu0 0.0
    %660 = vmatprep.subr.mxu0 0.0
    %661 = vmatpush1.msra.mxu0 0.0
    %662 = vmatprep.subr.mxu0 0.0
    %663 = vmatpush1.msra.mxu0 0.0
    %664 = vmatprep.subr.mxu0 0.0
    %665 = vmatpush1.msra.mxu0 0.0
    %666 = vmatprep.subr.mxu0 0.0
    %667 = vmatpush1.msra.mxu0 0.0
    %668 = vmatprep.subr.mxu0 0.0
    %669 = vmatpush1.msra.mxu0 0.0
    %670 = vmatprep.subr.mxu0 0.0
    %671 = vmatpush1.msra.mxu0 0.0
    %672 = vmatprep.subr.mxu0 0.0
    %673 = vmatpush1.msra.mxu0 0.0
    %674 = vmatprep.subr.mxu0 0.0
    %675 = vmatpush1.msra.mxu0 0.0
    %676 = vmatprep.subr.mxu0 0.0
    %677 = vmatpush1.msra.mxu0 0.0
    %678 = vmatprep.subr.mxu0 0.0
    %679 = vmatpush1.msra.mxu0 0.0
    %680 = vmatprep.subr.mxu0 0.0
    %681 = vmatpush1.msra.mxu0 0.0
    %682 = vmatprep.subr.mxu0 0.0
    %683 = vmatpush1.msra.mxu0 0.0
    %684 = vmatprep.subr.mxu0 0.0
    %685 = vmatpush1.msra.mxu0 0.0
    %686 = vmatprep.subr.mxu0 0.0
    %687 = vmatpush1.msra.mxu0 0.0
    %688 = vmatprep.subr.mxu0 0.0
    %689 = vmatpush1.msra.mxu0 0.0
    %690 = vmatprep.subr.mxu0 0.0
    %691 = vmatpush1.msra.mxu0 0.0
    %692 = vmatprep.subr.mxu0 0.0
    %693 = vmatpush1.msra.mxu0 0.0
    %694 = vmatprep.subr.mxu0 0.0
    %695 = vmatpush1.msra.mxu0 0.0
    %696 = vmatprep.subr.mxu0 0.0
    %697 = vmatpush1.msra.mxu0 0.0
    %698 = vmatprep.subr.mxu0 0.0
    %699 = vmatpush1.msra.mxu0 0.0
    %700 = vmatprep.subr.mxu0 0.0
    %701 = vmatpush1.msra.mxu0 0.0
    %702 = vmatprep.subr.mxu0 0.0
    %703 = vmatpush1.msra.mxu0 0.0
    %704 = vmatprep.subr.mxu0 0.0
    %705 = vmatpush1.msra.mxu0 0.0
    %706 = vmatprep.subr.mxu0 0.0
    %707 = vmatpush1.msra.mxu0 0.0
    %708 = vmatprep.subr.mxu0 0.0
    %709 = vmatpush1.msra.mxu0 0.0
    %710 = vmatprep.subr.mxu0 0.0
    %711 = vmatpush1.msra.mxu0 0.0
    %712 = vmatprep.subr.mxu0 0.0
    %713 = vmatpush1.msra.mxu0 0.0
    %714 = vmatprep.subr.mxu0 0.0
    %715 = vmatpush1.msra.mxu0 0.0
    %716 = vmatprep.mubr.f32.mxu0 0.0
    %717 = vmatmul.mubr.f32.gmra.mrb[0].mxu0 %v647
    %v718 = vpop.f32.mrb[0].mxu0
    %v719 = vadd.f32 0.0, %v718
    %v720 = vpop.f32.mrb[0].mxu0
    %721 = vmatprep.mubr.f32.mxu0 0.0
    %722 = vmatmul.mubr.f32.gmra.mrb[0].mxu0 %v650
    %v723 = vpop.f32.mrb[0].mxu0
    %v724 = vadd.f32 0.0, %v723
    %v725 = vpop.f32.mrb[0].mxu0
    %726 = vdwg.mxu0
    %v728 = vsel %vm326, %v719, 0
    %v731 = vsel %vm326, %v724, 0
    %733 = vmatprep.subr.mxu0 0.0
    %734 = vmatpush1.msra.mxu0 %v204
    %735 = vmatprep.subr.mxu0 0.0
    %736 = vmatpush1.msra.mxu0 %v205
    %737 = vmatprep.subr.mxu0 0.0
    %738 = vmatpush1.msra.mxu0 0.0
    %739 = vmatprep.subr.mxu0 0.0
    %740 = vmatpush1.msra.mxu0 0.0
    %741 = vmatprep.subr.mxu0 0.0
    %742 = vmatpush1.msra.mxu0 0.0
    %743 = vmatprep.subr.mxu0 0.0
    %744 = vmatpush1.msra.mxu0 0.0
    %745 = vmatprep.subr.mxu0 0.0
    %746 = vmatpush1.msra.mxu0 0.0
    %747 = vmatprep.subr.mxu0 0.0
    %748 = vmatpush1.msra.mxu0 0.0
    %749 = vmatprep.subr.mxu0 0.0
    %750 = vmatpush1.msra.mxu0 0.0
    %751 = vmatprep.subr.mxu0 0.0
    %752 = vmatpush1.msra.mxu0 0.0
    %753 = vmatprep.subr.mxu0 0.0
    %754 = vmatpush1.msra.mxu0 0.0
    %755 = vmatprep.subr.mxu0 0.0
    %756 = vmatpush1.msra.mxu0 0.0
    %757 = vmatprep.subr.mxu0 0.0
    %758 = vmatpush1.msra.mxu0 0.0
    %759 = vmatprep.subr.mxu0 0.0
    %760 = vmatpush1.msra.mxu0 0.0
    %761 = vmatprep.subr.mxu0 0.0
    %762 = vmatpush1.msra.mxu0 0.0
    %763 = vmatprep.subr.mxu0 0.0
    %764 = vmatpush1.msra.mxu0 0.0
    %765 = vmatprep.subr.mxu0 0.0
    %766 = vmatpush1.msra.mxu0 0.0
    %767 = vmatprep.subr.mxu0 0.0
    %768 = vmatpush1.msra.mxu0 0.0
    %769 = vmatprep.subr.mxu0 0.0
    %770 = vmatpush1.msra.mxu0 0.0
    %771 = vmatprep.subr.mxu0 0.0
    %772 = vmatpush1.msra.mxu0 0.0
    %773 = vmatprep.subr.mxu0 0.0
    %774 = vmatpush1.msra.mxu0 0.0
    %775 = vmatprep.subr.mxu0 0.0
    %776 = vmatpush1.msra.mxu0 0.0
    %777 = vmatprep.subr.mxu0 0.0
    %778 = vmatpush1.msra.mxu0 0.0
    %779 = vmatprep.subr.mxu0 0.0
    %780 = vmatpush1.msra.mxu0 0.0
    %781 = vmatprep.subr.mxu0 0.0
    %782 = vmatpush1.msra.mxu0 0.0
    %783 = vmatprep.subr.mxu0 0.0
    %784 = vmatpush1.msra.mxu0 0.0
    %785 = vmatprep.subr.mxu0 0.0
    %786 = vmatpush1.msra.mxu0 0.0
    %787 = vmatprep.subr.mxu0 0.0
    %788 = vmatpush1.msra.mxu0 0.0
    %789 = vmatprep.subr.mxu0 0.0
    %790 = vmatpush1.msra.mxu0 0.0
    %791 = vmatprep.subr.mxu0 0.0
    %792 = vmatpush1.msra.mxu0 0.0
    %793 = vmatprep.subr.mxu0 0.0
    %794 = vmatpush1.msra.mxu0 0.0
    %795 = vmatprep.subr.mxu0 0.0
    %796 = vmatpush1.msra.mxu0 0.0
    %797 = vmatprep.mubr.f32.mxu0 0.0
    %798 = vmatmul.mubr.f32.gmra.mrb[0].mxu0 %v728
    %v799 = vpop.f32.mrb[0].mxu0
    %v800 = vadd.f32 0.0, %v799
    %v801 = vpop.f32.mrb[0].mxu0
    %802 = vmatprep.mubr.f32.mxu0 0.0
    %803 = vmatmul.mubr.f32.gmra.mrb[0].mxu0 %v731
    %v804 = vpop.f32.mrb[0].mxu0
    %v805 = vadd.f32 0.0, %v804
    %v806 = vpop.f32.mrb[0].mxu0
    %807 = vdwg.mxu0
    %v809 = vsel %vm326, %v515, 0
    %v812 = vsel %vm326, %v520, 0
    %814 = vmatprep.subr.mxu0 0.0
    %815 = vmatpush1.msra.mxu0 %v202
    %816 = vmatprep.subr.mxu0 0.0
    %817 = vmatpush1.msra.mxu0 %v203
    %818 = vmatprep.subr.mxu0 0.0
    %819 = vmatpush1.msra.mxu0 0.0
    %820 = vmatprep.subr.mxu0 0.0
    %821 = vmatpush1.msra.mxu0 0.0
    %822 = vmatprep.subr.mxu0 0.0
    %823 = vmatpush1.msra.mxu0 0.0
    %824 = vmatprep.subr.mxu0 0.0
    %825 = vmatpush1.msra.mxu0 0.0
    %826 = vmatprep.subr.mxu0 0.0
    %827 = vmatpush1.msra.mxu0 0.0
    %828 = vmatprep.subr.mxu0 0.0
    %829 = vmatpush1.msra.mxu0 0.0
    %830 = vmatprep.subr.mxu0 0.0
    %831 = vmatpush1.msra.mxu0 0.0
    %832 = vmatprep.subr.mxu0 0.0
    %833 = vmatpush1.msra.mxu0 0.0
    %834 = vmatprep.subr.mxu0 0.0
    %835 = vmatpush1.msra.mxu0 0.0
    %836 = vmatprep.subr.mxu0 0.0
    %837 = vmatpush1.msra.mxu0 0.0
    %838 = vmatprep.subr.mxu0 0.0
    %839 = vmatpush1.msra.mxu0 0.0
    %840 = vmatprep.subr.mxu0 0.0
    %841 = vmatpush1.msra.mxu0 0.0
    %842 = vmatprep.subr.mxu0 0.0
    %843 = vmatpush1.msra.mxu0 0.0
    %844 = vmatprep.subr.mxu0 0.0
    %845 = vmatpush1.msra.mxu0 0.0
    %846 = vmatprep.subr.mxu0 0.0
    %847 = vmatpush1.msra.mxu0 0.0
    %848 = vmatprep.subr.mxu0 0.0
    %849 = vmatpush1.msra.mxu0 0.0
    %850 = vmatprep.subr.mxu0 0.0
    %851 = vmatpush1.msra.mxu0 0.0
    %852 = vmatprep.subr.mxu0 0.0
    %853 = vmatpush1.msra.mxu0 0.0
    %854 = vmatprep.subr.mxu0 0.0
    %855 = vmatpush1.msra.mxu0 0.0
    %856 = vmatprep.subr.mxu0 0.0
    %857 = vmatpush1.msra.mxu0 0.0
    %858 = vmatprep.subr.mxu0 0.0
    %859 = vmatpush1.msra.mxu0 0.0
    %860 = vmatprep.subr.mxu0 0.0
    %861 = vmatpush1.msra.mxu0 0.0
    %862 = vmatprep.subr.mxu0 0.0
    %863 = vmatpush1.msra.mxu0 0.0
    %864 = vmatprep.subr.mxu0 0.0
    %865 = vmatpush1.msra.mxu0 0.0
    %866 = vmatprep.subr.mxu0 0.0
    %867 = vmatpush1.msra.mxu0 0.0
    %868 = vmatprep.subr.mxu0 0.0
    %869 = vmatpush1.msra.mxu0 0.0
    %870 = vmatprep.subr.mxu0 0.0
    %871 = vmatpush1.msra.mxu0 0.0
    %872 = vmatprep.subr.mxu0 0.0
    %873 = vmatpush1.msra.mxu0 0.0
    %874 = vmatprep.subr.mxu0 0.0
    %875 = vmatpush1.msra.mxu0 0.0
    %876 = vmatprep.subr.mxu0 0.0
    %877 = vmatpush1.msra.mxu0 0.0
    %878 = vmatprep.mubr.f32.mxu0 0.0
    %879 = vmatmul.mubr.f32.gmra.mrb[0].mxu0 %v809
    %v880 = vpop.f32.mrb[0].mxu0
    %v881 = vadd.f32 %v800, %v880
    %v882 = vpop.f32.mrb[0].mxu0
    %883 = vmatprep.mubr.f32.mxu0 0.0
    %884 = vmatmul.mubr.f32.gmra.mrb[0].mxu0 %v812
    %v885 = vpop.f32.mrb[0].mxu0
    %v886 = vadd.f32 %v805, %v885
    %v887 = vpop.f32.mrb[0].mxu0
    %888 = vdwg.mxu0
    %v890 = vlaneseq
    %v891 = vshrl.u32 %v890, 7
    %v892 = vsub.s32 0, %v891
    %v893 = vrot.slane %v206, %v892
    %v895 = vadd.f32 %v881, %v893
    %v896 = vadd.f32 %v886, %v893
    %v897 = vadd.f32 %v195, %v895
    %v898 = vadd.f32 %v196, %v896
    %v899 = vsel %vm153, %v897, 0.0
    %900 = vadd.xlane.f32.xlu0 %v899
    %v901 = vpop.xlane.xlu0 %900
    %v902 = vsel %vm153, %v898, 0.0
    %903 = vadd.xlane.f32.xlu0 %v902
    %v904 = vpop.xlane.xlu0 %903
    %v905 = vmul.f32 %v901, %v160
    %v906 = vmul.f32 %v904, %v160
    %v907 = vsub.f32 %v897, %v905
    %v908 = vsub.f32 %v898, %v906
    %v909 = vmul.f32 %v907, %v907
    %v910 = vmul.f32 %v908, %v908
    %v911 = vsel %vm153, %v909, 0.0
    %912 = vadd.xlane.f32.xlu0 %v911
    %v913 = vpop.xlane.xlu0 %912
    %v914 = vsel %vm153, %v910, 0.0
    %915 = vadd.xlane.f32.xlu0 %v914
    %v916 = vpop.xlane.xlu0 %915
    %v917 = vmul.f32 %v913, %v160
    %v918 = vmul.f32 %v916, %v160
    %v919 = vadd.f32 %v917, 1e-12
    %v920 = vadd.f32 %v918, 1e-12
    %v921 = vrsqrt.pop %v919
    %v922 = vrsqrt.pop %v920
    %v923 = vmul.f32 %v907, %v921
    %v924 = vmul.f32 %v908, %v922
    %v926 = vlaneseq
    %v927 = vshrl.u32 %v926, 7
    %v928 = vsub.s32 0, %v927
    %v929 = vrot.slane %v207, %v928
    %v931 = vmul.f32 %v923, %v929
    %v932 = vmul.f32 %v924, %v929
    %v934 = vlaneseq
    %v935 = vshrl.u32 %v934, 7
    %v936 = vsub.s32 0, %v935
    %v937 = vrot.slane %v208, %v936
    %v939 = vadd.f32 %v931, %v937
    %v940 = vadd.f32 %v932, %v937
    %v942 = vlaneseq
    %v943 = vshrl.u32 %v942, 7
    %v944 = vsub.s32 0, %v943
    %v945 = vrot.slane %v213, %v944
    %v948 = vsel %vm153, %v939, 0
    %v951 = vsel %vm153, %v940, 0
    %953 = vmatprep.subr.mxu0 0.0
    %954 = vmatpush1.msra.mxu0 %v209
    %955 = vmatprep.subr.mxu0 0.0
    %956 = vmatpush1.msra.mxu0 %v210
    %957 = vmatprep.subr.mxu0 0.0
    %958 = vmatpush1.msra.mxu0 %v211
    %959 = vmatprep.subr.mxu0 0.0
    %960 = vmatpush1.msra.mxu0 %v212
    %961 = vmatprep.subr.mxu0 0.0
    %962 = vmatpush1.msra.mxu0 0.0
    %963 = vmatprep.subr.mxu0 0.0
    %964 = vmatpush1.msra.mxu0 0.0
    %965 = vmatprep.subr.mxu0 0.0
    %966 = vmatpush1.msra.mxu0 0.0
    %967 = vmatprep.subr.mxu0 0.0
    %968 = vmatpush1.msra.mxu0 0.0
    %969 = vmatprep.subr.mxu0 0.0
    %970 = vmatpush1.msra.mxu0 0.0
    %971 = vmatprep.subr.mxu0 0.0
    %972 = vmatpush1.msra.mxu0 0.0
    %973 = vmatprep.subr.mxu0 0.0
    %974 = vmatpush1.msra.mxu0 0.0
    %975 = vmatprep.subr.mxu0 0.0
    %976 = vmatpush1.msra.mxu0 0.0
    %977 = vmatprep.subr.mxu0 0.0
    %978 = vmatpush1.msra.mxu0 0.0
    %979 = vmatprep.subr.mxu0 0.0
    %980 = vmatpush1.msra.mxu0 0.0
    %981 = vmatprep.subr.mxu0 0.0
    %982 = vmatpush1.msra.mxu0 0.0
    %983 = vmatprep.subr.mxu0 0.0
    %984 = vmatpush1.msra.mxu0 0.0
    %985 = vmatprep.subr.mxu0 0.0
    %986 = vmatpush1.msra.mxu0 0.0
    %987 = vmatprep.subr.mxu0 0.0
    %988 = vmatpush1.msra.mxu0 0.0
    %989 = vmatprep.subr.mxu0 0.0
    %990 = vmatpush1.msra.mxu0 0.0
    %991 = vmatprep.subr.mxu0 0.0
    %992 = vmatpush1.msra.mxu0 0.0
    %993 = vmatprep.subr.mxu0 0.0
    %994 = vmatpush1.msra.mxu0 0.0
    %995 = vmatprep.subr.mxu0 0.0
    %996 = vmatpush1.msra.mxu0 0.0
    %997 = vmatprep.subr.mxu0 0.0
    %998 = vmatpush1.msra.mxu0 0.0
    %999 = vmatprep.subr.mxu0 0.0
    %1000 = vmatpush1.msra.mxu0 0.0
    %1001 = vmatprep.subr.mxu0 0.0
    %1002 = vmatpush1.msra.mxu0 0.0
    %1003 = vmatprep.subr.mxu0 0.0
    %1004 = vmatpush1.msra.mxu0 0.0
    %1005 = vmatprep.subr.mxu0 0.0
    %1006 = vmatpush1.msra.mxu0 0.0
    %1007 = vmatprep.subr.mxu0 0.0
    %1008 = vmatpush1.msra.mxu0 0.0
    %1009 = vmatprep.subr.mxu0 0.0
    %1010 = vmatpush1.msra.mxu0 0.0
    %1011 = vmatprep.subr.mxu0 0.0
    %1012 = vmatpush1.msra.mxu0 0.0
    %1013 = vmatprep.subr.mxu0 0.0
    %1014 = vmatpush1.msra.mxu0 0.0
    %1015 = vmatprep.subr.mxu0 0.0
    %1016 = vmatpush1.msra.mxu0 0.0
    %1017 = vmatprep.mubr.f32.mxu0 0.0
    %1018 = vmatmul.mubr.f32.gmra.mrb[0].mxu0 %v948
    %v1019 = vpop.f32.mrb[0].mxu0
    %v1020 = vadd.f32 %v945, %v1019
    %v1021 = vpop.f32.mrb[0].mxu0
    %1022 = vmatprep.mubr.f32.mxu0 0.0
    %1023 = vmatmul.mubr.f32.gmra.mrb[0].mxu0 %v951
    %v1024 = vpop.f32.mrb[0].mxu0
    %v1025 = vadd.f32 %v945, %v1024
    %v1026 = vpop.f32.mrb[0].mxu0
    %1027 = vdwg.mxu0
    %v1028 = vmul.f32 %v1020, %v1020
    %v1029 = vmul.f32 %v1025, %v1025
    %v1030 = vmul.f32 %v1020, %v1028
    %v1031 = vmul.f32 %v1025, %v1029
    %v1032 = vmul.f32 %v1030, 0.044715
    %v1033 = vmul.f32 %v1031, 0.044715
    %v1034 = vadd.f32 %v1020, %v1032
    %v1035 = vadd.f32 %v1025, %v1033
    %v1036 = vmul.f32 %v1034, 0.7978846
    %v1037 = vmul.f32 %v1035, 0.7978846
    %v1038 = vtanh.pop %v1036
    %v1039 = vtanh.pop %v1037
    %v1040 = vadd.f32 %v1038, 1.0
    %v1041 = vadd.f32 %v1039, 1.0
    %v1042 = vmul.f32 %v1040, 0.5
    %v1043 = vmul.f32 %v1041, 0.5
    %v1044 = vmul.f32 %v1020, %v1042
    %v1045 = vmul.f32 %v1025, %v1043
    %v1047 = vlaneseq
    %v1048 = vshrl.u32 %v1047, 7
    %v1049 = vsub.s32 0, %v1048
    %v1050 = vrot.slane %v230, %v1049
    %1052 = vmatprep.subr.mxu0 0.0
    %1053 = vmatpush1.msra.mxu0 %v214
    %1054 = vmatprep.subr.mxu0 0.0
    %1055 = vmatpush1.msra.mxu0 %v215
    %1056 = vmatprep.subr.mxu0 0.0
    %1057 = vmatpush1.msra.mxu0 %v216
    %1058 = vmatprep.subr.mxu0 0.0
    %1059 = vmatpush1.msra.mxu0 %v217
    %1060 = vmatprep.subr.mxu0 0.0
    %1061 = vmatpush1.msra.mxu0 %v218
    %1062 = vmatprep.subr.mxu0 0.0
    %1063 = vmatpush1.msra.mxu0 %v219
    %1064 = vmatprep.subr.mxu0 0.0
    %1065 = vmatpush1.msra.mxu0 %v220
    %1066 = vmatprep.subr.mxu0 0.0
    %1067 = vmatpush1.msra.mxu0 %v221
    %1068 = vmatprep.subr.mxu0 0.0
    %1069 = vmatpush1.msra.mxu0 %v222
    %1070 = vmatprep.subr.mxu0 0.0
    %1071 = vmatpush1.msra.mxu0 %v223
    %1072 = vmatprep.subr.mxu0 0.0
    %1073 = vmatpush1.msra.mxu0 %v224
    %1074 = vmatprep.subr.mxu0 0.0
    %1075 = vmatpush1.msra.mxu0 %v225
    %1076 = vmatprep.subr.mxu0 0.0
    %1077 = vmatpush1.msra.mxu0 %v226
    %1078 = vmatprep.subr.mxu0 0.0
    %1079 = vmatpush1.msra.mxu0 %v227
    %1080 = vmatprep.subr.mxu0 0.0
    %1081 = vmatpush1.msra.mxu0 %v228
    %1082 = vmatprep.subr.mxu0 0.0
    %1083 = vmatpush1.msra.mxu0 %v229
    %1084 = vmatprep.subr.mxu0 0.0
    %1085 = vmatpush1.msra.mxu0 0.0
    %1086 = vmatprep.subr.mxu0 0.0
    %1087 = vmatpush1.msra.mxu0 0.0
    %1088 = vmatprep.subr.mxu0 0.0
    %1089 = vmatpush1.msra.mxu0 0.0
    %1090 = vmatprep.subr.mxu0 0.0
    %1091 = vmatpush1.msra.mxu0 0.0
    %1092 = vmatprep.subr.mxu0 0.0
    %1093 = vmatpush1.msra.mxu0 0.0
    %1094 = vmatprep.subr.mxu0 0.0
    %1095 = vmatpush1.msra.mxu0 0.0
    %1096 = vmatprep.subr.mxu0 0.0
    %1097 = vmatpush1.msra.mxu0 0.0
    %1098 = vmatprep.subr.mxu0 0.0
    %1099 = vmatpush1.msra.mxu0 0.0
    %1100 = vmatprep.subr.mxu0 0.0
    %1101 = vmatpush1.msra.mxu0 0.0
    %1102 = vmatprep.subr.mxu0 0.0
    %1103 = vmatpush1.msra.mxu0 0.0
    %1104 = vmatprep.subr.mxu0 0.0
    %1105 = vmatpush1.msra.mxu0 0.0
    %1106 = vmatprep.subr.mxu0 0.0
    %1107 = vmatpush1.msra.mxu0 0.0
    %1108 = vmatprep.subr.mxu0 0.0
    %1109 = vmatpush1.msra.mxu0 0.0
    %1110 = vmatprep.subr.mxu0 0.0
    %1111 = vmatpush1.msra.mxu0 0.0
    %1112 = vmatprep.subr.mxu0 0.0
    %1113 = vmatpush1.msra.mxu0 0.0
    %1114 = vmatprep.subr.mxu0 0.0
    %1115 = vmatpush1.msra.mxu0 0.0
    %1116 = vmatprep.mubr.f32.mxu0 0.0
    %1117 = vmatmul.mubr.f32.gmra.mrb[0].mxu0 %v1044
    %v1118 = vpop.f32.mrb[0].mxu0
    %v1119 = vadd.f32 %v1050, %v1118
    %v1120 = vpop.f32.mrb[0].mxu0
    %1121 = vmatprep.mubr.f32.mxu0 0.0
    %1122 = vmatmul.mubr.f32.gmra.mrb[0].mxu0 %v1045
    %v1123 = vpop.f32.mrb[0].mxu0
    %v1124 = vadd.f32 %v1050, %v1123
    %v1125 = vpop.f32.mrb[0].mxu0
    %1126 = vdwg.mxu0
    %v1127 = vadd.f32 %v939, %v1119
    %v1128 = vadd.f32 %v940, %v1124
    %v1129 = vsel %vm153, %v1127, 0.0
    %1130 = vadd.xlane.f32.xlu0 %v1129
    %v1131 = vpop.xlane.xlu0 %1130
    %v1132 = vsel %vm153, %v1128, 0.0
    %1133 = vadd.xlane.f32.xlu0 %v1132
    %v1134 = vpop.xlane.xlu0 %1133
    %v1135 = vmul.f32 %v1131, %v160
    %v1136 = vmul.f32 %v1134, %v160
    %v1137 = vsub.f32 %v1127, %v1135
    %v1138 = vsub.f32 %v1128, %v1136
    %v1139 = vmul.f32 %v1137, %v1137
    %v1140 = vmul.f32 %v1138, %v1138
    %v1141 = vsel %vm153, %v1139, 0.0
    %1142 = vadd.xlane.f32.xlu0 %v1141
    %v1143 = vpop.xlane.xlu0 %1142
    %v1144 = vsel %vm153, %v1140, 0.0
    %1145 = vadd.xlane.f32.xlu0 %v1144
    %v1146 = vpop.xlane.xlu0 %1145
    %v1147 = vmul.f32 %v1143, %v160
    %v1148 = vmul.f32 %v1146, %v160
    %v1149 = vadd.f32 %v1147, 1e-12
    %v1150 = vadd.f32 %v1148, 1e-12
    %v1151 = vrsqrt.pop %v1149
    %v1152 = vrsqrt.pop %v1150
    %v1153 = vmul.f32 %v1137, %v1151
    %v1154 = vmul.f32 %v1138, %v1152
    %v1156 = vlaneseq
    %v1157 = vshrl.u32 %v1156, 7
    %v1158 = vsub.s32 0, %v1157
    %v1159 = vrot.slane %v231, %v1158
    %v1161 = vmul.f32 %v1153, %v1159
    %v1162 = vmul.f32 %v1154, %v1159
    %v1164 = vlaneseq
    %v1165 = vshrl.u32 %v1164, 7
    %v1166 = vsub.s32 0, %v1165
    %v1167 = vrot.slane %v232, %v1166
    %v1169 = vadd.f32 %v1161, %v1167
    %v1170 = vadd.f32 %v1162, %v1167
    %v1171 = vld [vmem:[%s37] sm:$0xff]
    %v1172 = vld [vmem:[%s37 + $0x8] sm:$0xff]
    %v1173 = vld [vmem:[%s37 + $0x10] sm:$0xff]
    %v1174 = vld [vmem:[%s37 + $0x18] sm:$0xff]
    %v1175 = vld [vmem:[%s39] sm:$0x1]
    %v1176 = vld [vmem:[%s41] sm:$0xff]
    %v1177 = vld [vmem:[%s41 + $0x8] sm:$0xff]
    %v1178 = vld [vmem:[%s41 + $0x10] sm:$0xff]
    %v1179 = vld [vmem:[%s41 + $0x18] sm:$0xff]
    %v1180 = vld [vmem:[%s43] sm:$0x1]
    %v1181 = vld [vmem:[%s45] sm:$0x1]
    %v1182 = vld [vmem:[%s47] sm:$0x1]
    %v1183 = vld [vmem:[%s49] sm:$0xff]
    %v1184 = vld [vmem:[%s49 + $0x8] sm:$0xff]
    %v1185 = vld [vmem:[%s49 + $0x10] sm:$0xff]
    %v1186 = vld [vmem:[%s49 + $0x18] sm:$0xff]
    %v1187 = vld [vmem:[%s51] sm:$0x1]
    %v1188 = vld [vmem:[%s53] sm:$0xff]
    %v1189 = vld [vmem:[%s53 + $0x8] sm:$0xff]
    %v1190 = vld [vmem:[%s53 + $0x10] sm:$0xff]
    %v1191 = vld [vmem:[%s53 + $0x18] sm:$0xff]
    %v1192 = vld [vmem:[%s53 + $0x20] sm:$0xff]
    %v1193 = vld [vmem:[%s53 + $0x28] sm:$0xff]
    %v1194 = vld [vmem:[%s53 + $0x30] sm:$0xff]
    %v1195 = vld [vmem:[%s53 + $0x38] sm:$0xff]
    %v1196 = vld [vmem:[%s53 + $0x40] sm:$0xff]
    %v1197 = vld [vmem:[%s53 + $0x48] sm:$0xff]
    %v1198 = vld [vmem:[%s53 + $0x50] sm:$0xff]
    %v1199 = vld [vmem:[%s53 + $0x58] sm:$0xff]
    %v1200 = vld [vmem:[%s53 + $0x60] sm:$0xff]
    %v1201 = vld [vmem:[%s53 + $0x68] sm:$0xff]
    %v1202 = vld [vmem:[%s53 + $0x70] sm:$0xff]
    %v1203 = vld [vmem:[%s53 + $0x78] sm:$0xff]
    %v1204 = vld [vmem:[%s55] sm:$0x1]
    %v1205 = vld [vmem:[%s57] sm:$0x1]
    %v1206 = vld [vmem:[%s59] sm:$0x1]
    %v1208 = vlaneseq
    %v1209 = vshrl.u32 %v1208, 7
    %v1210 = vsub.s32 0, %v1209
    %v1211 = vrot.slane %v1175, %v1210
    %v1214 = vsel %vm153, %v1169, 0
    %v1217 = vsel %vm153, %v1170, 0
    %1219 = vmatprep.subr.mxu0 0.0
    %1220 = vmatpush1.msra.mxu0 %v1171
    %1221 = vmatprep.subr.mxu0 0.0
    %1222 = vmatpush1.msra.mxu0 %v1172
    %1223 = vmatprep.subr.mxu0 0.0
    %1224 = vmatpush1.msra.mxu0 %v1173
    %1225 = vmatprep.subr.mxu0 0.0
    %1226 = vmatpush1.msra.mxu0 %v1174
    %1227 = vmatprep.subr.mxu0 0.0
    %1228 = vmatpush1.msra.mxu0 0.0
    %1229 = vmatprep.subr.mxu0 0.0
    %1230 = vmatpush1.msra.mxu0 0.0
    %1231 = vmatprep.subr.mxu0 0.0
    %1232 = vmatpush1.msra.mxu0 0.0
    %1233 = vmatprep.subr.mxu0 0.0
    %1234 = vmatpush1.msra.mxu0 0.0
    %1235 = vmatprep.subr.mxu0 0.0
    %1236 = vmatpush1.msra.mxu0 0.0
    %1237 = vmatprep.subr.mxu0 0.0
    %1238 = vmatpush1.msra.mxu0 0.0
    %1239 = vmatprep.subr.mxu0 0.0
    %1240 = vmatpush1.msra.mxu0 0.0
    %1241 = vmatprep.subr.mxu0 0.0
    %1242 = vmatpush1.msra.mxu0 0.0
    %1243 = vmatprep.subr.mxu0 0.0
    %1244 = vmatpush1.msra.mxu0 0.0
    %1245 = vmatprep.subr.mxu0 0.0
    %1246 = vmatpush1.msra.mxu0 0.0
    %1247 = vmatprep.subr.mxu0 0.0
    %1248 = vmatpush1.msra.mxu0 0.0
    %1249 = vmatprep.subr.mxu0 0.0
    %1250 = vmatpush1.msra.mxu0 0.0
    %1251 = vmatprep.subr.mxu0 0.0
    %1252 = vmatpush1.msra.mxu0 0.0
    %1253 = vmatprep.subr.mxu0 0.0
    %1254 = vmatpush1.msra.mxu0 0.0
    %1255 = vmatprep.subr.mxu0 0.0
    %1256 = vmatpush1.msra.mxu0 0.0
    %1257 = vmatprep.subr.mxu0 0.0
    %1258 = vmatpush1.msra.mxu0 0.0
    %1259 = vmatprep.subr.mxu0 0.0
    %1260 = vmatpush1.msra.mxu0 0.0
    %1261 = vmatprep.subr.mxu0 0.0
    %1262 = vmatpush1.msra.mxu0 0.0
    %1263 = vmatprep.subr.mxu0 0.0
    %1264 = vmatpush1.msra.mxu0 0.0
    %1265 = vmatprep.subr.mxu0 0.0
    %1266 = vmatpush1.msra.mxu0 0.0
    %1267 = vmatprep.subr.mxu0 0.0
    %1268 = vmatpush1.msra.mxu0 0.0
    %1269 = vmatprep.subr.mxu0 0.0
    %1270 = vmatpush1.msra.mxu0 0.0
    %1271 = vmatprep.subr.mxu0 0.0
    %1272 = vmatpush1.msra.mxu0 0.0
    %1273 = vmatprep.subr.mxu0 0.0
    %1274 = vmatpush1.msra.mxu0 0.0
    %1275 = vmatprep.subr.mxu0 0.0
    %1276 = vmatpush1.msra.mxu0 0.0
    %1277 = vmatprep.subr.mxu0 0.0
    %1278 = vmatpush1.msra.mxu0 0.0
    %1279 = vmatprep.subr.mxu0 0.0
    %1280 = vmatpush1.msra.mxu0 0.0
    %1281 = vmatprep.subr.mxu0 0.0
    %1282 = vmatpush1.msra.mxu0 0.0
    %1283 = vmatprep.mubr.f32.mxu0 0.0
    %1284 = vmatmul.mubr.f32.gmra.mrb[0].mxu0 %v1214
    %v1285 = vpop.f32.mrb[0].mxu0
    %v1286 = vadd.f32 %v1211, %v1285
    %v1287 = vpop.f32.mrb[0].mxu0
    %1288 = vmatprep.mubr.f32.mxu0 0.0
    %1289 = vmatmul.mubr.f32.gmra.mrb[0].mxu0 %v1217
    %v1290 = vpop.f32.mrb[0].mxu0
    %v1291 = vadd.f32 %v1211, %v1290
    %v1292 = vpop.f32.mrb[0].mxu0
    %1293 = vdwg.mxu0
    %1296 = vrot.lane.b32.xlu0 %v1286, 96
    %v1297 = vpop.permute.xlu0 %1296
    %1298 = vrot.lane.b32.xlu0 %v1291, 96
    %v1299 = vpop.permute.xlu0 %1298
    %v1300 = vsel %vm326, %v1286, 0
    %v1302 = vsel %vm326, %v1291, 0
    %v1304 = vsel %vm326, %v1297, 0
    %v1306 = vsel %vm326, %v1299, 0
    %1308 = vmatprep.subr.mxu0 0.0
    %1309 = vmatpush1.xpose.msra.mxu0 %v1304
    %1310 = vmatprep.subr.mxu0 0.0
    %1311 = vmatpush1.xpose.msra.mxu0 %v1306
    %1312 = vmatprep.subr.mxu0 0.0
    %1313 = vmatpush1.xpose.msra.mxu0 0.0
    %1314 = vmatprep.subr.mxu0 0.0
    %1315 = vmatpush1.xpose.msra.mxu0 0.0
    %1316 = vmatprep.subr.mxu0 0.0
    %1317 = vmatpush1.xpose.msra.mxu0 0.0
    %1318 = vmatprep.subr.mxu0 0.0
    %1319 = vmatpush1.xpose.msra.mxu0 0.0
    %1320 = vmatprep.subr.mxu0 0.0
    %1321 = vmatpush1.xpose.msra.mxu0 0.0
    %1322 = vmatprep.subr.mxu0 0.0
    %1323 = vmatpush1.xpose.msra.mxu0 0.0
    %1324 = vmatprep.subr.mxu0 0.0
    %1325 = vmatpush1.xpose.msra.mxu0 0.0
    %1326 = vmatprep.subr.mxu0 0.0
    %1327 = vmatpush1.xpose.msra.mxu0 0.0
    %1328 = vmatprep.subr.mxu0 0.0
    %1329 = vmatpush1.xpose.msra.mxu0 0.0
    %1330 = vmatprep.subr.mxu0 0.0
    %1331 = vmatpush1.xpose.msra.mxu0 0.0
    %1332 = vmatprep.subr.mxu0 0.0
    %1333 = vmatpush1.xpose.msra.mxu0 0.0
    %1334 = vmatprep.subr.mxu0 0.0
    %1335 = vmatpush1.xpose.msra.mxu0 0.0
    %1336 = vmatprep.subr.mxu0 0.0
    %1337 = vmatpush1.xpose.msra.mxu0 0.0
    %1338 = vmatprep.subr.mxu0 0.0
    %1339 = vmatpush1.xpose.msra.mxu0 0.0
    %1340 = vmatprep.subr.mxu0 0.0
    %1341 = vmatpush1.xpose.msra.mxu0 0.0
    %1342 = vmatprep.subr.mxu0 0.0
    %1343 = vmatpush1.xpose.msra.mxu0 0.0
    %1344 = vmatprep.subr.mxu0 0.0
    %1345 = vmatpush1.xpose.msra.mxu0 0.0
    %1346 = vmatprep.subr.mxu0 0.0
    %1347 = vmatpush1.xpose.msra.mxu0 0.0
    %1348 = vmatprep.subr.mxu0 0.0
    %1349 = vmatpush1.xpose.msra.mxu0 0.0
    %1350 = vmatprep.subr.mxu0 0.0
    %1351 = vmatpush1.xpose.msra.mxu0 0.0
    %1352 = vmatprep.subr.mxu0 0.0
    %1353 = vmatpush1.xpose.msra.mxu0 0.0
    %1354 = vmatprep.subr.mxu0 0.0
    %1355 = vmatpush1.xpose.msra.mxu0 0.0
    %1356 = vmatprep.subr.mxu0 0.0
    %1357 = vmatpush1.xpose.msra.mxu0 0.0
    %1358 = vmatprep.subr.mxu0 0.0
    %1359 = vmatpush1.xpose.msra.mxu0 0.0
    %1360 = vmatprep.subr.mxu0 0.0
    %1361 = vmatpush1.xpose.msra.mxu0 0.0
    %1362 = vmatprep.subr.mxu0 0.0
    %1363 = vmatpush1.xpose.msra.mxu0 0.0
    %1364 = vmatprep.subr.mxu0 0.0
    %1365 = vmatpush1.xpose.msra.mxu0 0.0
    %1366 = vmatprep.subr.mxu0 0.0
    %1367 = vmatpush1.xpose.msra.mxu0 0.0
    %1368 = vmatprep.subr.mxu0 0.0
    %1369 = vmatpush1.xpose.msra.mxu0 0.0
    %1370 = vmatprep.subr.mxu0 0.0
    %1371 = vmatpush1.xpose.msra.mxu0 0.0
    %1372 = vmatprep.mubr.f32.mxu0 0.0
    %1373 = vmatmul.mubr.f32.gmra.mrb[0].mxu0 %v1300
    %v1374 = vpop.f32.mrb[0].mxu0
    %v1375 = vadd.f32 0.0, %v1374
    %v1376 = vpop.f32.mrb[0].mxu0
    %1377 = vmatprep.mubr.f32.mxu0 0.0
    %1378 = vmatmul.mubr.f32.gmra.mrb[0].mxu0 %v1302
    %v1379 = vpop.f32.mrb[0].mxu0
    %v1380 = vadd.f32 0.0, %v1379
    %v1381 = vpop.f32.mrb[0].mxu0
    %1382 = vdwg.mxu0
    %v1383 = vmul.f32 %v1375, 0.25
    %v1384 = vmul.f32 %v1380, 0.25
    %v1385 = vadd.f32 %v1383, %v149
    %v1386 = vadd.f32 %v1384, %v150
    %v1387 = vsel %vm326, %v1385, -inf
    %1388 = vmax.xlane.f32.xlu0 %v1387
    %v1389 = vpop.xlane.xlu0 %1388
    %v1390 = vsel %vm326, %v1386, -inf
    %1391 = vmax.xlane.f32.xlu0 %v1390
    %v1392 = vpop.xlane.xlu0 %1391
    %v1393 = vsub.f32 %v1385, %v1389
    %v1394 = vsub.f32 %v1386, %v1392
    %v1395 = vmul.f32 %v1393, 1.442695
    %v1396 = vpow.pop %v1395
    %v1397 = vmul.f32 %v1394, 1.442695
    %v1398 = vpow.pop %v1397
    %v1399 = vsel %vm326, %v1396, 0.0
    %1400 = vadd.xlane.f32.xlu0 %v1399
    %v1401 = vpop.xlane.xlu0 %1400
    %v1402 = vsel %vm326, %v1398, 0.0
    %1403 = vadd.xlane.f32.xlu0 %v1402
    %v1404 = vpop.xlane.xlu0 %1403
    %v1405 = vrcp.pop %v1401
    %v1406 = vmul.f32 %v1396, %v1405
    %v1407 = vrcp.pop %v1404
    %v1408 = vmul.f32 %v1398, %v1407
    %1409 = vrot.lane.b32.xlu0 %v1286, 64
    %v1410 = vpop.permute.xlu0 %1409
    %1411 = vrot.lane.b32.xlu0 %v1291, 64
    %v1412 = vpop.permute.xlu0 %1411
    %v1416 = vsel %vm326, %v1406, 0
    %v1419 = vsel %vm326, %v1408, 0
    %1421 = vmatprep.subr.mxu0 0.0
    %1422 = vmatpush1.msra.mxu0 %v1410
    %1423 = vmatprep.subr.mxu0 0.0
    %1424 = vmatpush1.msra.mxu0 %v1412
    %1425 = vmatprep.subr.mxu0 0.0
    %1426 = vmatpush1.msra.mxu0 0.0
    %1427 = vmatprep.subr.mxu0 0.0
    %1428 = vmatpush1.msra.mxu0 0.0
    %1429 = vmatprep.subr.mxu0 0.0
    %1430 = vmatpush1.msra.mxu0 0.0
    %1431 = vmatprep.subr.mxu0 0.0
    %1432 = vmatpush1.msra.mxu0 0.0
    %1433 = vmatprep.subr.mxu0 0.0
    %1434 = vmatpush1.msra.mxu0 0.0
    %1435 = vmatprep.subr.mxu0 0.0
    %1436 = vmatpush1.msra.mxu0 0.0
    %1437 = vmatprep.subr.mxu0 0.0
    %1438 = vmatpush1.msra.mxu0 0.0
    %1439 = vmatprep.subr.mxu0 0.0
    %1440 = vmatpush1.msra.mxu0 0.0
    %1441 = vmatprep.subr.mxu0 0.0
    %1442 = vmatpush1.msra.mxu0 0.0
    %1443 = vmatprep.subr.mxu0 0.0
    %1444 = vmatpush1.msra.mxu0 0.0
    %1445 = vmatprep.subr.mxu0 0.0
    %1446 = vmatpush1.msra.mxu0 0.0
    %1447 = vmatprep.subr.mxu0 0.0
    %1448 = vmatpush1.msra.mxu0 0.0
    %1449 = vmatprep.subr.mxu0 0.0
    %1450 = vmatpush1.msra.mxu0 0.0
    %1451 = vmatprep.subr.mxu0 0.0
    %1452 = vmatpush1.msra.mxu0 0.0
    %1453 = vmatprep.subr.mxu0 0.0
    %1454 = vmatpush1.msra.mxu0 0.0
    %1455 = vmatprep.subr.mxu0 0.0
    %1456 = vmatpush1.msra.mxu0 0.0
    %1457 = vmatprep.subr.mxu0 0.0
    %1458 = vmatpush1.msra.mxu0 0.0
    %1459 = vmatprep.subr.mxu0 0.0
    %1460 = vmatpush1.msra.mxu0 0.0
    %1461 = vmatprep.subr.mxu0 0.0
    %1462 = vmatpush1.msra.mxu0 0.0
    %1463 = vmatprep.subr.mxu0 0.0
    %1464 = vmatpush1.msra.mxu0 0.0
    %1465 = vmatprep.subr.mxu0 0.0
    %1466 = vmatpush1.msra.mxu0 0.0
    %1467 = vmatprep.subr.mxu0 0.0
    %1468 = vmatpush1.msra.mxu0 0.0
    %1469 = vmatprep.subr.mxu0 0.0
    %1470 = vmatpush1.msra.mxu0 0.0
    %1471 = vmatprep.subr.mxu0 0.0
    %1472 = vmatpush1.msra.mxu0 0.0
    %1473 = vmatprep.subr.mxu0 0.0
    %1474 = vmatpush1.msra.mxu0 0.0
    %1475 = vmatprep.subr.mxu0 0.0
    %1476 = vmatpush1.msra.mxu0 0.0
    %1477 = vmatprep.subr.mxu0 0.0
    %1478 = vmatpush1.msra.mxu0 0.0
    %1479 = vmatprep.subr.mxu0 0.0
    %1480 = vmatpush1.msra.mxu0 0.0
    %1481 = vmatprep.subr.mxu0 0.0
    %1482 = vmatpush1.msra.mxu0 0.0
    %1483 = vmatprep.subr.mxu0 0.0
    %1484 = vmatpush1.msra.mxu0 0.0
    %1485 = vmatprep.mubr.f32.mxu0 0.0
    %1486 = vmatmul.mubr.f32.gmra.mrb[0].mxu0 %v1416
    %v1487 = vpop.f32.mrb[0].mxu0
    %v1488 = vadd.f32 0.0, %v1487
    %v1489 = vpop.f32.mrb[0].mxu0
    %1490 = vmatprep.mubr.f32.mxu0 0.0
    %1491 = vmatmul.mubr.f32.gmra.mrb[0].mxu0 %v1419
    %v1492 = vpop.f32.mrb[0].mxu0
    %v1493 = vadd.f32 0.0, %v1492
    %v1494 = vpop.f32.mrb[0].mxu0
    %1495 = vdwg.mxu0
    %1496 = vrot.lane.b32.xlu0 %v1286, 112
    %v1497 = vpop.permute.xlu0 %1496
    %1498 = vrot.lane.b32.xlu0 %v1291, 112
    %v1499 = vpop.permute.xlu0 %1498
    %1500 = vrot.lane.b32.xlu0 %v1286, 80
    %v1501 = vpop.permute.xlu0 %1500
    %1502 = vrot.lane.b32.xlu0 %v1291, 80
    %v1503 = vpop.permute.xlu0 %1502
    %v1504 = vsel %vm326, %v1497, 0
    %v1506 = vsel %vm326, %v1499, 0
    %v1508 = vsel %vm326, %v1501, 0
    %v1510 = vsel %vm326, %v1503, 0
    %1512 = vmatprep.subr.mxu0 0.0
    %1513 = vmatpush1.xpose.msra.mxu0 %v1508
    %1514 = vmatprep.subr.mxu0 0.0
    %1515 = vmatpush1.xpose.msra.mxu0 %v1510
    %1516 = vmatprep.subr.mxu0 0.0
    %1517 = vmatpush1.xpose.msra.mxu0 0.0
    %1518 = vmatprep.subr.mxu0 0.0
    %1519 = vmatpush1.xpose.msra.mxu0 0.0
    %1520 = vmatprep.subr.mxu0 0.0
    %1521 = vmatpush1.xpose.msra.mxu0 0.0
    %1522 = vmatprep.subr.mxu0 0.0
    %1523 = vmatpush1.xpose.msra.mxu0 0.0
    %1524 = vmatprep.subr.mxu0 0.0
    %1525 = vmatpush1.xpose.msra.mxu0 0.0
    %1526 = vmatprep.subr.mxu0 0.0
    %1527 = vmatpush1.xpose.msra.mxu0 0.0
    %1528 = vmatprep.subr.mxu0 0.0
    %1529 = vmatpush1.xpose.msra.mxu0 0.0
    %1530 = vmatprep.subr.mxu0 0.0
    %1531 = vmatpush1.xpose.msra.mxu0 0.0
    %1532 = vmatprep.subr.mxu0 0.0
    %1533 = vmatpush1.xpose.msra.mxu0 0.0
    %1534 = vmatprep.subr.mxu0 0.0
    %1535 = vmatpush1.xpose.msra.mxu0 0.0
    %1536 = vmatprep.subr.mxu0 0.0
    %1537 = vmatpush1.xpose.msra.mxu0 0.0
    %1538 = vmatprep.subr.mxu0 0.0
    %1539 = vmatpush1.xpose.msra.mxu0 0.0
    %1540 = vmatprep.subr.mxu0 0.0
    %1541 = vmatpush1.xpose.msra.mxu0 0.0
    %1542 = vmatprep.subr.mxu0 0.0
    %1543 = vmatpush1.xpose.msra.mxu0 0.0
    %1544 = vmatprep.subr.mxu0 0.0
    %1545 = vmatpush1.xpose.msra.mxu0 0.0
    %1546 = vmatprep.subr.mxu0 0.0
    %1547 = vmatpush1.xpose.msra.mxu0 0.0
    %1548 = vmatprep.subr.mxu0 0.0
    %1549 = vmatpush1.xpose.msra.mxu0 0.0
    %1550 = vmatprep.subr.mxu0 0.0
    %1551 = vmatpush1.xpose.msra.mxu0 0.0
    %1552 = vmatprep.subr.mxu0 0.0
    %1553 = vmatpush1.xpose.msra.mxu0 0.0
    %1554 = vmatprep.subr.mxu0 0.0
    %1555 = vmatpush1.xpose.msra.mxu0 0.0
    %1556 = vmatprep.subr.mxu0 0.0
    %1557 = vmatpush1.xpose.msra.mxu0 0.0
    %1558 = vmatprep.subr.mxu0 0.0
    %1559 = vmatpush1.xpose.msra.mxu0 0.0
    %1560 = vmatprep.subr.mxu0 0.0
    %1561 = vmatpush1.xpose.msra.mxu0 0.0
    %1562 = vmatprep.subr.mxu0 0.0
    %1563 = vmatpush1.xpose.msra.mxu0 0.0
    %1564 = vmatprep.subr.mxu0 0.0
    %1565 = vmatpush1.xpose.msra.mxu0 0.0
    %1566 = vmatprep.subr.mxu0 0.0
    %1567 = vmatpush1.xpose.msra.mxu0 0.0
    %1568 = vmatprep.subr.mxu0 0.0
    %1569 = vmatpush1.xpose.msra.mxu0 0.0
    %1570 = vmatprep.subr.mxu0 0.0
    %1571 = vmatpush1.xpose.msra.mxu0 0.0
    %1572 = vmatprep.subr.mxu0 0.0
    %1573 = vmatpush1.xpose.msra.mxu0 0.0
    %1574 = vmatprep.subr.mxu0 0.0
    %1575 = vmatpush1.xpose.msra.mxu0 0.0
    %1576 = vmatprep.mubr.f32.mxu0 0.0
    %1577 = vmatmul.mubr.f32.gmra.mrb[0].mxu0 %v1504
    %v1578 = vpop.f32.mrb[0].mxu0
    %v1579 = vadd.f32 0.0, %v1578
    %v1580 = vpop.f32.mrb[0].mxu0
    %1581 = vmatprep.mubr.f32.mxu0 0.0
    %1582 = vmatmul.mubr.f32.gmra.mrb[0].mxu0 %v1506
    %v1583 = vpop.f32.mrb[0].mxu0
    %v1584 = vadd.f32 0.0, %v1583
    %v1585 = vpop.f32.mrb[0].mxu0
    %1586 = vdwg.mxu0
    %v1587 = vmul.f32 %v1579, 0.25
    %v1588 = vmul.f32 %v1584, 0.25
    %v1589 = vadd.f32 %v1587, %v149
    %v1590 = vadd.f32 %v1588, %v150
    %v1591 = vsel %vm326, %v1589, -inf
    %1592 = vmax.xlane.f32.xlu0 %v1591
    %v1593 = vpop.xlane.xlu0 %1592
    %v1594 = vsel %vm326, %v1590, -inf
    %1595 = vmax.xlane.f32.xlu0 %v1594
    %v1596 = vpop.xlane.xlu0 %1595
    %v1597 = vsub.f32 %v1589, %v1593
    %v1598 = vsub.f32 %v1590, %v1596
    %v1599 = vmul.f32 %v1597, 1.442695
    %v1600 = vpow.pop %v1599
    %v1601 = vmul.f32 %v1598, 1.442695
    %v1602 = vpow.pop %v1601
    %v1603 = vsel %vm326, %v1600, 0.0
    %1604 = vadd.xlane.f32.xlu0 %v1603
    %v1605 = vpop.xlane.xlu0 %1604
    %v1606 = vsel %vm326, %v1602, 0.0
    %1607 = vadd.xlane.f32.xlu0 %v1606
    %v1608 = vpop.xlane.xlu0 %1607
    %v1609 = vrcp.pop %v1605
    %v1610 = vmul.f32 %v1600, %v1609
    %v1611 = vrcp.pop %v1608
    %v1612 = vmul.f32 %v1602, %v1611
    %1613 = vrot.lane.b32.xlu0 %v1286, 48
    %v1614 = vpop.permute.xlu0 %1613
    %1615 = vrot.lane.b32.xlu0 %v1291, 48
    %v1616 = vpop.permute.xlu0 %1615
    %v1620 = vsel %vm326, %v1610, 0
    %v1623 = vsel %vm326, %v1612, 0
    %1625 = vmatprep.subr.mxu0 0.0
    %1626 = vmatpush1.msra.mxu0 %v1614
    %1627 = vmatprep.subr.mxu0 0.0
    %1628 = vmatpush1.msra.mxu0 %v1616
    %1629 = vmatprep.subr.mxu0 0.0
    %1630 = vmatpush1.msra.mxu0 0.0
    %1631 = vmatprep.subr.mxu0 0.0
    %1632 = vmatpush1.msra.mxu0 0.0
    %1633 = vmatprep.subr.mxu0 0.0
    %1634 = vmatpush1.msra.mxu0 0.0
    %1635 = vmatprep.subr.mxu0 0.0
    %1636 = vmatpush1.msra.mxu0 0.0
    %1637 = vmatprep.subr.mxu0 0.0
    %1638 = vmatpush1.msra.mxu0 0.0
    %1639 = vmatprep.subr.mxu0 0.0
    %1640 = vmatpush1.msra.mxu0 0.0
    %1641 = vmatprep.subr.mxu0 0.0
    %1642 = vmatpush1.msra.mxu0 0.0
    %1643 = vmatprep.subr.mxu0 0.0
    %1644 = vmatpush1.msra.mxu0 0.0
    %1645 = vmatprep.subr.mxu0 0.0
    %1646 = vmatpush1.msra.mxu0 0.0
    %1647 = vmatprep.subr.mxu0 0.0
    %1648 = vmatpush1.msra.mxu0 0.0
    %1649 = vmatprep.subr.mxu0 0.0
    %1650 = vmatpush1.msra.mxu0 0.0
    %1651 = vmatprep.subr.mxu0 0.0
    %1652 = vmatpush1.msra.mxu0 0.0
    %1653 = vmatprep.subr.mxu0 0.0
    %1654 = vmatpush1.msra.mxu0 0.0
    %1655 = vmatprep.subr.mxu0 0.0
    %1656 = vmatpush1.msra.mxu0 0.0
    %1657 = vmatprep.subr.mxu0 0.0
    %1658 = vmatpush1.msra.mxu0 0.0
    %1659 = vmatprep.subr.mxu0 0.0
    %1660 = vmatpush1.msra.mxu0 0.0
    %1661 = vmatprep.subr.mxu0 0.0
    %1662 = vmatpush1.msra.mxu0 0.0
    %1663 = vmatprep.subr.mxu0 0.0
    %1664 = vmatpush1.msra.mxu0 0.0
    %1665 = vmatprep.subr.mxu0 0.0
    %1666 = vmatpush1.msra.mxu0 0.0
    %1667 = vmatprep.subr.mxu0 0.0
    %1668 = vmatpush1.msra.mxu0 0.0
    %1669 = vmatprep.subr.mxu0 0.0
    %1670 = vmatpush1.msra.mxu0 0.0
    %1671 = vmatprep.subr.mxu0 0.0
    %1672 = vmatpush1.msra.mxu0 0.0
    %1673 = vmatprep.subr.mxu0 0.0
    %1674 = vmatpush1.msra.mxu0 0.0
    %1675 = vmatprep.subr.mxu0 0.0
    %1676 = vmatpush1.msra.mxu0 0.0
    %1677 = vmatprep.subr.mxu0 0.0
    %1678 = vmatpush1.msra.mxu0 0.0
    %1679 = vmatprep.subr.mxu0 0.0
    %1680 = vmatpush1.msra.mxu0 0.0
    %1681 = vmatprep.subr.mxu0 0.0
    %1682 = vmatpush1.msra.mxu0 0.0
    %1683 = vmatprep.subr.mxu0 0.0
    %1684 = vmatpush1.msra.mxu0 0.0
    %1685 = vmatprep.subr.mxu0 0.0
    %1686 = vmatpush1.msra.mxu0 0.0
    %1687 = vmatprep.subr.mxu0 0.0
    %1688 = vmatpush1.msra.mxu0 0.0
    %1689 = vmatprep.mubr.f32.mxu0 0.0
    %1690 = vmatmul.mubr.f32.gmra.mrb[0].mxu0 %v1620
    %v1691 = vpop.f32.mrb[0].mxu0
    %v1692 = vadd.f32 0.0, %v1691
    %v1693 = vpop.f32.mrb[0].mxu0
    %1694 = vmatprep.mubr.f32.mxu0 0.0
    %1695 = vmatmul.mubr.f32.gmra.mrb[0].mxu0 %v1623
    %v1696 = vpop.f32.mrb[0].mxu0
    %v1697 = vadd.f32 0.0, %v1696
    %v1698 = vpop.f32.mrb[0].mxu0
    %1699 = vdwg.mxu0
    %v1701 = vsel %vm326, %v1692, 0
    %v1704 = vsel %vm326, %v1697, 0
    %1706 = vmatprep.subr.mxu0 0.0
    %1707 = vmatpush1.msra.mxu0 %v1178
    %1708 = vmatprep.subr.mxu0 0.0
    %1709 = vmatpush1.msra.mxu0 %v1179
    %1710 = vmatprep.subr.mxu0 0.0
    %1711 = vmatpush1.msra.mxu0 0.0
    %1712 = vmatprep.subr.mxu0 0.0
    %1713 = vmatpush1.msra.mxu0 0.0
    %1714 = vmatprep.subr.mxu0 0.0
    %1715 = vmatpush1.msra.mxu0 0.0
    %1716 = vmatprep.subr.mxu0 0.0
    %1717 = vmatpush1.msra.mxu0 0.0
    %1718 = vmatprep.subr.mxu0 0.0
    %1719 = vmatpush1.msra.mxu0 0.0
    %1720 = vmatprep.subr.mxu0 0.0
    %1721 = vmatpush1.msra.mxu0 0.0
    %1722 = vmatprep.subr.mxu0 0.0
    %1723 = vmatpush1.msra.mxu0 0.0
    %1724 = vmatprep.subr.mxu0 0.0
    %1725 = vmatpush1.msra.mxu0 0.0
    %1726 = vmatprep.subr.mxu0 0.0
    %1727 = vmatpush1.msra.mxu0 0.0
    %1728 = vmatprep.subr.mxu0 0.0
    %1729 = vmatpush1.msra.mxu0 0.0
    %1730 = vmatprep.subr.mxu0 0.0
    %1731 = vmatpush1.msra.mxu0 0.0
    %1732 = vmatprep.subr.mxu0 0.0
    %1733 = vmatpush1.msra.mxu0 0.0
    %1734 = vmatprep.subr.mxu0 0.0
    %1735 = vmatpush1.msra.mxu0 0.0
    %1736 = vmatprep.subr.mxu0 0.0
    %1737 = vmatpush1.msra.mxu0 0.0
    %1738 = vmatprep.subr.mxu0 0.0
    %1739 = vmatpush1.msra.mxu0 0.0
    %1740 = vmatprep.subr.mxu0 0.0
    %1741 = vmatpush1.msra.mxu0 0.0
    %1742 = vmatprep.subr.mxu0 0.0
    %1743 = vmatpush1.msra.mxu0 0.0
    %1744 = vmatprep.subr.mxu0 0.0
    %1745 = vmatpush1.msra.mxu0 0.0
    %1746 = vmatprep.subr.mxu0 0.0
    %1747 = vmatpush1.msra.mxu0 0.0
    %1748 = vmatprep.subr.mxu0 0.0
    %1749 = vmatpush1.msra.mxu0 0.0
    %1750 = vmatprep.subr.mxu0 0.0
    %1751 = vmatpush1.msra.mxu0 0.0
    %1752 = vmatprep.subr.mxu0 0.0
    %1753 = vmatpush1.msra.mxu0 0.0
    %1754 = vmatprep.subr.mxu0 0.0
    %1755 = vmatpush1.msra.mxu0 0.0
    %1756 = vmatprep.subr.mxu0 0.0
    %1757 = vmatpush1.msra.mxu0 0.0
    %1758 = vmatprep.subr.mxu0 0.0
    %1759 = vmatpush1.msra.mxu0 0.0
    %1760 = vmatprep.subr.mxu0 0.0
    %1761 = vmatpush1.msra.mxu0 0.0
    %1762 = vmatprep.subr.mxu0 0.0
    %1763 = vmatpush1.msra.mxu0 0.0
    %1764 = vmatprep.subr.mxu0 0.0
    %1765 = vmatpush1.msra.mxu0 0.0
    %1766 = vmatprep.subr.mxu0 0.0
    %1767 = vmatpush1.msra.mxu0 0.0
    %1768 = vmatprep.subr.mxu0 0.0
    %1769 = vmatpush1.msra.mxu0 0.0
    %1770 = vmatprep.mubr.f32.mxu0 0.0
    %1771 = vmatmul.mubr.f32.gmra.mrb[0].mxu0 %v1701
    %v1772 = vpop.f32.mrb[0].mxu0
    %v1773 = vadd.f32 0.0, %v1772
    %v1774 = vpop.f32.mrb[0].mxu0
    %1775 = vmatprep.mubr.f32.mxu0 0.0
    %1776 = vmatmul.mubr.f32.gmra.mrb[0].mxu0 %v1704
    %v1777 = vpop.f32.mrb[0].mxu0
    %v1778 = vadd.f32 0.0, %v1777
    %v1779 = vpop.f32.mrb[0].mxu0
    %1780 = vdwg.mxu0
    %v1782 = vsel %vm326, %v1488, 0
    %v1785 = vsel %vm326, %v1493, 0
    %1787 = vmatprep.subr.mxu0 0.0
    %1788 = vmatpush1.msra.mxu0 %v1176
    %1789 = vmatprep.subr.mxu0 0.0
    %1790 = vmatpush1.msra.mxu0 %v1177
    %1791 = vmatprep.subr.mxu0 0.0
    %1792 = vmatpush1.msra.mxu0 0.0
    %1793 = vmatprep.subr.mxu0 0.0
    %1794 = vmatpush1.msra.mxu0 0.0
    %1795 = vmatprep.subr.mxu0 0.0
    %1796 = vmatpush1.msra.mxu0 0.0
    %1797 = vmatprep.subr.mxu0 0.0
    %1798 = vmatpush1.msra.mxu0 0.0
    %1799 = vmatprep.subr.mxu0 0.0
    %1800 = vmatpush1.msra.mxu0 0.0
    %1801 = vmatprep.subr.mxu0 0.0
    %1802 = vmatpush1.msra.mxu0 0.0
    %1803 = vmatprep.subr.mxu0 0.0
    %1804 = vmatpush1.msra.mxu0 0.0
    %1805 = vmatprep.subr.mxu0 0.0
    %1806 = vmatpush1.msra.mxu0 0.0
    %1807 = vmatprep.subr.mxu0 0.0
    %1808 = vmatpush1.msra.mxu0 0.0
    %1809 = vmatprep.subr.mxu0 0.0
    %1810 = vmatpush1.msra.mxu0 0.0
    %1811 = vmatprep.subr.mxu0 0.0
    %1812 = vmatpush1.msra.mxu0 0.0
    %1813 = vmatprep.subr.mxu0 0.0
    %1814 = vmatpush1.msra.mxu0 0.0
    %1815 = vmatprep.subr.mxu0 0.0
    %1816 = vmatpush1.msra.mxu0 0.0
    %1817 = vmatprep.subr.mxu0 0.0
    %1818 = vmatpush1.msra.mxu0 0.0
    %1819 = vmatprep.subr.mxu0 0.0
    %1820 = vmatpush1.msra.mxu0 0.0
    %1821 = vmatprep.subr.mxu0 0.0
    %1822 = vmatpush1.msra.mxu0 0.0
    %1823 = vmatprep.subr.mxu0 0.0
    %1824 = vmatpush1.msra.mxu0 0.0
    %1825 = vmatprep.subr.mxu0 0.0
    %1826 = vmatpush1.msra.mxu0 0.0
    %1827 = vmatprep.subr.mxu0 0.0
    %1828 = vmatpush1.msra.mxu0 0.0
    %1829 = vmatprep.subr.mxu0 0.0
    %1830 = vmatpush1.msra.mxu0 0.0
    %1831 = vmatprep.subr.mxu0 0.0
    %1832 = vmatpush1.msra.mxu0 0.0
    %1833 = vmatprep.subr.mxu0 0.0
    %1834 = vmatpush1.msra.mxu0 0.0
    %1835 = vmatprep.subr.mxu0 0.0
    %1836 = vmatpush1.msra.mxu0 0.0
    %1837 = vmatprep.subr.mxu0 0.0
    %1838 = vmatpush1.msra.mxu0 0.0
    %1839 = vmatprep.subr.mxu0 0.0
    %1840 = vmatpush1.msra.mxu0 0.0
    %1841 = vmatprep.subr.mxu0 0.0
    %1842 = vmatpush1.msra.mxu0 0.0
    %1843 = vmatprep.subr.mxu0 0.0
    %1844 = vmatpush1.msra.mxu0 0.0
    %1845 = vmatprep.subr.mxu0 0.0
    %1846 = vmatpush1.msra.mxu0 0.0
    %1847 = vmatprep.subr.mxu0 0.0
    %1848 = vmatpush1.msra.mxu0 0.0
    %1849 = vmatprep.subr.mxu0 0.0
    %1850 = vmatpush1.msra.mxu0 0.0
    %1851 = vmatprep.mubr.f32.mxu0 0.0
    %1852 = vmatmul.mubr.f32.gmra.mrb[0].mxu0 %v1782
    %v1853 = vpop.f32.mrb[0].mxu0
    %v1854 = vadd.f32 %v1773, %v1853
    %v1855 = vpop.f32.mrb[0].mxu0
    %1856 = vmatprep.mubr.f32.mxu0 0.0
    %1857 = vmatmul.mubr.f32.gmra.mrb[0].mxu0 %v1785
    %v1858 = vpop.f32.mrb[0].mxu0
    %v1859 = vadd.f32 %v1778, %v1858
    %v1860 = vpop.f32.mrb[0].mxu0
    %1861 = vdwg.mxu0
    %v1863 = vlaneseq
    %v1864 = vshrl.u32 %v1863, 7
    %v1865 = vsub.s32 0, %v1864
    %v1866 = vrot.slane %v1180, %v1865
    %v1868 = vadd.f32 %v1854, %v1866
    %v1869 = vadd.f32 %v1859, %v1866
    %v1870 = vadd.f32 %v1169, %v1868
    %v1871 = vadd.f32 %v1170, %v1869
    %v1872 = vsel %vm153, %v1870, 0.0
    %1873 = vadd.xlane.f32.xlu0 %v1872
    %v1874 = vpop.xlane.xlu0 %1873
    %v1875 = vsel %vm153, %v1871, 0.0
    %1876 = vadd.xlane.f32.xlu0 %v1875
    %v1877 = vpop.xlane.xlu0 %1876
    %v1878 = vmul.f32 %v1874, %v160
    %v1879 = vmul.f32 %v1877, %v160
    %v1880 = vsub.f32 %v1870, %v1878
    %v1881 = vsub.f32 %v1871, %v1879
    %v1882 = vmul.f32 %v1880, %v1880
    %v1883 = vmul.f32 %v1881, %v1881
    %v1884 = vsel %vm153, %v1882, 0.0
    %1885 = vadd.xlane.f32.xlu0 %v1884
    %v1886 = vpop.xlane.xlu0 %1885
    %v1887 = vsel %vm153, %v1883, 0.0
    %1888 = vadd.xlane.f32.xlu0 %v1887
    %v1889 = vpop.xlane.xlu0 %1888
    %v1890 = vmul.f32 %v1886, %v160
    %v1891 = vmul.f32 %v1889, %v160
    %v1892 = vadd.f32 %v1890, 1e-12
    %v1893 = vadd.f32 %v1891, 1e-12
    %v1894 = vrsqrt.pop %v1892
    %v1895 = vrsqrt.pop %v1893
    %v1896 = vmul.f32 %v1880, %v1894
    %v1897 = vmul.f32 %v1881, %v1895
    %v1899 = vlaneseq
    %v1900 = vshrl.u32 %v1899, 7
    %v1901 = vsub.s32 0, %v1900
    %v1902 = vrot.slane %v1181, %v1901
    %v1904 = vmul.f32 %v1896, %v1902
    %v1905 = vmul.f32 %v1897, %v1902
    %v1907 = vlaneseq
    %v1908 = vshrl.u32 %v1907, 7
    %v1909 = vsub.s32 0, %v1908
    %v1910 = vrot.slane %v1182, %v1909
    %v1912 = vadd.f32 %v1904, %v1910
    %v1913 = vadd.f32 %v1905, %v1910
    %v1915 = vlaneseq
    %v1916 = vshrl.u32 %v1915, 7
    %v1917 = vsub.s32 0, %v1916
    %v1918 = vrot.slane %v1187, %v1917
    %v1921 = vsel %vm153, %v1912, 0
    %v1924 = vsel %vm153, %v1913, 0
    %1926 = vmatprep.subr.mxu0 0.0
    %1927 = vmatpush1.msra.mxu0 %v1183
    %1928 = vmatprep.subr.mxu0 0.0
    %1929 = vmatpush1.msra.mxu0 %v1184
    %1930 = vmatprep.subr.mxu0 0.0
    %1931 = vmatpush1.msra.mxu0 %v1185
    %1932 = vmatprep.subr.mxu0 0.0
    %1933 = vmatpush1.msra.mxu0 %v1186
    %1934 = vmatprep.subr.mxu0 0.0
    %1935 = vmatpush1.msra.mxu0 0.0
    %1936 = vmatprep.subr.mxu0 0.0
    %1937 = vmatpush1.msra.mxu0 0.0
    %1938 = vmatprep.subr.mxu0 0.0
    %1939 = vmatpush1.msra.mxu0 0.0
    %1940 = vmatprep.subr.mxu0 0.0
    %1941 = vmatpush1.msra.mxu0 0.0
    %1942 = vmatprep.subr.mxu0 0.0
    %1943 = vmatpush1.msra.mxu0 0.0
    %1944 = vmatprep.subr.mxu0 0.0
    %1945 = vmatpush1.msra.mxu0 0.0
    %1946 = vmatprep.subr.mxu0 0.0
    %1947 = vmatpush1.msra.mxu0 0.0
    %1948 = vmatprep.subr.mxu0 0.0
    %1949 = vmatpush1.msra.mxu0 0.0
    %1950 = vmatprep.subr.mxu0 0.0
    %1951 = vmatpush1.msra.mxu0 0.0
    %1952 = vmatprep.subr.mxu0 0.0
    %1953 = vmatpush1.msra.mxu0 0.0
    %1954 = vmatprep.subr.mxu0 0.0
    %1955 = vmatpush1.msra.mxu0 0.0
    %1956 = vmatprep.subr.mxu0 0.0
    %1957 = vmatpush1.msra.mxu0 0.0
    %1958 = vmatprep.subr.mxu0 0.0
    %1959 = vmatpush1.msra.mxu0 0.0
    %1960 = vmatprep.subr.mxu0 0.0
    %1961 = vmatpush1.msra.mxu0 0.0
    %1962 = vmatprep.subr.mxu0 0.0
    %1963 = vmatpush1.msra.mxu0 0.0
    %1964 = vmatprep.subr.mxu0 0.0
    %1965 = vmatpush1.msra.mxu0 0.0
    %1966 = vmatprep.subr.mxu0 0.0
    %1967 = vmatpush1.msra.mxu0 0.0
    %1968 = vmatprep.subr.mxu0 0.0
    %1969 = vmatpush1.msra.mxu0 0.0
    %1970 = vmatprep.subr.mxu0 0.0
    %1971 = vmatpush1.msra.mxu0 0.0
    %1972 = vmatprep.subr.mxu0 0.0
    %1973 = vmatpush1.msra.mxu0 0.0
    %1974 = vmatprep.subr.mxu0 0.0
    %1975 = vmatpush1.msra.mxu0 0.0
    %1976 = vmatprep.subr.mxu0 0.0
    %1977 = vmatpush1.msra.mxu0 0.0
    %1978 = vmatprep.subr.mxu0 0.0
    %1979 = vmatpush1.msra.mxu0 0.0
    %1980 = vmatprep.subr.mxu0 0.0
    %1981 = vmatpush1.msra.mxu0 0.0
    %1982 = vmatprep.subr.mxu0 0.0
    %1983 = vmatpush1.msra.mxu0 0.0
    %1984 = vmatprep.subr.mxu0 0.0
    %1985 = vmatpush1.msra.mxu0 0.0
    %1986 = vmatprep.subr.mxu0 0.0
    %1987 = vmatpush1.msra.mxu0 0.0
    %1988 = vmatprep.subr.mxu0 0.0
    %1989 = vmatpush1.msra.mxu0 0.0
    %1990 = vmatprep.mubr.f32.mxu0 0.0
    %1991 = vmatmul.mubr.f32.gmra.mrb[0].mxu0 %v1921
    %v1992 = vpop.f32.mrb[0].mxu0
    %v1993 = vadd.f32 %v1918, %v1992
    %v1994 = vpop.f32.mrb[0].mxu0
    %1995 = vmatprep.mubr.f32.mxu0 0.0
    %1996 = vmatmul.mubr.f32.gmra.mrb[0].mxu0 %v1924
    %v1997 = vpop.f32.mrb[0].mxu0
    %v1998 = vadd.f32 %v1918, %v1997
    %v1999 = vpop.f32.mrb[0].mxu0
    %2000 = vdwg.mxu0
    %v2001 = vmul.f32 %v1993, %v1993
    %v2002 = vmul.f32 %v1998, %v1998
    %v2003 = vmul.f32 %v1993, %v2001
    %v2004 = vmul.f32 %v1998, %v2002
    %v2005 = vmul.f32 %v2003, 0.044715
    %v2006 = vmul.f32 %v2004, 0.044715
    %v2007 = vadd.f32 %v1993, %v2005
    %v2008 = vadd.f32 %v1998, %v2006
    %v2009 = vmul.f32 %v2007, 0.7978846
    %v2010 = vmul.f32 %v2008, 0.7978846
    %v2011 = vtanh.pop %v2009
    %v2012 = vtanh.pop %v2010
    %v2013 = vadd.f32 %v2011, 1.0
    %v2014 = vadd.f32 %v2012, 1.0
    %v2015 = vmul.f32 %v2013, 0.5
    %v2016 = vmul.f32 %v2014, 0.5
    %v2017 = vmul.f32 %v1993, %v2015
    %v2018 = vmul.f32 %v1998, %v2016
    %v2020 = vlaneseq
    %v2021 = vshrl.u32 %v2020, 7
    %v2022 = vsub.s32 0, %v2021
    %v2023 = vrot.slane %v1204, %v2022
    %2025 = vmatprep.subr.mxu0 0.0
    %2026 = vmatpush1.msra.mxu0 %v1188
    %2027 = vmatprep.subr.mxu0 0.0
    %2028 = vmatpush1.msra.mxu0 %v1189
    %2029 = vmatprep.subr.mxu0 0.0
    %2030 = vmatpush1.msra.mxu0 %v1190
    %2031 = vmatprep.subr.mxu0 0.0
    %2032 = vmatpush1.msra.mxu0 %v1191
    %2033 = vmatprep.subr.mxu0 0.0
    %2034 = vmatpush1.msra.mxu0 %v1192
    %2035 = vmatprep.subr.mxu0 0.0
    %2036 = vmatpush1.msra.mxu0 %v1193
    %2037 = vmatprep.subr.mxu0 0.0
    %2038 = vmatpush1.msra.mxu0 %v1194
    %2039 = vmatprep.subr.mxu0 0.0
    %2040 = vmatpush1.msra.mxu0 %v1195
    %2041 = vmatprep.subr.mxu0 0.0
    %2042 = vmatpush1.msra.mxu0 %v1196
    %2043 = vmatprep.subr.mxu0 0.0
    %2044 = vmatpush1.msra.mxu0 %v1197
    %2045 = vmatprep.subr.mxu0 0.0
    %2046 = vmatpush1.msra.mxu0 %v1198
    %2047 = vmatprep.subr.mxu0 0.0
    %2048 = vmatpush1.msra.mxu0 %v1199
    %2049 = vmatprep.subr.mxu0 0.0
    %2050 = vmatpush1.msra.mxu0 %v1200
    %2051 = vmatprep.subr.mxu0 0.0
    %2052 = vmatpush1.msra.mxu0 %v1201
    %2053 = vmatprep.subr.mxu0 0.0
    %2054 = vmatpush1.msra.mxu0 %v1202
    %2055 = vmatprep.subr.mxu0 0.0
    %2056 = vmatpush1.msra.mxu0 %v1203
    %2057 = vmatprep.subr.mxu0 0.0
    %2058 = vmatpush1.msra.mxu0 0.0
    %2059 = vmatprep.subr.mxu0 0.0
    %2060 = vmatpush1.msra.mxu0 0.0
    %2061 = vmatprep.subr.mxu0 0.0
    %2062 = vmatpush1.msra.mxu0 0.0
    %2063 = vmatprep.subr.mxu0 0.0
    %2064 = vmatpush1.msra.mxu0 0.0
    %2065 = vmatprep.subr.mxu0 0.0
    %2066 = vmatpush1.msra.mxu0 0.0
    %2067 = vmatprep.subr.mxu0 0.0
    %2068 = vmatpush1.msra.mxu0 0.0
    %2069 = vmatprep.subr.mxu0 0.0
    %2070 = vmatpush1.msra.mxu0 0.0
    %2071 = vmatprep.subr.mxu0 0.0
    %2072 = vmatpush1.msra.mxu0 0.0
    %2073 = vmatprep.subr.mxu0 0.0
    %2074 = vmatpush1.msra.mxu0 0.0
    %2075 = vmatprep.subr.mxu0 0.0
    %2076 = vmatpush1.msra.mxu0 0.0
    %2077 = vmatprep.subr.mxu0 0.0
    %2078 = vmatpush1.msra.mxu0 0.0
    %2079 = vmatprep.subr.mxu0 0.0
    %2080 = vmatpush1.msra.mxu0 0.0
    %2081 = vmatprep.subr.mxu0 0.0
    %2082 = vmatpush1.msra.mxu0 0.0
    %2083 = vmatprep.subr.mxu0 0.0
    %2084 = vmatpush1.msra.mxu0 0.0
    %2085 = vmatprep.subr.mxu0 0.0
    %2086 = vmatpush1.msra.mxu0 0.0
    %2087 = vmatprep.subr.mxu0 0.0
    %2088 = vmatpush1.msra.mxu0 0.0
    %2089 = vmatprep.mubr.f32.mxu0 0.0
    %2090 = vmatmul.mubr.f32.gmra.mrb[0].mxu0 %v2017
    %v2091 = vpop.f32.mrb[0].mxu0
    %v2092 = vadd.f32 %v2023, %v2091
    %v2093 = vpop.f32.mrb[0].mxu0
    %2094 = vmatprep.mubr.f32.mxu0 0.0
    %2095 = vmatmul.mubr.f32.gmra.mrb[0].mxu0 %v2018
    %v2096 = vpop.f32.mrb[0].mxu0
    %v2097 = vadd.f32 %v2023, %v2096
    %v2098 = vpop.f32.mrb[0].mxu0
    %2099 = vdwg.mxu0
    %v2100 = vadd.f32 %v1912, %v2092
    %v2101 = vadd.f32 %v1913, %v2097
    %v2102 = vsel %vm153, %v2100, 0.0
    %2103 = vadd.xlane.f32.xlu0 %v2102
    %v2104 = vpop.xlane.xlu0 %2103
    %v2105 = vsel %vm153, %v2101, 0.0
    %2106 = vadd.xlane.f32.xlu0 %v2105
    %v2107 = vpop.xlane.xlu0 %2106
    %v2108 = vmul.f32 %v2104, %v160
    %v2109 = vmul.f32 %v2107, %v160
    %v2110 = vsub.f32 %v2100, %v2108
    %v2111 = vsub.f32 %v2101, %v2109
    %v2112 = vmul.f32 %v2110, %v2110
    %v2113 = vmul.f32 %v2111, %v2111
    %v2114 = vsel %vm153, %v2112, 0.0
    %2115 = vadd.xlane.f32.xlu0 %v2114
    %v2116 = vpop.xlane.xlu0 %2115
    %v2117 = vsel %vm153, %v2113, 0.0
    %2118 = vadd.xlane.f32.xlu0 %v2117
    %v2119 = vpop.xlane.xlu0 %2118
    %v2120 = vmul.f32 %v2116, %v160
    %v2121 = vmul.f32 %v2119, %v160
    %v2122 = vadd.f32 %v2120, 1e-12
    %v2123 = vadd.f32 %v2121, 1e-12
    %v2124 = vrsqrt.pop %v2122
    %v2125 = vrsqrt.pop %v2123
    %v2126 = vmul.f32 %v2110, %v2124
    %v2127 = vmul.f32 %v2111, %v2125
    %v2129 = vlaneseq
    %v2130 = vshrl.u32 %v2129, 7
    %v2131 = vsub.s32 0, %v2130
    %v2132 = vrot.slane %v1205, %v2131
    %v2134 = vmul.f32 %v2126, %v2132
    %v2135 = vmul.f32 %v2127, %v2132
    %v2137 = vlaneseq
    %v2138 = vshrl.u32 %v2137, 7
    %v2139 = vsub.s32 0, %v2138
    %v2140 = vrot.slane %v1206, %v2139
    %v2142 = vadd.f32 %v2134, %v2140
    %v2143 = vadd.f32 %v2135, %v2140
    %v2144 = vld [vmem:[%s61] sm:$0xff]
    %v2145 = vld [vmem:[%s61 + $0x8] sm:$0xff]
    %v2146 = vld [vmem:[%s61 + $0x10] sm:$0xff]
    %v2147 = vld [vmem:[%s61 + $0x18] sm:$0xff]
    %v2148 = vld [vmem:[%s63] sm:$0x1]
    %v2150 = vlaneseq
    %v2151 = vshrl.u32 %v2150, 7
    %v2152 = vsub.s32 0, %v2151
    %v2153 = vrot.slane %v2148, %v2152
    %v2156 = vsel %vm153, %v2142, 0
    %v2159 = vsel %vm153, %v2143, 0
    %2161 = vmatprep.subr.mxu0 0.0
    %2162 = vmatpush1.msra.mxu0 %v2144
    %2163 = vmatprep.subr.mxu0 0.0
    %2164 = vmatpush1.msra.mxu0 %v2145
    %2165 = vmatprep.subr.mxu0 0.0
    %2166 = vmatpush1.msra.mxu0 %v2146
    %2167 = vmatprep.subr.mxu0 0.0
    %2168 = vmatpush1.msra.mxu0 %v2147
    %2169 = vmatprep.subr.mxu0 0.0
    %2170 = vmatpush1.msra.mxu0 0.0
    %2171 = vmatprep.subr.mxu0 0.0
    %2172 = vmatpush1.msra.mxu0 0.0
    %2173 = vmatprep.subr.mxu0 0.0
    %2174 = vmatpush1.msra.mxu0 0.0
    %2175 = vmatprep.subr.mxu0 0.0
    %2176 = vmatpush1.msra.mxu0 0.0
    %2177 = vmatprep.subr.mxu0 0.0
    %2178 = vmatpush1.msra.mxu0 0.0
    %2179 = vmatprep.subr.mxu0 0.0
    %2180 = vmatpush1.msra.mxu0 0.0
    %2181 = vmatprep.subr.mxu0 0.0
    %2182 = vmatpush1.msra.mxu0 0.0
    %2183 = vmatprep.subr.mxu0 0.0
    %2184 = vmatpush1.msra.mxu0 0.0
    %2185 = vmatprep.subr.mxu0 0.0
    %2186 = vmatpush1.msra.mxu0 0.0
    %2187 = vmatprep.subr.mxu0 0.0
    %2188 = vmatpush1.msra.mxu0 0.0
    %2189 = vmatprep.subr.mxu0 0.0
    %2190 = vmatpush1.msra.mxu0 0.0
    %2191 = vmatprep.subr.mxu0 0.0
    %2192 = vmatpush1.msra.mxu0 0.0
    %2193 = vmatprep.subr.mxu0 0.0
    %2194 = vmatpush1.msra.mxu0 0.0
    %2195 = vmatprep.subr.mxu0 0.0
    %2196 = vmatpush1.msra.mxu0 0.0
    %2197 = vmatprep.subr.mxu0 0.0
    %2198 = vmatpush1.msra.mxu0 0.0
    %2199 = vmatprep.subr.mxu0 0.0
    %2200 = vmatpush1.msra.mxu0 0.0
    %2201 = vmatprep.subr.mxu0 0.0
    %2202 = vmatpush1.msra.mxu0 0.0
    %2203 = vmatprep.subr.mxu0 0.0
    %2204 = vmatpush1.msra.mxu0 0.0
    %2205 = vmatprep.subr.mxu0 0.0
    %2206 = vmatpush1.msra.mxu0 0.0
    %2207 = vmatprep.subr.mxu0 0.0
    %2208 = vmatpush1.msra.mxu0 0.0
    %2209 = vmatprep.subr.mxu0 0.0
    %2210 = vmatpush1.msra.mxu0 0.0
    %2211 = vmatprep.subr.mxu0 0.0
    %2212 = vmatpush1.msra.mxu0 0.0
    %2213 = vmatprep.subr.mxu0 0.0
    %2214 = vmatpush1.msra.mxu0 0.0
    %2215 = vmatprep.subr.mxu0 0.0
    %2216 = vmatpush1.msra.mxu0 0.0
    %2217 = vmatprep.subr.mxu0 0.0
    %2218 = vmatpush1.msra.mxu0 0.0
    %2219 = vmatprep.subr.mxu0 0.0
    %2220 = vmatpush1.msra.mxu0 0.0
    %2221 = vmatprep.subr.mxu0 0.0
    %2222 = vmatpush1.msra.mxu0 0.0
    %2223 = vmatprep.subr.mxu0 0.0
    %2224 = vmatpush1.msra.mxu0 0.0
    %2225 = vmatprep.mubr.f32.mxu0 0.0
    %2226 = vmatmul.mubr.f32.gmra.mrb[0].mxu0 %v2156
    %v2227 = vpop.f32.mrb[0].mxu0
    %v2228 = vadd.f32 %v2153, %v2227
    %v2229 = vpop.f32.mrb[0].mxu0
    %2230 = vmatprep.mubr.f32.mxu0 0.0
    %2231 = vmatmul.mubr.f32.gmra.mrb[0].mxu0 %v2159
    %v2232 = vpop.f32.mrb[0].mxu0
    %v2233 = vadd.f32 %v2153, %v2232
    %v2234 = vpop.f32.mrb[0].mxu0
    %2235 = vdwg.mxu0
    %v2236 = vld [vmem:[%s3] sm:$0x3]
    %v2237 = vld [vmem:[%s7] sm:$0x3]
    %v2238 = vld [vmem:[%s65] sm:$0x1]
    %v2239 = vld [vmem:[%s67] sm:$0x1]
    %v2240 = vld [vmem:[%s69] sm:$0x1f]
    %v2241 = vlaneseq
    %v2242 = vand.u32 %v2241, 127
    %v2243 = vmul.f32 %v2240, 1.442695
    %v2244 = vpow.pop %v2243
    %2245 = vset.pattern.permute.xlu0 0
    %2246 = vperm.xlu0 %2245, %v2237
    %v2247 = vpop.permute.xlu0 %2246
    %vm2248 = vcmp.eq.s32.totalorder %v2247, %v2242
    %v2249 = vsel %vm2248, 1, 0
    %v2250 = vcvt.s32.f32 %v2249
    %v2251 = vadd.f32 %v2238, %v2228
    %v2252 = vmul.f32 %v2251, %v2250
    %vm2253 = vcmask 32768
    %v2254 = vsel %vm2253, %v2252, 0.0
    %2255 = vadd.xlane.f32.xlu0 %v2254
    %v2256 = vpop.xlane.xlu0 %2255
    %2257 = vset.pattern.permute.xlu0 1
    %2258 = vperm.xlu0 %2257, %v2237
    %v2259 = vpop.permute.xlu0 %2258
    %vm2260 = vcmp.eq.s32.totalorder %v2259, %v2242
    %v2261 = vsel %vm2260, 1, 0
    %v2262 = vcvt.s32.f32 %v2261
    %v2264 = vrot.slane %v2228, 1
    %vm2266 = vcmask 39936
    %v2268 = vsel %vm2266, %v2250, 0
    %vm2270 = vcmask 1044480
    %v2272 = vsel %vm2270, %v2240, 0
    %2274 = vmatprep.subr.mxu0 0.0
    %2275 = vmatpush1.msra.mxu0 %v2272
    %2276 = vmatprep.subr.mxu0 0.0
    %2277 = vmatpush1.msra.mxu0 0.0
    %2278 = vmatprep.subr.mxu0 0.0
    %2279 = vmatpush1.msra.mxu0 0.0
    %2280 = vmatprep.subr.mxu0 0.0
    %2281 = vmatpush1.msra.mxu0 0.0
    %2282 = vmatprep.subr.mxu0 0.0
    %2283 = vmatpush1.msra.mxu0 0.0
    %2284 = vmatprep.subr.mxu0 0.0
    %2285 = vmatpush1.msra.mxu0 0.0
    %2286 = vmatprep.subr.mxu0 0.0
    %2287 = vmatpush1.msra.mxu0 0.0
    %2288 = vmatprep.subr.mxu0 0.0
    %2289 = vmatpush1.msra.mxu0 0.0
    %2290 = vmatprep.subr.mxu0 0.0
    %2291 = vmatpush1.msra.mxu0 0.0
    %2292 = vmatprep.subr.mxu0 0.0
    %2293 = vmatpush1.msra.mxu0 0.0
    %2294 = vmatprep.subr.mxu0 0.0
    %2295 = vmatpush1.msra.mxu0 0.0
    %2296 = vmatprep.subr.mxu0 0.0
    %2297 = vmatpush1.msra.mxu0 0.0
    %2298 = vmatprep.subr.mxu0 0.0
    %2299 = vmatpush1.msra.mxu0 0.0
    %2300 = vmatprep.subr.mxu0 0.0
    %2301 = vmatpush1.msra.mxu0 0.0
    %2302 = vmatprep.subr.mxu0 0.0
    %2303 = vmatpush1.msra.mxu0 0.0
    %2304 = vmatprep.subr.mxu0 0.0
    %2305 = vmatpush1.msra.mxu0 0.0
    %2306 = vmatprep.subr.mxu0 0.0
    %2307 = vmatpush1.msra.mxu0 0.0
    %2308 = vmatprep.subr.mxu0 0.0
    %2309 = vmatpush1.msra.mxu0 0.0
    %2310 = vmatprep.subr.mxu0 0.0
    %2311 = vmatpush1.msra.mxu0 0.0
    %2312 = vmatprep.subr.mxu0 0.0
    %2313 = vmatpush1.msra.mxu0 0.0
    %2314 = vmatprep.subr.mxu0 0.0
    %2315 = vmatpush1.msra.mxu0 0.0
    %2316 = vmatprep.subr.mxu0 0.0
    %2317 = vmatpush1.msra.mxu0 0.0
    %2318 = vmatprep.subr.mxu0 0.0
    %2319 = vmatpush1.msra.mxu0 0.0
    %2320 = vmatprep.subr.mxu0 0.0
    %2321 = vmatpush1.msra.mxu0 0.0
    %2322 = vmatprep.subr.mxu0 0.0
    %2323 = vmatpush1.msra.mxu0 0.0
    %2324 = vmatprep.subr.mxu0 0.0
    %2325 = vmatpush1.msra.mxu0 0.0
    %2326 = vmatprep.subr.mxu0 0.0
    %2327 = vmatpush1.msra.mxu0 0.0
    %2328 = vmatprep.subr.mxu0 0.0
    %2329 = vmatpush1.msra.mxu0 0.0
    %2330 = vmatprep.subr.mxu0 0.0
    %2331 = vmatpush1.msra.mxu0 0.0
    %2332 = vmatprep.subr.mxu0 0.0
    %2333 = vmatpush1.msra.mxu0 0.0
    %2334 = vmatprep.subr.mxu0 0.0
    %2335 = vmatpush1.msra.mxu0 0.0
    %2336 = vmatprep.subr.mxu0 0.0
    %2337 = vmatpush1.msra.mxu0 0.0
    %2338 = vmatprep.mubr.f32.mxu0 0.0
    %2339 = vmatmul.mubr.f32.gmra.mrb[0].mxu0 %v2268
    %v2340 = vpop.f32.mrb[0].mxu0
    %v2341 = vadd.f32 %v2264, %v2340
    %v2342 = vpop.f32.mrb[0].mxu0
    %2343 = vdwg.mxu0
    %v2344 = vmul.f32 %v2341, %v2262
    %v2345 = vsel %vm2253, %v2344, 0.0
    %2346 = vadd.xlane.f32.xlu0 %v2345
    %v2347 = vpop.xlane.xlu0 %2346
    %v2348 = vmul.f32 %v2236, %v2347
    %v2349 = vadd.f32 %v2256, %v2348
    %vm2350 = vcmp.gt.f32.partialorder %v2236, 0.5
    %v2351 = vsel %vm2350, 1, 0
    %2352 = vset.pattern.permute.xlu0 1
    %2353 = vperm.xlu0 %2352, %v2351
    %v2354 = vpop.permute.xlu0 %2353
    %vm2355 = vcmp.eq.s32.totalorder %v2354, 1
    %v2356 = vsel %vm2355, %v2262, %v2250
    %v2357 = vsel %vm2253, %v2251, -inf
    %2358 = vmax.xlane.f32.xlu0 %v2357
    %v2359 = vpop.xlane.xlu0 %2358
    %v2360 = vsub.f32 %v2251, %v2359
    %v2361 = vmul.f32 %v2360, 1.442695
    %v2362 = vpow.pop %v2361
    %v2364 = vsel %vm2266, %v2362, 0
    %v2367 = vsel %vm2270, %v2244, 0
    %2369 = vmatprep.subr.mxu0 0.0
    %2370 = vmatpush1.msra.mxu0 %v2367
    %2371 = vmatprep.subr.mxu0 0.0
    %2372 = vmatpush1.msra.mxu0 0.0
    %2373 = vmatprep.subr.mxu0 0.0
    %2374 = vmatpush1.msra.mxu0 0.0
    %2375 = vmatprep.subr.mxu0 0.0
    %2376 = vmatpush1.msra.mxu0 0.0
    %2377 = vmatprep.subr.mxu0 0.0
    %2378 = vmatpush1.msra.mxu0 0.0
    %2379 = vmatprep.subr.mxu0 0.0
    %2380 = vmatpush1.msra.mxu0 0.0
    %2381 = vmatprep.subr.mxu0 0.0
    %2382 = vmatpush1.msra.mxu0 0.0
    %2383 = vmatprep.subr.mxu0 0.0
    %2384 = vmatpush1.msra.mxu0 0.0
    %2385 = vmatprep.subr.mxu0 0.0
    %2386 = vmatpush1.msra.mxu0 0.0
    %2387 = vmatprep.subr.mxu0 0.0
    %2388 = vmatpush1.msra.mxu0 0.0
    %2389 = vmatprep.subr.mxu0 0.0
    %2390 = vmatpush1.msra.mxu0 0.0
    %2391 = vmatprep.subr.mxu0 0.0
    %2392 = vmatpush1.msra.mxu0 0.0
    %2393 = vmatprep.subr.mxu0 0.0
    %2394 = vmatpush1.msra.mxu0 0.0
    %2395 = vmatprep.subr.mxu0 0.0
    %2396 = vmatpush1.msra.mxu0 0.0
    %2397 = vmatprep.subr.mxu0 0.0
    %2398 = vmatpush1.msra.mxu0 0.0
    %2399 = vmatprep.subr.mxu0 0.0
    %2400 = vmatpush1.msra.mxu0 0.0
    %2401 = vmatprep.subr.mxu0 0.0
    %2402 = vmatpush1.msra.mxu0 0.0
    %2403 = vmatprep.subr.mxu0 0.0
    %2404 = vmatpush1.msra.mxu0 0.0
    %2405 = vmatprep.subr.mxu0 0.0
    %2406 = vmatpush1.msra.mxu0 0.0
    %2407 = vmatprep.subr.mxu0 0.0
    %2408 = vmatpush1.msra.mxu0 0.0
    %2409 = vmatprep.subr.mxu0 0.0
    %2410 = vmatpush1.msra.mxu0 0.0
    %2411 = vmatprep.subr.mxu0 0.0
    %2412 = vmatpush1.msra.mxu0 0.0
    %2413 = vmatprep.subr.mxu0 0.0
    %2414 = vmatpush1.msra.mxu0 0.0
    %2415 = vmatprep.subr.mxu0 0.0
    %2416 = vmatpush1.msra.mxu0 0.0
    %2417 = vmatprep.subr.mxu0 0.0
    %2418 = vmatpush1.msra.mxu0 0.0
    %2419 = vmatprep.subr.mxu0 0.0
    %2420 = vmatpush1.msra.mxu0 0.0
    %2421 = vmatprep.subr.mxu0 0.0
    %2422 = vmatpush1.msra.mxu0 0.0
    %2423 = vmatprep.subr.mxu0 0.0
    %2424 = vmatpush1.msra.mxu0 0.0
    %2425 = vmatprep.subr.mxu0 0.0
    %2426 = vmatpush1.msra.mxu0 0.0
    %2427 = vmatprep.subr.mxu0 0.0
    %2428 = vmatpush1.msra.mxu0 0.0
    %2429 = vmatprep.subr.mxu0 0.0
    %2430 = vmatpush1.msra.mxu0 0.0
    %2431 = vmatprep.subr.mxu0 0.0
    %2432 = vmatpush1.msra.mxu0 0.0
    %2433 = vmatprep.mubr.f32.mxu0 0.0
    %2434 = vmatmul.mubr.f32.gmra.mrb[0].mxu0 %v2364
    %v2435 = vpop.f32.mrb[0].mxu0
    %v2436 = vadd.f32 0.0, %v2435
    %v2437 = vpop.f32.mrb[0].mxu0
    %2438 = vdwg.mxu0
    %v2439 = vlog2.pop %v2436
    %v2440 = vmul.f32 %v2439, 0.6931472
    %v2441 = vadd.f32 %v2359, %v2440
    %v2442 = vadd.f32 %v2441, %v2264
    %v2443 = vsel %vm2355, %v2442, %v2251
    %2444 = vset.pattern.permute.xlu0 2
    %2445 = vperm.xlu0 %2444, %v2237
    %v2446 = vpop.permute.xlu0 %2445
    %vm2447 = vcmp.eq.s32.totalorder %v2446, %v2242
    %v2448 = vsel %vm2447, 1, 0
    %v2449 = vcvt.s32.f32 %v2448
    %v2450 = vrot.slane %v2228, 2
    %v2453 = vsel %vm2266, %v2262, 0
    %2455 = vmatprep.subr.mxu0 0.0
    %2456 = vmatpush1.msra.mxu0 %v2272
    %2457 = vmatprep.subr.mxu0 0.0
    %2458 = vmatpush1.msra.mxu0 0.0
    %2459 = vmatprep.subr.mxu0 0.0
    %2460 = vmatpush1.msra.mxu0 0.0
    %2461 = vmatprep.subr.mxu0 0.0
    %2462 = vmatpush1.msra.mxu0 0.0
    %2463 = vmatprep.subr.mxu0 0.0
    %2464 = vmatpush1.msra.mxu0 0.0
    %2465 = vmatprep.subr.mxu0 0.0
    %2466 = vmatpush1.msra.mxu0 0.0
    %2467 = vmatprep.subr.mxu0 0.0
    %2468 = vmatpush1.msra.mxu0 0.0
    %2469 = vmatprep.subr.mxu0 0.0
    %2470 = vmatpush1.msra.mxu0 0.0
    %2471 = vmatprep.subr.mxu0 0.0
    %2472 = vmatpush1.msra.mxu0 0.0
    %2473 = vmatprep.subr.mxu0 0.0
    %2474 = vmatpush1.msra.mxu0 0.0
    %2475 = vmatprep.subr.mxu0 0.0
    %2476 = vmatpush1.msra.mxu0 0.0
    %2477 = vmatprep.subr.mxu0 0.0
    %2478 = vmatpush1.msra.mxu0 0.0
    %2479 = vmatprep.subr.mxu0 0.0
    %2480 = vmatpush1.msra.mxu0 0.0
    %2481 = vmatprep.subr.mxu0 0.0
    %2482 = vmatpush1.msra.mxu0 0.0
    %2483 = vmatprep.subr.mxu0 0.0
    %2484 = vmatpush1.msra.mxu0 0.0
    %2485 = vmatprep.subr.mxu0 0.0
    %2486 = vmatpush1.msra.mxu0 0.0
    %2487 = vmatprep.subr.mxu0 0.0
    %2488 = vmatpush1.msra.mxu0 0.0
    %2489 = vmatprep.subr.mxu0 0.0
    %2490 = vmatpush1.msra.mxu0 0.0
    %2491 = vmatprep.subr.mxu0 0.0
    %2492 = vmatpush1.msra.mxu0 0.0
    %2493 = vmatprep.subr.mxu0 0.0
    %2494 = vmatpush1.msra.mxu0 0.0
    %2495 = vmatprep.subr.mxu0 0.0
    %2496 = vmatpush1.msra.mxu0 0.0
    %2497 = vmatprep.subr.mxu0 0.0
    %2498 = vmatpush1.msra.mxu0 0.0
    %2499 = vmatprep.subr.mxu0 0.0
    %2500 = vmatpush1.msra.mxu0 0.0
    %2501 = vmatprep.subr.mxu0 0.0
    %2502 = vmatpush1.msra.mxu0 0.0
    %2503 = vmatprep.subr.mxu0 0.0
    %2504 = vmatpush1.msra.mxu0 0.0
    %2505 = vmatprep.subr.mxu0 0.0
    %2506 = vmatpush1.msra.mxu0 0.0
    %2507 = vmatprep.subr.mxu0 0.0
    %2508 = vmatpush1.msra.mxu0 0.0
    %2509 = vmatprep.subr.mxu0 0.0
    %2510 = vmatpush1.msra.mxu0 0.0
    %2511 = vmatprep.subr.mxu0 0.0
    %2512 = vmatpush1.msra.mxu0 0.0
    %2513 = vmatprep.subr.mxu0 0.0
    %2514 = vmatpush1.msra.mxu0 0.0
    %2515 = vmatprep.subr.mxu0 0.0
    %2516 = vmatpush1.msra.mxu0 0.0
    %2517 = vmatprep.subr.mxu0 0.0
    %2518 = vmatpush1.msra.mxu0 0.0
    %2519 = vmatprep.mubr.f32.mxu0 0.0
    %2520 = vmatmul.mubr.f32.gmra.mrb[0].mxu0 %v2453
    %v2521 = vpop.f32.mrb[0].mxu0
    %v2522 = vadd.f32 %v2450, %v2521
    %v2523 = vpop.f32.mrb[0].mxu0
    %2524 = vdwg.mxu0
    %v2525 = vmul.f32 %v2522, %v2449
    %v2526 = vsel %vm2253, %v2525, 0.0
    %2527 = vadd.xlane.f32.xlu0 %v2526
    %v2528 = vpop.xlane.xlu0 %2527
    %v2529 = vmul.f32 %v2236, %v2528
    %2531 = vrot.lane.b32.xlu0 %v2529, 127
    %v2532 = vpop.permute.xlu0 %2531
    %v2534 = vadd.f32 %v2349, %v2532
    %2535 = vset.pattern.permute.xlu0 2
    %2536 = vperm.xlu0 %2535, %v2351
    %v2537 = vpop.permute.xlu0 %2536
    %vm2538 = vcmp.eq.s32.totalorder %v2537, 1
    %v2539 = vsel %vm2538, %v2449, %v2356
    %v2540 = vsel %vm2253, %v2443, -inf
    %2541 = vmax.xlane.f32.xlu0 %v2540
    %v2542 = vpop.xlane.xlu0 %2541
    %v2543 = vsub.f32 %v2443, %v2542
    %v2544 = vmul.f32 %v2543, 1.442695
    %v2545 = vpow.pop %v2544
    %v2547 = vsel %vm2266, %v2545, 0
    %2549 = vmatprep.subr.mxu0 0.0
    %2550 = vmatpush1.msra.mxu0 %v2367
    %2551 = vmatprep.subr.mxu0 0.0
    %2552 = vmatpush1.msra.mxu0 0.0
    %2553 = vmatprep.subr.mxu0 0.0
    %2554 = vmatpush1.msra.mxu0 0.0
    %2555 = vmatprep.subr.mxu0 0.0
    %2556 = vmatpush1.msra.mxu0 0.0
    %2557 = vmatprep.subr.mxu0 0.0
    %2558 = vmatpush1.msra.mxu0 0.0
    %2559 = vmatprep.subr.mxu0 0.0
    %2560 = vmatpush1.msra.mxu0 0.0
    %2561 = vmatprep.subr.mxu0 0.0
    %2562 = vmatpush1.msra.mxu0 0.0
    %2563 = vmatprep.subr.mxu0 0.0
    %2564 = vmatpush1.msra.mxu0 0.0
    %2565 = vmatprep.subr.mxu0 0.0
    %2566 = vmatpush1.msra.mxu0 0.0
    %2567 = vmatprep.subr.mxu0 0.0
    %2568 = vmatpush1.msra.mxu0 0.0
    %2569 = vmatprep.subr.mxu0 0.0
    %2570 = vmatpush1.msra.mxu0 0.0
    %2571 = vmatprep.subr.mxu0 0.0
    %2572 = vmatpush1.msra.mxu0 0.0
    %2573 = vmatprep.subr.mxu0 0.0
    %2574 = vmatpush1.msra.mxu0 0.0
    %2575 = vmatprep.subr.mxu0 0.0
    %2576 = vmatpush1.msra.mxu0 0.0
    %2577 = vmatprep.subr.mxu0 0.0
    %2578 = vmatpush1.msra.mxu0 0.0
    %2579 = vmatprep.subr.mxu0 0.0
    %2580 = vmatpush1.msra.mxu0 0.0
    %2581 = vmatprep.subr.mxu0 0.0
    %2582 = vmatpush1.msra.mxu0 0.0
    %2583 = vmatprep.subr.mxu0 0.0
    %2584 = vmatpush1.msra.mxu0 0.0
    %2585 = vmatprep.subr.mxu0 0.0
    %2586 = vmatpush1.msra.mxu0 0.0
    %2587 = vmatprep.subr.mxu0 0.0
    %2588 = vmatpush1.msra.mxu0 0.0
    %2589 = vmatprep.subr.mxu0 0.0
    %2590 = vmatpush1.msra.mxu0 0.0
    %2591 = vmatprep.subr.mxu0 0.0
    %2592 = vmatpush1.msra.mxu0 0.0
    %2593 = vmatprep.subr.mxu0 0.0
    %2594 = vmatpush1.msra.mxu0 0.0
    %2595 = vmatprep.subr.mxu0 0.0
    %2596 = vmatpush1.msra.mxu0 0.0
    %2597 = vmatprep.subr.mxu0 0.0
    %2598 = vmatpush1.msra.mxu0 0.0
    %2599 = vmatprep.subr.mxu0 0.0
    %2600 = vmatpush1.msra.mxu0 0.0
    %2601 = vmatprep.subr.mxu0 0.0
    %2602 = vmatpush1.msra.mxu0 0.0
    %2603 = vmatprep.subr.mxu0 0.0
    %2604 = vmatpush1.msra.mxu0 0.0
    %2605 = vmatprep.subr.mxu0 0.0
    %2606 = vmatpush1.msra.mxu0 0.0
    %2607 = vmatprep.subr.mxu0 0.0
    %2608 = vmatpush1.msra.mxu0 0.0
    %2609 = vmatprep.subr.mxu0 0.0
    %2610 = vmatpush1.msra.mxu0 0.0
    %2611 = vmatprep.subr.mxu0 0.0
    %2612 = vmatpush1.msra.mxu0 0.0
    %2613 = vmatprep.mubr.f32.mxu0 0.0
    %2614 = vmatmul.mubr.f32.gmra.mrb[0].mxu0 %v2547
    %v2615 = vpop.f32.mrb[0].mxu0
    %v2616 = vadd.f32 0.0, %v2615
    %v2617 = vpop.f32.mrb[0].mxu0
    %2618 = vdwg.mxu0
    %v2619 = vlog2.pop %v2616
    %v2620 = vmul.f32 %v2619, 0.6931472
    %v2621 = vadd.f32 %v2542, %v2620
    %v2622 = vadd.f32 %v2621, %v2450
    %v2623 = vsel %vm2538, %v2622, %v2443
    %2624 = vset.pattern.permute.xlu0 3
    %2625 = vperm.xlu0 %2624, %v2237
    %v2626 = vpop.permute.xlu0 %2625
    %vm2627 = vcmp.eq.s32.totalorder %v2626, %v2242
    %v2628 = vsel %vm2627, 1, 0
    %v2629 = vcvt.s32.f32 %v2628
    %v2630 = vrot.slane %v2228, 3
    %v2633 = vsel %vm2266, %v2449, 0
    %2635 = vmatprep.subr.mxu0 0.0
    %2636 = vmatpush1.msra.mxu0 %v2272
    %2637 = vmatprep.subr.mxu0 0.0
    %2638 = vmatpush1.msra.mxu0 0.0
    %2639 = vmatprep.subr.mxu0 0.0
    %2640 = vmatpush1.msra.mxu0 0.0
    %2641 = vmatprep.subr.mxu0 0.0
    %2642 = vmatpush1.msra.mxu0 0.0
    %2643 = vmatprep.subr.mxu0 0.0
    %2644 = vmatpush1.msra.mxu0 0.0
    %2645 = vmatprep.subr.mxu0 0.0
    %2646 = vmatpush1.msra.mxu0 0.0
    %2647 = vmatprep.subr.mxu0 0.0
    %2648 = vmatpush1.msra.mxu0 0.0
    %2649 = vmatprep.subr.mxu0 0.0
    %2650 = vmatpush1.msra.mxu0 0.0
    %2651 = vmatprep.subr.mxu0 0.0
    %2652 = vmatpush1.msra.mxu0 0.0
    %2653 = vmatprep.subr.mxu0 0.0
    %2654 = vmatpush1.msra.mxu0 0.0
    %2655 = vmatprep.subr.mxu0 0.0
    %2656 = vmatpush1.msra.mxu0 0.0
    %2657 = vmatprep.subr.mxu0 0.0
    %2658 = vmatpush1.msra.mxu0 0.0
    %2659 = vmatprep.subr.mxu0 0.0
    %2660 = vmatpush1.msra.mxu0 0.0
    %2661 = vmatprep.subr.mxu0 0.0
    %2662 = vmatpush1.msra.mxu0 0.0
    %2663 = vmatprep.subr.mxu0 0.0
    %2664 = vmatpush1.msra.mxu0 0.0
    %2665 = vmatprep.subr.mxu0 0.0
    %2666 = vmatpush1.msra.mxu0 0.0
    %2667 = vmatprep.subr.mxu0 0.0
    %2668 = vmatpush1.msra.mxu0 0.0
    %2669 = vmatprep.subr.mxu0 0.0
    %2670 = vmatpush1.msra.mxu0 0.0
    %2671 = vmatprep.subr.mxu0 0.0
    %2672 = vmatpush1.msra.mxu0 0.0
    %2673 = vmatprep.subr.mxu0 0.0
    %2674 = vmatpush1.msra.mxu0 0.0
    %2675 = vmatprep.subr.mxu0 0.0
    %2676 = vmatpush1.msra.mxu0 0.0
    %2677 = vmatprep.subr.mxu0 0.0
    %2678 = vmatpush1.msra.mxu0 0.0
    %2679 = vmatprep.subr.mxu0 0.0
    %2680 = vmatpush1.msra.mxu0 0.0
    %2681 = vmatprep.subr.mxu0 0.0
    %2682 = vmatpush1.msra.mxu0 0.0
    %2683 = vmatprep.subr.mxu0 0.0
    %2684 = vmatpush1.msra.mxu0 0.0
    %2685 = vmatprep.subr.mxu0 0.0
    %2686 = vmatpush1.msra.mxu0 0.0
    %2687 = vmatprep.subr.mxu0 0.0
    %2688 = vmatpush1.msra.mxu0 0.0
    %2689 = vmatprep.subr.mxu0 0.0
    %2690 = vmatpush1.msra.mxu0 0.0
    %2691 = vmatprep.subr.mxu0 0.0
    %2692 = vmatpush1.msra.mxu0 0.0
    %2693 = vmatprep.subr.mxu0 0.0
    %2694 = vmatpush1.msra.mxu0 0.0
    %2695 = vmatprep.subr.mxu0 0.0
    %2696 = vmatpush1.msra.mxu0 0.0
    %2697 = vmatprep.subr.mxu0 0.0
    %2698 = vmatpush1.msra.mxu0 0.0
    %2699 = vmatprep.mubr.f32.mxu0 0.0
    %2700 = vmatmul.mubr.f32.gmra.mrb[0].mxu0 %v2633
    %v2701 = vpop.f32.mrb[0].mxu0
    %v2702 = vadd.f32 %v2630, %v2701
    %v2703 = vpop.f32.mrb[0].mxu0
    %2704 = vdwg.mxu0
    %v2705 = vmul.f32 %v2702, %v2629
    %v2706 = vsel %vm2253, %v2705, 0.0
    %2707 = vadd.xlane.f32.xlu0 %v2706
    %v2708 = vpop.xlane.xlu0 %2707
    %v2709 = vmul.f32 %v2236, %v2708
    %2711 = vrot.lane.b32.xlu0 %v2709, 126
    %v2712 = vpop.permute.xlu0 %2711
    %v2714 = vadd.f32 %v2534, %v2712
    %2715 = vset.pattern.permute.xlu0 3
    %2716 = vperm.xlu0 %2715, %v2351
    %v2717 = vpop.permute.xlu0 %2716
    %vm2718 = vcmp.eq.s32.totalorder %v2717, 1
    %v2719 = vsel %vm2718, %v2629, %v2539
    %v2720 = vsel %vm2253, %v2623, -inf
    %2721 = vmax.xlane.f32.xlu0 %v2720
    %v2722 = vpop.xlane.xlu0 %2721
    %v2723 = vsub.f32 %v2623, %v2722
    %v2724 = vmul.f32 %v2723, 1.442695
    %v2725 = vpow.pop %v2724
    %v2727 = vsel %vm2266, %v2725, 0
    %2729 = vmatprep.subr.mxu0 0.0
    %2730 = vmatpush1.msra.mxu0 %v2367
    %2731 = vmatprep.subr.mxu0 0.0
    %2732 = vmatpush1.msra.mxu0 0.0
    %2733 = vmatprep.subr.mxu0 0.0
    %2734 = vmatpush1.msra.mxu0 0.0
    %2735 = vmatprep.subr.mxu0 0.0
    %2736 = vmatpush1.msra.mxu0 0.0
    %2737 = vmatprep.subr.mxu0 0.0
    %2738 = vmatpush1.msra.mxu0 0.0
    %2739 = vmatprep.subr.mxu0 0.0
    %2740 = vmatpush1.msra.mxu0 0.0
    %2741 = vmatprep.subr.mxu0 0.0
    %2742 = vmatpush1.msra.mxu0 0.0
    %2743 = vmatprep.subr.mxu0 0.0
    %2744 = vmatpush1.msra.mxu0 0.0
    %2745 = vmatprep.subr.mxu0 0.0
    %2746 = vmatpush1.msra.mxu0 0.0
    %2747 = vmatprep.subr.mxu0 0.0
    %2748 = vmatpush1.msra.mxu0 0.0
    %2749 = vmatprep.subr.mxu0 0.0
    %2750 = vmatpush1.msra.mxu0 0.0
    %2751 = vmatprep.subr.mxu0 0.0
    %2752 = vmatpush1.msra.mxu0 0.0
    %2753 = vmatprep.subr.mxu0 0.0
    %2754 = vmatpush1.msra.mxu0 0.0
    %2755 = vmatprep.subr.mxu0 0.0
    %2756 = vmatpush1.msra.mxu0 0.0
    %2757 = vmatprep.subr.mxu0 0.0
    %2758 = vmatpush1.msra.mxu0 0.0
    %2759 = vmatprep.subr.mxu0 0.0
    %2760 = vmatpush1.msra.mxu0 0.0
    %2761 = vmatprep.subr.mxu0 0.0
    %2762 = vmatpush1.msra.mxu0 0.0
    %2763 = vmatprep.subr.mxu0 0.0
    %2764 = vmatpush1.msra.mxu0 0.0
    %2765 = vmatprep.subr.mxu0 0.0
    %2766 = vmatpush1.msra.mxu0 0.0
    %2767 = vmatprep.subr.mxu0 0.0
    %2768 = vmatpush1.msra.mxu0 0.0
    %2769 = vmatprep.subr.mxu0 0.0
    %2770 = vmatpush1.msra.mxu0 0.0
    %2771 = vmatprep.subr.mxu0 0.0
    %2772 = vmatpush1.msra.mxu0 0.0
    %2773 = vmatprep.subr.mxu0 0.0
    %2774 = vmatpush1.msra.mxu0 0.0
    %2775 = vmatprep.subr.mxu0 0.0
    %2776 = vmatpush1.msra.mxu0 0.0
    %2777 = vmatprep.subr.mxu0 0.0
    %2778 = vmatpush1.msra.mxu0 0.0
    %2779 = vmatprep.subr.mxu0 0.0
    %2780 = vmatpush1.msra.mxu0 0.0
    %2781 = vmatprep.subr.mxu0 0.0
    %2782 = vmatpush1.msra.mxu0 0.0
    %2783 = vmatprep.subr.mxu0 0.0
    %2784 = vmatpush1.msra.mxu0 0.0
    %2785 = vmatprep.subr.mxu0 0.0
    %2786 = vmatpush1.msra.mxu0 0.0
    %2787 = vmatprep.subr.mxu0 0.0
    %2788 = vmatpush1.msra.mxu0 0.0
    %2789 = vmatprep.subr.mxu0 0.0
    %2790 = vmatpush1.msra.mxu0 0.0
    %2791 = vmatprep.subr.mxu0 0.0
    %2792 = vmatpush1.msra.mxu0 0.0
    %2793 = vmatprep.mubr.f32.mxu0 0.0
    %2794 = vmatmul.mubr.f32.gmra.mrb[0].mxu0 %v2727
    %v2795 = vpop.f32.mrb[0].mxu0
    %v2796 = vadd.f32 0.0, %v2795
    %v2797 = vpop.f32.mrb[0].mxu0
    %2798 = vdwg.mxu0
    %v2799 = vlog2.pop %v2796
    %v2800 = vmul.f32 %v2799, 0.6931472
    %v2801 = vadd.f32 %v2722, %v2800
    %v2802 = vadd.f32 %v2801, %v2630
    %v2803 = vsel %vm2718, %v2802, %v2623
    %2804 = vset.pattern.permute.xlu0 4
    %2805 = vperm.xlu0 %2804, %v2237
    %v2806 = vpop.permute.xlu0 %2805
    %vm2807 = vcmp.eq.s32.totalorder %v2806, %v2242
    %v2808 = vsel %vm2807, 1, 0
    %v2809 = vcvt.s32.f32 %v2808
    %v2810 = vrot.slane %v2228, 4
    %v2813 = vsel %vm2266, %v2629, 0
    %2815 = vmatprep.subr.mxu0 0.0
    %2816 = vmatpush1.msra.mxu0 %v2272
    %2817 = vmatprep.subr.mxu0 0.0
    %2818 = vmatpush1.msra.mxu0 0.0
    %2819 = vmatprep.subr.mxu0 0.0
    %2820 = vmatpush1.msra.mxu0 0.0
    %2821 = vmatprep.subr.mxu0 0.0
    %2822 = vmatpush1.msra.mxu0 0.0
    %2823 = vmatprep.subr.mxu0 0.0
    %2824 = vmatpush1.msra.mxu0 0.0
    %2825 = vmatprep.subr.mxu0 0.0
    %2826 = vmatpush1.msra.mxu0 0.0
    %2827 = vmatprep.subr.mxu0 0.0
    %2828 = vmatpush1.msra.mxu0 0.0
    %2829 = vmatprep.subr.mxu0 0.0
    %2830 = vmatpush1.msra.mxu0 0.0
    %2831 = vmatprep.subr.mxu0 0.0
    %2832 = vmatpush1.msra.mxu0 0.0
    %2833 = vmatprep.subr.mxu0 0.0
    %2834 = vmatpush1.msra.mxu0 0.0
    %2835 = vmatprep.subr.mxu0 0.0
    %2836 = vmatpush1.msra.mxu0 0.0
    %2837 = vmatprep.subr.mxu0 0.0
    %2838 = vmatpush1.msra.mxu0 0.0
    %2839 = vmatprep.subr.mxu0 0.0
    %2840 = vmatpush1.msra.mxu0 0.0
    %2841 = vmatprep.subr.mxu0 0.0
    %2842 = vmatpush1.msra.mxu0 0.0
    %2843 = vmatprep.subr.mxu0 0.0
    %2844 = vmatpush1.msra.mxu0 0.0
    %2845 = vmatprep.subr.mxu0 0.0
    %2846 = vmatpush1.msra.mxu0 0.0
    %2847 = vmatprep.subr.mxu0 0.0
    %2848 = vmatpush1.msra.mxu0 0.0
    %2849 = vmatprep.subr.mxu0 0.0
    %2850 = vmatpush1.msra.mxu0 0.0
    %2851 = vmatprep.subr.mxu0 0.0
    %2852 = vmatpush1.msra.mxu0 0.0
    %2853 = vmatprep.subr.mxu0 0.0
    %2854 = vmatpush1.msra.mxu0 0.0
    %2855 = vmatprep.subr.mxu0 0.0
    %2856 = vmatpush1.msra.mxu0 0.0
    %2857 = vmatprep.subr.mxu0 0.0
    %2858 = vmatpush1.msra.mxu0 0.0
    %2859 = vmatprep.subr.mxu0 0.0
    %2860 = vmatpush1.msra.mxu0 0.0
    %2861 = vmatprep.subr.mxu0 0.0
    %2862 = vmatpush1.msra.mxu0 0.0
    %2863 = vmatprep.subr.mxu0 0.0
    %2864 = vmatpush1.msra.mxu0 0.0
    %2865 = vmatprep.subr.mxu0 0.0
    %2866 = vmatpush1.msra.mxu0 0.0
    %2867 = vmatprep.subr.mxu0 0.0
    %2868 = vmatpush1.msra.mxu0 0.0
    %2869 = vmatprep.subr.mxu0 0.0
    %2870 = vmatpush1.msra.mxu0 0.0
    %2871 = vmatprep.subr.mxu0 0.0
    %2872 = vmatpush1.msra.mxu0 0.0
    %2873 = vmatprep.subr.mxu0 0.0
    %2874 = vmatpush1.msra.mxu0 0.0
    %2875 = vmatprep.subr.mxu0 0.0
    %2876 = vmatpush1.msra.mxu0 0.0
    %2877 = vmatprep.subr.mxu0 0.0
    %2878 = vmatpush1.msra.mxu0 0.0
    %2879 = vmatprep.mubr.f32.mxu0 0.0
    %2880 = vmatmul.mubr.f32.gmra.mrb[0].mxu0 %v2813
    %v2881 = vpop.f32.mrb[0].mxu0
    %v2882 = vadd.f32 %v2810, %v2881
    %v2883 = vpop.f32.mrb[0].mxu0
    %2884 = vdwg.mxu0
    %v2885 = vmul.f32 %v2882, %v2809
    %v2886 = vsel %vm2253, %v2885, 0.0
    %2887 = vadd.xlane.f32.xlu0 %v2886
    %v2888 = vpop.xlane.xlu0 %2887
    %v2889 = vmul.f32 %v2236, %v2888
    %2891 = vrot.lane.b32.xlu0 %v2889, 125
    %v2892 = vpop.permute.xlu0 %2891
    %v2894 = vadd.f32 %v2714, %v2892
    %2895 = vset.pattern.permute.xlu0 4
    %2896 = vperm.xlu0 %2895, %v2351
    %v2897 = vpop.permute.xlu0 %2896
    %vm2898 = vcmp.eq.s32.totalorder %v2897, 1
    %v2899 = vsel %vm2898, %v2809, %v2719
    %v2900 = vsel %vm2253, %v2803, -inf
    %2901 = vmax.xlane.f32.xlu0 %v2900
    %v2902 = vpop.xlane.xlu0 %2901
    %v2903 = vsub.f32 %v2803, %v2902
    %v2904 = vmul.f32 %v2903, 1.442695
    %v2905 = vpow.pop %v2904
    %v2907 = vsel %vm2266, %v2905, 0
    %2909 = vmatprep.subr.mxu0 0.0
    %2910 = vmatpush1.msra.mxu0 %v2367
    %2911 = vmatprep.subr.mxu0 0.0
    %2912 = vmatpush1.msra.mxu0 0.0
    %2913 = vmatprep.subr.mxu0 0.0
    %2914 = vmatpush1.msra.mxu0 0.0
    %2915 = vmatprep.subr.mxu0 0.0
    %2916 = vmatpush1.msra.mxu0 0.0
    %2917 = vmatprep.subr.mxu0 0.0
    %2918 = vmatpush1.msra.mxu0 0.0
    %2919 = vmatprep.subr.mxu0 0.0
    %2920 = vmatpush1.msra.mxu0 0.0
    %2921 = vmatprep.subr.mxu0 0.0
    %2922 = vmatpush1.msra.mxu0 0.0
    %2923 = vmatprep.subr.mxu0 0.0
    %2924 = vmatpush1.msra.mxu0 0.0
    %2925 = vmatprep.subr.mxu0 0.0
    %2926 = vmatpush1.msra.mxu0 0.0
    %2927 = vmatprep.subr.mxu0 0.0
    %2928 = vmatpush1.msra.mxu0 0.0
    %2929 = vmatprep.subr.mxu0 0.0
    %2930 = vmatpush1.msra.mxu0 0.0
    %2931 = vmatprep.subr.mxu0 0.0
    %2932 = vmatpush1.msra.mxu0 0.0
    %2933 = vmatprep.subr.mxu0 0.0
    %2934 = vmatpush1.msra.mxu0 0.0
    %2935 = vmatprep.subr.mxu0 0.0
    %2936 = vmatpush1.msra.mxu0 0.0
    %2937 = vmatprep.subr.mxu0 0.0
    %2938 = vmatpush1.msra.mxu0 0.0
    %2939 = vmatprep.subr.mxu0 0.0
    %2940 = vmatpush1.msra.mxu0 0.0
    %2941 = vmatprep.subr.mxu0 0.0
    %2942 = vmatpush1.msra.mxu0 0.0
    %2943 = vmatprep.subr.mxu0 0.0
    %2944 = vmatpush1.msra.mxu0 0.0
    %2945 = vmatprep.subr.mxu0 0.0
    %2946 = vmatpush1.msra.mxu0 0.0
    %2947 = vmatprep.subr.mxu0 0.0
    %2948 = vmatpush1.msra.mxu0 0.0
    %2949 = vmatprep.subr.mxu0 0.0
    %2950 = vmatpush1.msra.mxu0 0.0
    %2951 = vmatprep.subr.mxu0 0.0
    %2952 = vmatpush1.msra.mxu0 0.0
    %2953 = vmatprep.subr.mxu0 0.0
    %2954 = vmatpush1.msra.mxu0 0.0
    %2955 = vmatprep.subr.mxu0 0.0
    %2956 = vmatpush1.msra.mxu0 0.0
    %2957 = vmatprep.subr.mxu0 0.0
    %2958 = vmatpush1.msra.mxu0 0.0
    %2959 = vmatprep.subr.mxu0 0.0
    %2960 = vmatpush1.msra.mxu0 0.0
    %2961 = vmatprep.subr.mxu0 0.0
    %2962 = vmatpush1.msra.mxu0 0.0
    %2963 = vmatprep.subr.mxu0 0.0
    %2964 = vmatpush1.msra.mxu0 0.0
    %2965 = vmatprep.subr.mxu0 0.0
    %2966 = vmatpush1.msra.mxu0 0.0
    %2967 = vmatprep.subr.mxu0 0.0
    %2968 = vmatpush1.msra.mxu0 0.0
    %2969 = vmatprep.subr.mxu0 0.0
    %2970 = vmatpush1.msra.mxu0 0.0
    %2971 = vmatprep.subr.mxu0 0.0
    %2972 = vmatpush1.msra.mxu0 0.0
    %2973 = vmatprep.mubr.f32.mxu0 0.0
    %2974 = vmatmul.mubr.f32.gmra.mrb[0].mxu0 %v2907
    %v2975 = vpop.f32.mrb[0].mxu0
    %v2976 = vadd.f32 0.0, %v2975
    %v2977 = vpop.f32.mrb[0].mxu0
    %2978 = vdwg.mxu0
    %v2979 = vlog2.pop %v2976
    %v2980 = vmul.f32 %v2979, 0.6931472
    %v2981 = vadd.f32 %v2902, %v2980
    %v2982 = vadd.f32 %v2981, %v2810
    %v2983 = vsel %vm2898, %v2982, %v2803
    %2984 = vset.pattern.permute.xlu0 5
    %2985 = vperm.xlu0 %2984, %v2237
    %v2986 = vpop.permute.xlu0 %2985
    %vm2987 = vcmp.eq.s32.totalorder %v2986, %v2242
    %v2988 = vsel %vm2987, 1, 0
    %v2989 = vcvt.s32.f32 %v2988
    %v2990 = vrot.slane %v2228, 5
    %v2993 = vsel %vm2266, %v2809, 0
    %2995 = vmatprep.subr.mxu0 0.0
    %2996 = vmatpush1.msra.mxu0 %v2272
    %2997 = vmatprep.subr.mxu0 0.0
    %2998 = vmatpush1.msra.mxu0 0.0
    %2999 = vmatprep.subr.mxu0 0.0
    %3000 = vmatpush1.msra.mxu0 0.0
    %3001 = vmatprep.subr.mxu0 0.0
    %3002 = vmatpush1.msra.mxu0 0.0
    %3003 = vmatprep.subr.mxu0 0.0
    %3004 = vmatpush1.msra.mxu0 0.0
    %3005 = vmatprep.subr.mxu0 0.0
    %3006 = vmatpush1.msra.mxu0 0.0
    %3007 = vmatprep.subr.mxu0 0.0
    %3008 = vmatpush1.msra.mxu0 0.0
    %3009 = vmatprep.subr.mxu0 0.0
    %3010 = vmatpush1.msra.mxu0 0.0
    %3011 = vmatprep.subr.mxu0 0.0
    %3012 = vmatpush1.msra.mxu0 0.0
    %3013 = vmatprep.subr.mxu0 0.0
    %3014 = vmatpush1.msra.mxu0 0.0
    %3015 = vmatprep.subr.mxu0 0.0
    %3016 = vmatpush1.msra.mxu0 0.0
    %3017 = vmatprep.subr.mxu0 0.0
    %3018 = vmatpush1.msra.mxu0 0.0
    %3019 = vmatprep.subr.mxu0 0.0
    %3020 = vmatpush1.msra.mxu0 0.0
    %3021 = vmatprep.subr.mxu0 0.0
    %3022 = vmatpush1.msra.mxu0 0.0
    %3023 = vmatprep.subr.mxu0 0.0
    %3024 = vmatpush1.msra.mxu0 0.0
    %3025 = vmatprep.subr.mxu0 0.0
    %3026 = vmatpush1.msra.mxu0 0.0
    %3027 = vmatprep.subr.mxu0 0.0
    %3028 = vmatpush1.msra.mxu0 0.0
    %3029 = vmatprep.subr.mxu0 0.0
    %3030 = vmatpush1.msra.mxu0 0.0
    %3031 = vmatprep.subr.mxu0 0.0
    %3032 = vmatpush1.msra.mxu0 0.0
    %3033 = vmatprep.subr.mxu0 0.0
    %3034 = vmatpush1.msra.mxu0 0.0
    %3035 = vmatprep.subr.mxu0 0.0
    %3036 = vmatpush1.msra.mxu0 0.0
    %3037 = vmatprep.subr.mxu0 0.0
    %3038 = vmatpush1.msra.mxu0 0.0
    %3039 = vmatprep.subr.mxu0 0.0
    %3040 = vmatpush1.msra.mxu0 0.0
    %3041 = vmatprep.subr.mxu0 0.0
    %3042 = vmatpush1.msra.mxu0 0.0
    %3043 = vmatprep.subr.mxu0 0.0
    %3044 = vmatpush1.msra.mxu0 0.0
    %3045 = vmatprep.subr.mxu0 0.0
    %3046 = vmatpush1.msra.mxu0 0.0
    %3047 = vmatprep.subr.mxu0 0.0
    %3048 = vmatpush1.msra.mxu0 0.0
    %3049 = vmatprep.subr.mxu0 0.0
    %3050 = vmatpush1.msra.mxu0 0.0
    %3051 = vmatprep.subr.mxu0 0.0
    %3052 = vmatpush1.msra.mxu0 0.0
    %3053 = vmatprep.subr.mxu0 0.0
    %3054 = vmatpush1.msra.mxu0 0.0
    %3055 = vmatprep.subr.mxu0 0.0
    %3056 = vmatpush1.msra.mxu0 0.0
    %3057 = vmatprep.subr.mxu0 0.0
    %3058 = vmatpush1.msra.mxu0 0.0
    %3059 = vmatprep.mubr.f32.mxu0 0.0
    %3060 = vmatmul.mubr.f32.gmra.mrb[0].mxu0 %v2993
    %v3061 = vpop.f32.mrb[0].mxu0
    %v3062 = vadd.f32 %v2990, %v3061
    %v3063 = vpop.f32.mrb[0].mxu0
    %3064 = vdwg.mxu0
    %v3065 = vmul.f32 %v3062, %v2989
    %v3066 = vsel %vm2253, %v3065, 0.0
    %3067 = vadd.xlane.f32.xlu0 %v3066
    %v3068 = vpop.xlane.xlu0 %3067
    %v3069 = vmul.f32 %v2236, %v3068
    %3071 = vrot.lane.b32.xlu0 %v3069, 124
    %v3072 = vpop.permute.xlu0 %3071
    %v3074 = vadd.f32 %v2894, %v3072
    %3075 = vset.pattern.permute.xlu0 5
    %3076 = vperm.xlu0 %3075, %v2351
    %v3077 = vpop.permute.xlu0 %3076
    %vm3078 = vcmp.eq.s32.totalorder %v3077, 1
    %v3079 = vsel %vm3078, %v2989, %v2899
    %v3080 = vsel %vm2253, %v2983, -inf
    %3081 = vmax.xlane.f32.xlu0 %v3080
    %v3082 = vpop.xlane.xlu0 %3081
    %v3083 = vsub.f32 %v2983, %v3082
    %v3084 = vmul.f32 %v3083, 1.442695
    %v3085 = vpow.pop %v3084
    %v3087 = vsel %vm2266, %v3085, 0
    %3089 = vmatprep.subr.mxu0 0.0
    %3090 = vmatpush1.msra.mxu0 %v2367
    %3091 = vmatprep.subr.mxu0 0.0
    %3092 = vmatpush1.msra.mxu0 0.0
    %3093 = vmatprep.subr.mxu0 0.0
    %3094 = vmatpush1.msra.mxu0 0.0
    %3095 = vmatprep.subr.mxu0 0.0
    %3096 = vmatpush1.msra.mxu0 0.0
    %3097 = vmatprep.subr.mxu0 0.0
    %3098 = vmatpush1.msra.mxu0 0.0
    %3099 = vmatprep.subr.mxu0 0.0
    %3100 = vmatpush1.msra.mxu0 0.0
    %3101 = vmatprep.subr.mxu0 0.0
    %3102 = vmatpush1.msra.mxu0 0.0
    %3103 = vmatprep.subr.mxu0 0.0
    %3104 = vmatpush1.msra.mxu0 0.0
    %3105 = vmatprep.subr.mxu0 0.0
    %3106 = vmatpush1.msra.mxu0 0.0
    %3107 = vmatprep.subr.mxu0 0.0
    %3108 = vmatpush1.msra.mxu0 0.0
    %3109 = vmatprep.subr.mxu0 0.0
    %3110 = vmatpush1.msra.mxu0 0.0
    %3111 = vmatprep.subr.mxu0 0.0
    %3112 = vmatpush1.msra.mxu0 0.0
    %3113 = vmatprep.subr.mxu0 0.0
    %3114 = vmatpush1.msra.mxu0 0.0
    %3115 = vmatprep.subr.mxu0 0.0
    %3116 = vmatpush1.msra.mxu0 0.0
    %3117 = vmatprep.subr.mxu0 0.0
    %3118 = vmatpush1.msra.mxu0 0.0
    %3119 = vmatprep.subr.mxu0 0.0
    %3120 = vmatpush1.msra.mxu0 0.0
    %3121 = vmatprep.subr.mxu0 0.0
    %3122 = vmatpush1.msra.mxu0 0.0
    %3123 = vmatprep.subr.mxu0 0.0
    %3124 = vmatpush1.msra.mxu0 0.0
    %3125 = vmatprep.subr.mxu0 0.0
    %3126 = vmatpush1.msra.mxu0 0.0
    %3127 = vmatprep.subr.mxu0 0.0
    %3128 = vmatpush1.msra.mxu0 0.0
    %3129 = vmatprep.subr.mxu0 0.0
    %3130 = vmatpush1.msra.mxu0 0.0
    %3131 = vmatprep.subr.mxu0 0.0
    %3132 = vmatpush1.msra.mxu0 0.0
    %3133 = vmatprep.subr.mxu0 0.0
    %3134 = vmatpush1.msra.mxu0 0.0
    %3135 = vmatprep.subr.mxu0 0.0
    %3136 = vmatpush1.msra.mxu0 0.0
    %3137 = vmatprep.subr.mxu0 0.0
    %3138 = vmatpush1.msra.mxu0 0.0
    %3139 = vmatprep.subr.mxu0 0.0
    %3140 = vmatpush1.msra.mxu0 0.0
    %3141 = vmatprep.subr.mxu0 0.0
    %3142 = vmatpush1.msra.mxu0 0.0
    %3143 = vmatprep.subr.mxu0 0.0
    %3144 = vmatpush1.msra.mxu0 0.0
    %3145 = vmatprep.subr.mxu0 0.0
    %3146 = vmatpush1.msra.mxu0 0.0
    %3147 = vmatprep.subr.mxu0 0.0
    %3148 = vmatpush1.msra.mxu0 0.0
    %3149 = vmatprep.subr.mxu0 0.0
    %3150 = vmatpush1.msra.mxu0 0.0
    %3151 = vmatprep.subr.mxu0 0.0
    %3152 = vmatpush1.msra.mxu0 0.0
    %3153 = vmatprep.mubr.f32.mxu0 0.0
    %3154 = vmatmul.mubr.f32.gmra.mrb[0].mxu0 %v3087
    %v3155 = vpop.f32.mrb[0].mxu0
    %v3156 = vadd.f32 0.0, %v3155
    %v3157 = vpop.f32.mrb[0].mxu0
    %3158 = vdwg.mxu0
    %v3159 = vlog2.pop %v3156
    %v3160 = vmul.f32 %v3159, 0.6931472
    %v3161 = vadd.f32 %v3082, %v3160
    %v3162 = vadd.f32 %v3161, %v2990
    %v3163 = vsel %vm3078, %v3162, %v2983
    %3164 = vset.pattern.permute.xlu0 6
    %3165 = vperm.xlu0 %3164, %v2237
    %v3166 = vpop.permute.xlu0 %3165
    %vm3167 = vcmp.eq.s32.totalorder %v3166, %v2242
    %v3168 = vsel %vm3167, 1, 0
    %v3169 = vcvt.s32.f32 %v3168
    %v3170 = vrot.slane %v2228, 6
    %v3173 = vsel %vm2266, %v2989, 0
    %3175 = vmatprep.subr.mxu0 0.0
    %3176 = vmatpush1.msra.mxu0 %v2272
    %3177 = vmatprep.subr.mxu0 0.0
    %3178 = vmatpush1.msra.mxu0 0.0
    %3179 = vmatprep.subr.mxu0 0.0
    %3180 = vmatpush1.msra.mxu0 0.0
    %3181 = vmatprep.subr.mxu0 0.0
    %3182 = vmatpush1.msra.mxu0 0.0
    %3183 = vmatprep.subr.mxu0 0.0
    %3184 = vmatpush1.msra.mxu0 0.0
    %3185 = vmatprep.subr.mxu0 0.0
    %3186 = vmatpush1.msra.mxu0 0.0
    %3187 = vmatprep.subr.mxu0 0.0
    %3188 = vmatpush1.msra.mxu0 0.0
    %3189 = vmatprep.subr.mxu0 0.0
    %3190 = vmatpush1.msra.mxu0 0.0
    %3191 = vmatprep.subr.mxu0 0.0
    %3192 = vmatpush1.msra.mxu0 0.0
    %3193 = vmatprep.subr.mxu0 0.0
    %3194 = vmatpush1.msra.mxu0 0.0
    %3195 = vmatprep.subr.mxu0 0.0
    %3196 = vmatpush1.msra.mxu0 0.0
    %3197 = vmatprep.subr.mxu0 0.0
    %3198 = vmatpush1.msra.mxu0 0.0
    %3199 = vmatprep.subr.mxu0 0.0
    %3200 = vmatpush1.msra.mxu0 0.0
    %3201 = vmatprep.subr.mxu0 0.0
    %3202 = vmatpush1.msra.mxu0 0.0
    %3203 = vmatprep.subr.mxu0 0.0
    %3204 = vmatpush1.msra.mxu0 0.0
    %3205 = vmatprep.subr.mxu0 0.0
    %3206 = vmatpush1.msra.mxu0 0.0
    %3207 = vmatprep.subr.mxu0 0.0
    %3208 = vmatpush1.msra.mxu0 0.0
    %3209 = vmatprep.subr.mxu0 0.0
    %3210 = vmatpush1.msra.mxu0 0.0
    %3211 = vmatprep.subr.mxu0 0.0
    %3212 = vmatpush1.msra.mxu0 0.0
    %3213 = vmatprep.subr.mxu0 0.0
    %3214 = vmatpush1.msra.mxu0 0.0
    %3215 = vmatprep.subr.mxu0 0.0
    %3216 = vmatpush1.msra.mxu0 0.0
    %3217 = vmatprep.subr.mxu0 0.0
    %3218 = vmatpush1.msra.mxu0 0.0
    %3219 = vmatprep.subr.mxu0 0.0
    %3220 = vmatpush1.msra.mxu0 0.0
    %3221 = vmatprep.subr.mxu0 0.0
    %3222 = vmatpush1.msra.mxu0 0.0
    %3223 = vmatprep.subr.mxu0 0.0
    %3224 = vmatpush1.msra.mxu0 0.0
    %3225 = vmatprep.subr.mxu0 0.0
    %3226 = vmatpush1.msra.mxu0 0.0
    %3227 = vmatprep.subr.mxu0 0.0
    %3228 = vmatpush1.msra.mxu0 0.0
    %3229 = vmatprep.subr.mxu0 0.0
    %3230 = vmatpush1.msra.mxu0 0.0
    %3231 = vmatprep.subr.mxu0 0.0
    %3232 = vmatpush1.msra.mxu0 0.0
    %3233 = vmatprep.subr.mxu0 0.0
    %3234 = vmatpush1.msra.mxu0 0.0
    %3235 = vmatprep.subr.mxu0 0.0
    %3236 = vmatpush1.msra.mxu0 0.0
    %3237 = vmatprep.subr.mxu0 0.0
    %3238 = vmatpush1.msra.mxu0 0.0
    %3239 = vmatprep.mubr.f32.mxu0 0.0
    %3240 = vmatmul.mubr.f32.gmra.mrb[0].mxu0 %v3173
    %v3241 = vpop.f32.mrb[0].mxu0
    %v3242 = vadd.f32 %v3170, %v3241
    %v3243 = vpop.f32.mrb[0].mxu0
    %3244 = vdwg.mxu0
    %v3245 = vmul.f32 %v3242, %v3169
    %v3246 = vsel %vm2253, %v3245, 0.0
    %3247 = vadd.xlane.f32.xlu0 %v3246
    %v3248 = vpop.xlane.xlu0 %3247
    %v3249 = vmul.f32 %v2236, %v3248
    %3251 = vrot.lane.b32.xlu0 %v3249, 123
    %v3252 = vpop.permute.xlu0 %3251
    %v3254 = vadd.f32 %v3074, %v3252
    %3255 = vset.pattern.permute.xlu0 6
    %3256 = vperm.xlu0 %3255, %v2351
    %v3257 = vpop.permute.xlu0 %3256
    %vm3258 = vcmp.eq.s32.totalorder %v3257, 1
    %v3259 = vsel %vm3258, %v3169, %v3079
    %v3260 = vsel %vm2253, %v3163, -inf
    %3261 = vmax.xlane.f32.xlu0 %v3260
    %v3262 = vpop.xlane.xlu0 %3261
    %v3263 = vsub.f32 %v3163, %v3262
    %v3264 = vmul.f32 %v3263, 1.442695
    %v3265 = vpow.pop %v3264
    %v3267 = vsel %vm2266, %v3265, 0
    %3269 = vmatprep.subr.mxu0 0.0
    %3270 = vmatpush1.msra.mxu0 %v2367
    %3271 = vmatprep.subr.mxu0 0.0
    %3272 = vmatpush1.msra.mxu0 0.0
    %3273 = vmatprep.subr.mxu0 0.0
    %3274 = vmatpush1.msra.mxu0 0.0
    %3275 = vmatprep.subr.mxu0 0.0
    %3276 = vmatpush1.msra.mxu0 0.0
    %3277 = vmatprep.subr.mxu0 0.0
    %3278 = vmatpush1.msra.mxu0 0.0
    %3279 = vmatprep.subr.mxu0 0.0
    %3280 = vmatpush1.msra.mxu0 0.0
    %3281 = vmatprep.subr.mxu0 0.0
    %3282 = vmatpush1.msra.mxu0 0.0
    %3283 = vmatprep.subr.mxu0 0.0
    %3284 = vmatpush1.msra.mxu0 0.0
    %3285 = vmatprep.subr.mxu0 0.0
    %3286 = vmatpush1.msra.mxu0 0.0
    %3287 = vmatprep.subr.mxu0 0.0
    %3288 = vmatpush1.msra.mxu0 0.0
    %3289 = vmatprep.subr.mxu0 0.0
    %3290 = vmatpush1.msra.mxu0 0.0
    %3291 = vmatprep.subr.mxu0 0.0
    %3292 = vmatpush1.msra.mxu0 0.0
    %3293 = vmatprep.subr.mxu0 0.0
    %3294 = vmatpush1.msra.mxu0 0.0
    %3295 = vmatprep.subr.mxu0 0.0
    %3296 = vmatpush1.msra.mxu0 0.0
    %3297 = vmatprep.subr.mxu0 0.0
    %3298 = vmatpush1.msra.mxu0 0.0
    %3299 = vmatprep.subr.mxu0 0.0
    %3300 = vmatpush1.msra.mxu0 0.0
    %3301 = vmatprep.subr.mxu0 0.0
    %3302 = vmatpush1.msra.mxu0 0.0
    %3303 = vmatprep.subr.mxu0 0.0
    %3304 = vmatpush1.msra.mxu0 0.0
    %3305 = vmatprep.subr.mxu0 0.0
    %3306 = vmatpush1.msra.mxu0 0.0
    %3307 = vmatprep.subr.mxu0 0.0
    %3308 = vmatpush1.msra.mxu0 0.0
    %3309 = vmatprep.subr.mxu0 0.0
    %3310 = vmatpush1.msra.mxu0 0.0
    %3311 = vmatprep.subr.mxu0 0.0
    %3312 = vmatpush1.msra.mxu0 0.0
    %3313 = vmatprep.subr.mxu0 0.0
    %3314 = vmatpush1.msra.mxu0 0.0
    %3315 = vmatprep.subr.mxu0 0.0
    %3316 = vmatpush1.msra.mxu0 0.0
    %3317 = vmatprep.subr.mxu0 0.0
    %3318 = vmatpush1.msra.mxu0 0.0
    %3319 = vmatprep.subr.mxu0 0.0
    %3320 = vmatpush1.msra.mxu0 0.0
    %3321 = vmatprep.subr.mxu0 0.0
    %3322 = vmatpush1.msra.mxu0 0.0
    %3323 = vmatprep.subr.mxu0 0.0
    %3324 = vmatpush1.msra.mxu0 0.0
    %3325 = vmatprep.subr.mxu0 0.0
    %3326 = vmatpush1.msra.mxu0 0.0
    %3327 = vmatprep.subr.mxu0 0.0
    %3328 = vmatpush1.msra.mxu0 0.0
    %3329 = vmatprep.subr.mxu0 0.0
    %3330 = vmatpush1.msra.mxu0 0.0
    %3331 = vmatprep.subr.mxu0 0.0
    %3332 = vmatpush1.msra.mxu0 0.0
    %3333 = vmatprep.mubr.f32.mxu0 0.0
    %3334 = vmatmul.mubr.f32.gmra.mrb[0].mxu0 %v3267
    %v3335 = vpop.f32.mrb[0].mxu0
    %v3336 = vadd.f32 0.0, %v3335
    %v3337 = vpop.f32.mrb[0].mxu0
    %3338 = vdwg.mxu0
    %v3339 = vlog2.pop %v3336
    %v3340 = vmul.f32 %v3339, 0.6931472
    %v3341 = vadd.f32 %v3262, %v3340
    %v3342 = vadd.f32 %v3341, %v3170
    %v3343 = vsel %vm3258, %v3342, %v3163
    %3344 = vset.pattern.permute.xlu0 7
    %3345 = vperm.xlu0 %3344, %v2237
    %v3346 = vpop.permute.xlu0 %3345
    %vm3347 = vcmp.eq.s32.totalorder %v3346, %v2242
    %v3348 = vsel %vm3347, 1, 0
    %v3349 = vcvt.s32.f32 %v3348
    %v3350 = vrot.slane %v2228, 7
    %v3353 = vsel %vm2266, %v3169, 0
    %3355 = vmatprep.subr.mxu0 0.0
    %3356 = vmatpush1.msra.mxu0 %v2272
    %3357 = vmatprep.subr.mxu0 0.0
    %3358 = vmatpush1.msra.mxu0 0.0
    %3359 = vmatprep.subr.mxu0 0.0
    %3360 = vmatpush1.msra.mxu0 0.0
    %3361 = vmatprep.subr.mxu0 0.0
    %3362 = vmatpush1.msra.mxu0 0.0
    %3363 = vmatprep.subr.mxu0 0.0
    %3364 = vmatpush1.msra.mxu0 0.0
    %3365 = vmatprep.subr.mxu0 0.0
    %3366 = vmatpush1.msra.mxu0 0.0
    %3367 = vmatprep.subr.mxu0 0.0
    %3368 = vmatpush1.msra.mxu0 0.0
    %3369 = vmatprep.subr.mxu0 0.0
    %3370 = vmatpush1.msra.mxu0 0.0
    %3371 = vmatprep.subr.mxu0 0.0
    %3372 = vmatpush1.msra.mxu0 0.0
    %3373 = vmatprep.subr.mxu0 0.0
    %3374 = vmatpush1.msra.mxu0 0.0
    %3375 = vmatprep.subr.mxu0 0.0
    %3376 = vmatpush1.msra.mxu0 0.0
    %3377 = vmatprep.subr.mxu0 0.0
    %3378 = vmatpush1.msra.mxu0 0.0
    %3379 = vmatprep.subr.mxu0 0.0
    %3380 = vmatpush1.msra.mxu0 0.0
    %3381 = vmatprep.subr.mxu0 0.0
    %3382 = vmatpush1.msra.mxu0 0.0
    %3383 = vmatprep.subr.mxu0 0.0
    %3384 = vmatpush1.msra.mxu0 0.0
    %3385 = vmatprep.subr.mxu0 0.0
    %3386 = vmatpush1.msra.mxu0 0.0
    %3387 = vmatprep.subr.mxu0 0.0
    %3388 = vmatpush1.msra.mxu0 0.0
    %3389 = vmatprep.subr.mxu0 0.0
    %3390 = vmatpush1.msra.mxu0 0.0
    %3391 = vmatprep.subr.mxu0 0.0
    %3392 = vmatpush1.msra.mxu0 0.0
    %3393 = vmatprep.subr.mxu0 0.0
    %3394 = vmatpush1.msra.mxu0 0.0
    %3395 = vmatprep.subr.mxu0 0.0
    %3396 = vmatpush1.msra.mxu0 0.0
    %3397 = vmatprep.subr.mxu0 0.0
    %3398 = vmatpush1.msra.mxu0 0.0
    %3399 = vmatprep.subr.mxu0 0.0
    %3400 = vmatpush1.msra.mxu0 0.0
    %3401 = vmatprep.subr.mxu0 0.0
    %3402 = vmatpush1.msra.mxu0 0.0
    %3403 = vmatprep.subr.mxu0 0.0
    %3404 = vmatpush1.msra.mxu0 0.0
    %3405 = vmatprep.subr.mxu0 0.0
    %3406 = vmatpush1.msra.mxu0 0.0
    %3407 = vmatprep.subr.mxu0 0.0
    %3408 = vmatpush1.msra.mxu0 0.0
    %3409 = vmatprep.subr.mxu0 0.0
    %3410 = vmatpush1.msra.mxu0 0.0
    %3411 = vmatprep.subr.mxu0 0.0
    %3412 = vmatpush1.msra.mxu0 0.0
    %3413 = vmatprep.subr.mxu0 0.0
    %3414 = vmatpush1.msra.mxu0 0.0
    %3415 = vmatprep.subr.mxu0 0.0
    %3416 = vmatpush1.msra.mxu0 0.0
    %3417 = vmatprep.subr.mxu0 0.0
    %3418 = vmatpush1.msra.mxu0 0.0
    %3419 = vmatprep.mubr.f32.mxu0 0.0
    %3420 = vmatmul.mubr.f32.gmra.mrb[0].mxu0 %v3353
    %v3421 = vpop.f32.mrb[0].mxu0
    %v3422 = vadd.f32 %v3350, %v3421
    %v3423 = vpop.f32.mrb[0].mxu0
    %3424 = vdwg.mxu0
    %v3425 = vmul.f32 %v3422, %v3349
    %v3426 = vsel %vm2253, %v3425, 0.0
    %3427 = vadd.xlane.f32.xlu0 %v3426
    %v3428 = vpop.xlane.xlu0 %3427
    %v3429 = vmul.f32 %v2236, %v3428
    %3431 = vrot.lane.b32.xlu0 %v3429, 122
    %v3432 = vpop.permute.xlu0 %3431
    %v3434 = vadd.f32 %v3254, %v3432
    %3435 = vset.pattern.permute.xlu0 7
    %3436 = vperm.xlu0 %3435, %v2351
    %v3437 = vpop.permute.xlu0 %3436
    %vm3438 = vcmp.eq.s32.totalorder %v3437, 1
    %v3439 = vsel %vm3438, %v3349, %v3259
    %v3440 = vsel %vm2253, %v3343, -inf
    %3441 = vmax.xlane.f32.xlu0 %v3440
    %v3442 = vpop.xlane.xlu0 %3441
    %v3443 = vsub.f32 %v3343, %v3442
    %v3444 = vmul.f32 %v3443, 1.442695
    %v3445 = vpow.pop %v3444
    %v3447 = vsel %vm2266, %v3445, 0
    %3449 = vmatprep.subr.mxu0 0.0
    %3450 = vmatpush1.msra.mxu0 %v2367
    %3451 = vmatprep.subr.mxu0 0.0
    %3452 = vmatpush1.msra.mxu0 0.0
    %3453 = vmatprep.subr.mxu0 0.0
    %3454 = vmatpush1.msra.mxu0 0.0
    %3455 = vmatprep.subr.mxu0 0.0
    %3456 = vmatpush1.msra.mxu0 0.0
    %3457 = vmatprep.subr.mxu0 0.0
    %3458 = vmatpush1.msra.mxu0 0.0
    %3459 = vmatprep.subr.mxu0 0.0
    %3460 = vmatpush1.msra.mxu0 0.0
    %3461 = vmatprep.subr.mxu0 0.0
    %3462 = vmatpush1.msra.mxu0 0.0
    %3463 = vmatprep.subr.mxu0 0.0
    %3464 = vmatpush1.msra.mxu0 0.0
    %3465 = vmatprep.subr.mxu0 0.0
    %3466 = vmatpush1.msra.mxu0 0.0
    %3467 = vmatprep.subr.mxu0 0.0
    %3468 = vmatpush1.msra.mxu0 0.0
    %3469 = vmatprep.subr.mxu0 0.0
    %3470 = vmatpush1.msra.mxu0 0.0
    %3471 = vmatprep.subr.mxu0 0.0
    %3472 = vmatpush1.msra.mxu0 0.0
    %3473 = vmatprep.subr.mxu0 0.0
    %3474 = vmatpush1.msra.mxu0 0.0
    %3475 = vmatprep.subr.mxu0 0.0
    %3476 = vmatpush1.msra.mxu0 0.0
    %3477 = vmatprep.subr.mxu0 0.0
    %3478 = vmatpush1.msra.mxu0 0.0
    %3479 = vmatprep.subr.mxu0 0.0
    %3480 = vmatpush1.msra.mxu0 0.0
    %3481 = vmatprep.subr.mxu0 0.0
    %3482 = vmatpush1.msra.mxu0 0.0
    %3483 = vmatprep.subr.mxu0 0.0
    %3484 = vmatpush1.msra.mxu0 0.0
    %3485 = vmatprep.subr.mxu0 0.0
    %3486 = vmatpush1.msra.mxu0 0.0
    %3487 = vmatprep.subr.mxu0 0.0
    %3488 = vmatpush1.msra.mxu0 0.0
    %3489 = vmatprep.subr.mxu0 0.0
    %3490 = vmatpush1.msra.mxu0 0.0
    %3491 = vmatprep.subr.mxu0 0.0
    %3492 = vmatpush1.msra.mxu0 0.0
    %3493 = vmatprep.subr.mxu0 0.0
    %3494 = vmatpush1.msra.mxu0 0.0
    %3495 = vmatprep.subr.mxu0 0.0
    %3496 = vmatpush1.msra.mxu0 0.0
    %3497 = vmatprep.subr.mxu0 0.0
    %3498 = vmatpush1.msra.mxu0 0.0
    %3499 = vmatprep.subr.mxu0 0.0
    %3500 = vmatpush1.msra.mxu0 0.0
    %3501 = vmatprep.subr.mxu0 0.0
    %3502 = vmatpush1.msra.mxu0 0.0
    %3503 = vmatprep.subr.mxu0 0.0
    %3504 = vmatpush1.msra.mxu0 0.0
    %3505 = vmatprep.subr.mxu0 0.0
    %3506 = vmatpush1.msra.mxu0 0.0
    %3507 = vmatprep.subr.mxu0 0.0
    %3508 = vmatpush1.msra.mxu0 0.0
    %3509 = vmatprep.subr.mxu0 0.0
    %3510 = vmatpush1.msra.mxu0 0.0
    %3511 = vmatprep.subr.mxu0 0.0
    %3512 = vmatpush1.msra.mxu0 0.0
    %3513 = vmatprep.mubr.f32.mxu0 0.0
    %3514 = vmatmul.mubr.f32.gmra.mrb[0].mxu0 %v3447
    %v3515 = vpop.f32.mrb[0].mxu0
    %v3516 = vadd.f32 0.0, %v3515
    %v3517 = vpop.f32.mrb[0].mxu0
    %3518 = vdwg.mxu0
    %v3519 = vlog2.pop %v3516
    %v3520 = vmul.f32 %v3519, 0.6931472
    %v3521 = vadd.f32 %v3442, %v3520
    %v3522 = vadd.f32 %v3521, %v3350
    %v3523 = vsel %vm3438, %v3522, %v3343
    %v3524 = vmul.f32 %v2239, %v3439
    %v3525 = vsel %vm2253, %v3524, 0.0
    %3526 = vadd.xlane.f32.xlu0 %v3525
    %v3527 = vpop.xlane.xlu0 %3526
    %v3528 = vadd.f32 %v3434, %v3527
    %v3529 = vadd.f32 %v3523, %v2239
    %v3530 = vsel %vm2253, %v3529, -inf
    %3531 = vmax.xlane.f32.xlu0 %v3530
    %v3532 = vpop.xlane.xlu0 %3531
    %v3533 = vsub.f32 %v3529, %v3532
    %v3534 = vmul.f32 %v3533, 1.442695
    %v3535 = vpow.pop %v3534
    %v3536 = vsel %vm2253, %v3535, 0.0
    %3537 = vadd.xlane.f32.xlu0 %v3536
    %v3538 = vpop.xlane.xlu0 %3537
    %v3539 = vlog2.pop %v3538
    %v3540 = vmul.f32 %v3539, 0.6931472
    %v3541 = vadd.f32 %v3540, %v3532
    %v3542 = vsub.f32 %v3528, %v3541
    %v3543 = vadd.f32 %v3542, 0.0
    %v3544 = vadd.f32 %v2238, %v2233
    %v3546 = vunpack.c.l.s4 1966171168
    %v3547 = vunpack.c.0.s8 %v3546
    %v3548 = vlaneseq
    %v3549 = vshrl.u32 %v3548, 7
    %v3550 = vsub.s32 %v3547, %v3549
    %v3551 = vrot.slane %v2250, %v3550
    %v3552 = vcombine.high %v3551, %v3551
    %v3554 = vunpack.c.l.s4 1966171168
    %v3555 = vunpack.c.0.s8 %v3554
    %v3556 = vlaneseq
    %v3557 = vshrl.u32 %v3556, 7
    %v3558 = vsub.s32 %v3555, %v3557
    %v3559 = vrot.slane %v3552, %v3558
    %v3561 = vmul.f32 %v3544, %v3559
    %v3562 = vsel %vm2253, %v3561, 0.0
    %3563 = vadd.xlane.f32.xlu0 %v3562
    %v3564 = vpop.xlane.xlu0 %3563
    %v3565 = vrot.slane %v2250, 1
    %v3567 = vrot.slane %v2233, 1
    %v3569 = vsel %vm2266, %v3565, 0
    %3571 = vmatprep.subr.mxu0 0.0
    %3572 = vmatpush1.msra.mxu0 %v2272
    %3573 = vmatprep.subr.mxu0 0.0
    %3574 = vmatpush1.msra.mxu0 0.0
    %3575 = vmatprep.subr.mxu0 0.0
    %3576 = vmatpush1.msra.mxu0 0.0
    %3577 = vmatprep.subr.mxu0 0.0
    %3578 = vmatpush1.msra.mxu0 0.0
    %3579 = vmatprep.subr.mxu0 0.0
    %3580 = vmatpush1.msra.mxu0 0.0
    %3581 = vmatprep.subr.mxu0 0.0
    %3582 = vmatpush1.msra.mxu0 0.0
    %3583 = vmatprep.subr.mxu0 0.0
    %3584 = vmatpush1.msra.mxu0 0.0
    %3585 = vmatprep.subr.mxu0 0.0
    %3586 = vmatpush1.msra.mxu0 0.0
    %3587 = vmatprep.subr.mxu0 0.0
    %3588 = vmatpush1.msra.mxu0 0.0
    %3589 = vmatprep.subr.mxu0 0.0
    %3590 = vmatpush1.msra.mxu0 0.0
    %3591 = vmatprep.subr.mxu0 0.0
    %3592 = vmatpush1.msra.mxu0 0.0
    %3593 = vmatprep.subr.mxu0 0.0
    %3594 = vmatpush1.msra.mxu0 0.0
    %3595 = vmatprep.subr.mxu0 0.0
    %3596 = vmatpush1.msra.mxu0 0.0
    %3597 = vmatprep.subr.mxu0 0.0
    %3598 = vmatpush1.msra.mxu0 0.0
    %3599 = vmatprep.subr.mxu0 0.0
    %3600 = vmatpush1.msra.mxu0 0.0
    %3601 = vmatprep.subr.mxu0 0.0
    %3602 = vmatpush1.msra.mxu0 0.0
    %3603 = vmatprep.subr.mxu0 0.0
    %3604 = vmatpush1.msra.mxu0 0.0
    %3605 = vmatprep.subr.mxu0 0.0
    %3606 = vmatpush1.msra.mxu0 0.0
    %3607 = vmatprep.subr.mxu0 0.0
    %3608 = vmatpush1.msra.mxu0 0.0
    %3609 = vmatprep.subr.mxu0 0.0
    %3610 = vmatpush1.msra.mxu0 0.0
    %3611 = vmatprep.subr.mxu0 0.0
    %3612 = vmatpush1.msra.mxu0 0.0
    %3613 = vmatprep.subr.mxu0 0.0
    %3614 = vmatpush1.msra.mxu0 0.0
    %3615 = vmatprep.subr.mxu0 0.0
    %3616 = vmatpush1.msra.mxu0 0.0
    %3617 = vmatprep.subr.mxu0 0.0
    %3618 = vmatpush1.msra.mxu0 0.0
    %3619 = vmatprep.subr.mxu0 0.0
    %3620 = vmatpush1.msra.mxu0 0.0
    %3621 = vmatprep.subr.mxu0 0.0
    %3622 = vmatpush1.msra.mxu0 0.0
    %3623 = vmatprep.subr.mxu0 0.0
    %3624 = vmatpush1.msra.mxu0 0.0
    %3625 = vmatprep.subr.mxu0 0.0
    %3626 = vmatpush1.msra.mxu0 0.0
    %3627 = vmatprep.subr.mxu0 0.0
    %3628 = vmatpush1.msra.mxu0 0.0
    %3629 = vmatprep.subr.mxu0 0.0
    %3630 = vmatpush1.msra.mxu0 0.0
    %3631 = vmatprep.subr.mxu0 0.0
    %3632 = vmatpush1.msra.mxu0 0.0
    %3633 = vmatprep.subr.mxu0 0.0
    %3634 = vmatpush1.msra.mxu0 0.0
    %3635 = vmatprep.mubr.f32.mxu0 0.0
    %3636 = vmatmul.mubr.f32.gmra.mrb[0].mxu0 %v3569
    %v3637 = vpop.f32.mrb[0].mxu0
    %v3638 = vadd.f32 %v3567, %v3637
    %v3639 = vpop.f32.mrb[0].mxu0
    %3640 = vdwg.mxu0
    %v3641 = vrot.slane %v2262, 1
    %v3643 = vmul.f32 %v3638, %v3641
    %v3644 = vsel %vm2253, %v3643, 0.0
    %3645 = vadd.xlane.f32.xlu0 %v3644
    %v3646 = vpop.xlane.xlu0 %3645
    %v3648 = vrot.slane %v3646, 7
    %v3650 = vmul.f32 %v2236, %v3648
    %v3652 = vrot.slane %v3650, 1
    %3653 = vrot.lane.b32.xlu0 %v3652, 127
    %v3654 = vpop.permute.xlu0 %3653
    %v3656 = vadd.f32 %v3564, %v3654
    %v3657 = vsel %vm2253, %v3544, -inf
    %3658 = vmax.xlane.f32.xlu0 %v3657
    %v3659 = vpop.xlane.xlu0 %3658
    %v3660 = vsub.f32 %v3544, %v3659
    %v3661 = vmul.f32 %v3660, 1.442695
    %v3662 = vpow.pop %v3661
    %v3664 = vsel %vm2266, %v3662, 0
    %3666 = vmatprep.subr.mxu0 0.0
    %3667 = vmatpush1.msra.mxu0 %v2367
    %3668 = vmatprep.subr.mxu0 0.0
    %3669 = vmatpush1.msra.mxu0 0.0
    %3670 = vmatprep.subr.mxu0 0.0
    %3671 = vmatpush1.msra.mxu0 0.0
    %3672 = vmatprep.subr.mxu0 0.0
    %3673 = vmatpush1.msra.mxu0 0.0
    %3674 = vmatprep.subr.mxu0 0.0
    %3675 = vmatpush1.msra.mxu0 0.0
    %3676 = vmatprep.subr.mxu0 0.0
    %3677 = vmatpush1.msra.mxu0 0.0
    %3678 = vmatprep.subr.mxu0 0.0
    %3679 = vmatpush1.msra.mxu0 0.0
    %3680 = vmatprep.subr.mxu0 0.0
    %3681 = vmatpush1.msra.mxu0 0.0
    %3682 = vmatprep.subr.mxu0 0.0
    %3683 = vmatpush1.msra.mxu0 0.0
    %3684 = vmatprep.subr.mxu0 0.0
    %3685 = vmatpush1.msra.mxu0 0.0
    %3686 = vmatprep.subr.mxu0 0.0
    %3687 = vmatpush1.msra.mxu0 0.0
    %3688 = vmatprep.subr.mxu0 0.0
    %3689 = vmatpush1.msra.mxu0 0.0
    %3690 = vmatprep.subr.mxu0 0.0
    %3691 = vmatpush1.msra.mxu0 0.0
    %3692 = vmatprep.subr.mxu0 0.0
    %3693 = vmatpush1.msra.mxu0 0.0
    %3694 = vmatprep.subr.mxu0 0.0
    %3695 = vmatpush1.msra.mxu0 0.0
    %3696 = vmatprep.subr.mxu0 0.0
    %3697 = vmatpush1.msra.mxu0 0.0
    %3698 = vmatprep.subr.mxu0 0.0
    %3699 = vmatpush1.msra.mxu0 0.0
    %3700 = vmatprep.subr.mxu0 0.0
    %3701 = vmatpush1.msra.mxu0 0.0
    %3702 = vmatprep.subr.mxu0 0.0
    %3703 = vmatpush1.msra.mxu0 0.0
    %3704 = vmatprep.subr.mxu0 0.0
    %3705 = vmatpush1.msra.mxu0 0.0
    %3706 = vmatprep.subr.mxu0 0.0
    %3707 = vmatpush1.msra.mxu0 0.0
    %3708 = vmatprep.subr.mxu0 0.0
    %3709 = vmatpush1.msra.mxu0 0.0
    %3710 = vmatprep.subr.mxu0 0.0
    %3711 = vmatpush1.msra.mxu0 0.0
    %3712 = vmatprep.subr.mxu0 0.0
    %3713 = vmatpush1.msra.mxu0 0.0
    %3714 = vmatprep.subr.mxu0 0.0
    %3715 = vmatpush1.msra.mxu0 0.0
    %3716 = vmatprep.subr.mxu0 0.0
    %3717 = vmatpush1.msra.mxu0 0.0
    %3718 = vmatprep.subr.mxu0 0.0
    %3719 = vmatpush1.msra.mxu0 0.0
    %3720 = vmatprep.subr.mxu0 0.0
    %3721 = vmatpush1.msra.mxu0 0.0
    %3722 = vmatprep.subr.mxu0 0.0
    %3723 = vmatpush1.msra.mxu0 0.0
    %3724 = vmatprep.subr.mxu0 0.0
    %3725 = vmatpush1.msra.mxu0 0.0
    %3726 = vmatprep.subr.mxu0 0.0
    %3727 = vmatpush1.msra.mxu0 0.0
    %3728 = vmatprep.subr.mxu0 0.0
    %3729 = vmatpush1.msra.mxu0 0.0
    %3730 = vmatprep.mubr.f32.mxu0 0.0
    %3731 = vmatmul.mubr.f32.gmra.mrb[0].mxu0 %v3664
    %v3732 = vpop.f32.mrb[0].mxu0
    %v3733 = vadd.f32 0.0, %v3732
    %v3734 = vpop.f32.mrb[0].mxu0
    %3735 = vdwg.mxu0
    %v3736 = vlog2.pop %v3733
    %v3737 = vmul.f32 %v3736, 0.6931472
    %v3738 = vadd.f32 %v3659, %v3737
    %v3739 = vadd.f32 %v3738, %v3567
    %v3741 = vrot.slane %v3739, 7
    %v3744 = vlaneseq
    %v3745 = vshrl.u32 %v3744, 7
    %v3746 = vsub.s32 0, %v3745
    %v3747 = vrot.slane %v3544, %v3746
    %v3749 = vsel %vm2355, %v3741, %v3747
    %v3750 = vrot.slane %v2233, 2
    %v3752 = vsel %vm2266, %v3641, 0
    %3754 = vmatprep.subr.mxu0 0.0
    %3755 = vmatpush1.msra.mxu0 %v2272
    %3756 = vmatprep.subr.mxu0 0.0
    %3757 = vmatpush1.msra.mxu0 0.0
    %3758 = vmatprep.subr.mxu0 0.0
    %3759 = vmatpush1.msra.mxu0 0.0
    %3760 = vmatprep.subr.mxu0 0.0
    %3761 = vmatpush1.msra.mxu0 0.0
    %3762 = vmatprep.subr.mxu0 0.0
    %3763 = vmatpush1.msra.mxu0 0.0
    %3764 = vmatprep.subr.mxu0 0.0
    %3765 = vmatpush1.msra.mxu0 0.0
    %3766 = vmatprep.subr.mxu0 0.0
    %3767 = vmatpush1.msra.mxu0 0.0
    %3768 = vmatprep.subr.mxu0 0.0
    %3769 = vmatpush1.msra.mxu0 0.0
    %3770 = vmatprep.subr.mxu0 0.0
    %3771 = vmatpush1.msra.mxu0 0.0
    %3772 = vmatprep.subr.mxu0 0.0
    %3773 = vmatpush1.msra.mxu0 0.0
    %3774 = vmatprep.subr.mxu0 0.0
    %3775 = vmatpush1.msra.mxu0 0.0
    %3776 = vmatprep.subr.mxu0 0.0
    %3777 = vmatpush1.msra.mxu0 0.0
    %3778 = vmatprep.subr.mxu0 0.0
    %3779 = vmatpush1.msra.mxu0 0.0
    %3780 = vmatprep.subr.mxu0 0.0
    %3781 = vmatpush1.msra.mxu0 0.0
    %3782 = vmatprep.subr.mxu0 0.0
    %3783 = vmatpush1.msra.mxu0 0.0
    %3784 = vmatprep.subr.mxu0 0.0
    %3785 = vmatpush1.msra.mxu0 0.0
    %3786 = vmatprep.subr.mxu0 0.0
    %3787 = vmatpush1.msra.mxu0 0.0
    %3788 = vmatprep.subr.mxu0 0.0
    %3789 = vmatpush1.msra.mxu0 0.0
    %3790 = vmatprep.subr.mxu0 0.0
    %3791 = vmatpush1.msra.mxu0 0.0
    %3792 = vmatprep.subr.mxu0 0.0
    %3793 = vmatpush1.msra.mxu0 0.0
    %3794 = vmatprep.subr.mxu0 0.0
    %3795 = vmatpush1.msra.mxu0 0.0
    %3796 = vmatprep.subr.mxu0 0.0
    %3797 = vmatpush1.msra.mxu0 0.0
    %3798 = vmatprep.subr.mxu0 0.0
    %3799 = vmatpush1.msra.mxu0 0.0
    %3800 = vmatprep.subr.mxu0 0.0
    %3801 = vmatpush1.msra.mxu0 0.0
    %3802 = vmatprep.subr.mxu0 0.0
    %3803 = vmatpush1.msra.mxu0 0.0
    %3804 = vmatprep.subr.mxu0 0.0
    %3805 = vmatpush1.msra.mxu0 0.0
    %3806 = vmatprep.subr.mxu0 0.0
    %3807 = vmatpush1.msra.mxu0 0.0
    %3808 = vmatprep.subr.mxu0 0.0
    %3809 = vmatpush1.msra.mxu0 0.0
    %3810 = vmatprep.subr.mxu0 0.0
    %3811 = vmatpush1.msra.mxu0 0.0
    %3812 = vmatprep.subr.mxu0 0.0
    %3813 = vmatpush1.msra.mxu0 0.0
    %3814 = vmatprep.subr.mxu0 0.0
    %3815 = vmatpush1.msra.mxu0 0.0
    %3816 = vmatprep.subr.mxu0 0.0
    %3817 = vmatpush1.msra.mxu0 0.0
    %3818 = vmatprep.mubr.f32.mxu0 0.0
    %3819 = vmatmul.mubr.f32.gmra.mrb[0].mxu0 %v3752
    %v3820 = vpop.f32.mrb[0].mxu0
    %v3821 = vadd.f32 %v3750, %v3820
    %v3822 = vpop.f32.mrb[0].mxu0
    %3823 = vdwg.mxu0
    %v3824 = vrot.slane %v2449, 1
    %v3826 = vmul.f32 %v3821, %v3824
    %v3827 = vsel %vm2253, %v3826, 0.0
    %3828 = vadd.xlane.f32.xlu0 %v3827
    %v3829 = vpop.xlane.xlu0 %3828
    %v3831 = vrot.slane %v3829, 7
    %v3833 = vmul.f32 %v2236, %v3831
    %v3835 = vrot.slane %v3833, 1
    %3836 = vrot.lane.b32.xlu0 %v3835, 126
    %v3837 = vpop.permute.xlu0 %3836
    %v3839 = vadd.f32 %v3656, %v3837
    %vm3840 = vcmask 33793
    %v3841 = vsel %vm3840, %v3749, -inf
    %3842 = vmax.xlane.f32.xlu0 %v3841
    %v3843 = vpop.xlane.xlu0 %3842
    %v3844 = vsub.f32 %v3749, %v3843
    %v3845 = vmul.f32 %v3844, 1.442695
    %v3846 = vpow.pop %v3845
    %v3848 = vrot.slane %v3846, 1
    %v3849 = vsel %vm2266, %v3848, 0
    %3851 = vmatprep.subr.mxu0 0.0
    %3852 = vmatpush1.msra.mxu0 %v2367
    %3853 = vmatprep.subr.mxu0 0.0
    %3854 = vmatpush1.msra.mxu0 0.0
    %3855 = vmatprep.subr.mxu0 0.0
    %3856 = vmatpush1.msra.mxu0 0.0
    %3857 = vmatprep.subr.mxu0 0.0
    %3858 = vmatpush1.msra.mxu0 0.0
    %3859 = vmatprep.subr.mxu0 0.0
    %3860 = vmatpush1.msra.mxu0 0.0
    %3861 = vmatprep.subr.mxu0 0.0
    %3862 = vmatpush1.msra.mxu0 0.0
    %3863 = vmatprep.subr.mxu0 0.0
    %3864 = vmatpush1.msra.mxu0 0.0
    %3865 = vmatprep.subr.mxu0 0.0
    %3866 = vmatpush1.msra.mxu0 0.0
    %3867 = vmatprep.subr.mxu0 0.0
    %3868 = vmatpush1.msra.mxu0 0.0
    %3869 = vmatprep.subr.mxu0 0.0
    %3870 = vmatpush1.msra.mxu0 0.0
    %3871 = vmatprep.subr.mxu0 0.0
    %3872 = vmatpush1.msra.mxu0 0.0
    %3873 = vmatprep.subr.mxu0 0.0
    %3874 = vmatpush1.msra.mxu0 0.0
    %3875 = vmatprep.subr.mxu0 0.0
    %3876 = vmatpush1.msra.mxu0 0.0
    %3877 = vmatprep.subr.mxu0 0.0
    %3878 = vmatpush1.msra.mxu0 0.0
    %3879 = vmatprep.subr.mxu0 0.0
    %3880 = vmatpush1.msra.mxu0 0.0
    %3881 = vmatprep.subr.mxu0 0.0
    %3882 = vmatpush1.msra.mxu0 0.0
    %3883 = vmatprep.subr.mxu0 0.0
    %3884 = vmatpush1.msra.mxu0 0.0
    %3885 = vmatprep.subr.mxu0 0.0
    %3886 = vmatpush1.msra.mxu0 0.0
    %3887 = vmatprep.subr.mxu0 0.0
    %3888 = vmatpush1.msra.mxu0 0.0
    %3889 = vmatprep.subr.mxu0 0.0
    %3890 = vmatpush1.msra.mxu0 0.0
    %3891 = vmatprep.subr.mxu0 0.0
    %3892 = vmatpush1.msra.mxu0 0.0
    %3893 = vmatprep.subr.mxu0 0.0
    %3894 = vmatpush1.msra.mxu0 0.0
    %3895 = vmatprep.subr.mxu0 0.0
    %3896 = vmatpush1.msra.mxu0 0.0
    %3897 = vmatprep.subr.mxu0 0.0
    %3898 = vmatpush1.msra.mxu0 0.0
    %3899 = vmatprep.subr.mxu0 0.0
    %3900 = vmatpush1.msra.mxu0 0.0
    %3901 = vmatprep.subr.mxu0 0.0
    %3902 = vmatpush1.msra.mxu0 0.0
    %3903 = vmatprep.subr.mxu0 0.0
    %3904 = vmatpush1.msra.mxu0 0.0
    %3905 = vmatprep.subr.mxu0 0.0
    %3906 = vmatpush1.msra.mxu0 0.0
    %3907 = vmatprep.subr.mxu0 0.0
    %3908 = vmatpush1.msra.mxu0 0.0
    %3909 = vmatprep.subr.mxu0 0.0
    %3910 = vmatpush1.msra.mxu0 0.0
    %3911 = vmatprep.subr.mxu0 0.0
    %3912 = vmatpush1.msra.mxu0 0.0
    %3913 = vmatprep.subr.mxu0 0.0
    %3914 = vmatpush1.msra.mxu0 0.0
    %3915 = vmatprep.mubr.f32.mxu0 0.0
    %3916 = vmatmul.mubr.f32.gmra.mrb[0].mxu0 %v3849
    %v3917 = vpop.f32.mrb[0].mxu0
    %v3918 = vadd.f32 0.0, %v3917
    %v3919 = vpop.f32.mrb[0].mxu0
    %3920 = vdwg.mxu0
    %v3921 = vlog2.pop %v3918
    %v3922 = vmul.f32 %v3921, 0.6931472
    %v3924 = vrot.slane %v3922, 7
    %v3926 = vadd.f32 %v3843, %v3924
    %v3927 = vadd.f32 %v3926, %v3567
    %v3928 = vsel %vm2538, %v3927, %v3749
    %v3929 = vrot.slane %v2233, 3
    %v3931 = vsel %vm2266, %v3824, 0
    %3933 = vmatprep.subr.mxu0 0.0
    %3934 = vmatpush1.msra.mxu0 %v2272
    %3935 = vmatprep.subr.mxu0 0.0
    %3936 = vmatpush1.msra.mxu0 0.0
    %3937 = vmatprep.subr.mxu0 0.0
    %3938 = vmatpush1.msra.mxu0 0.0
    %3939 = vmatprep.subr.mxu0 0.0
    %3940 = vmatpush1.msra.mxu0 0.0
    %3941 = vmatprep.subr.mxu0 0.0
    %3942 = vmatpush1.msra.mxu0 0.0
    %3943 = vmatprep.subr.mxu0 0.0
    %3944 = vmatpush1.msra.mxu0 0.0
    %3945 = vmatprep.subr.mxu0 0.0
    %3946 = vmatpush1.msra.mxu0 0.0
    %3947 = vmatprep.subr.mxu0 0.0
    %3948 = vmatpush1.msra.mxu0 0.0
    %3949 = vmatprep.subr.mxu0 0.0
    %3950 = vmatpush1.msra.mxu0 0.0
    %3951 = vmatprep.subr.mxu0 0.0
    %3952 = vmatpush1.msra.mxu0 0.0
    %3953 = vmatprep.subr.mxu0 0.0
    %3954 = vmatpush1.msra.mxu0 0.0
    %3955 = vmatprep.subr.mxu0 0.0
    %3956 = vmatpush1.msra.mxu0 0.0
    %3957 = vmatprep.subr.mxu0 0.0
    %3958 = vmatpush1.msra.mxu0 0.0
    %3959 = vmatprep.subr.mxu0 0.0
    %3960 = vmatpush1.msra.mxu0 0.0
    %3961 = vmatprep.subr.mxu0 0.0
    %3962 = vmatpush1.msra.mxu0 0.0
    %3963 = vmatprep.subr.mxu0 0.0
    %3964 = vmatpush1.msra.mxu0 0.0
    %3965 = vmatprep.subr.mxu0 0.0
    %3966 = vmatpush1.msra.mxu0 0.0
    %3967 = vmatprep.subr.mxu0 0.0
    %3968 = vmatpush1.msra.mxu0 0.0
    %3969 = vmatprep.subr.mxu0 0.0
    %3970 = vmatpush1.msra.mxu0 0.0
    %3971 = vmatprep.subr.mxu0 0.0
    %3972 = vmatpush1.msra.mxu0 0.0
    %3973 = vmatprep.subr.mxu0 0.0
    %3974 = vmatpush1.msra.mxu0 0.0
    %3975 = vmatprep.subr.mxu0 0.0
    %3976 = vmatpush1.msra.mxu0 0.0
    %3977 = vmatprep.subr.mxu0 0.0
    %3978 = vmatpush1.msra.mxu0 0.0
    %3979 = vmatprep.subr.mxu0 0.0
    %3980 = vmatpush1.msra.mxu0 0.0
    %3981 = vmatprep.subr.mxu0 0.0
    %3982 = vmatpush1.msra.mxu0 0.0
    %3983 = vmatprep.subr.mxu0 0.0
    %3984 = vmatpush1.msra.mxu0 0.0
    %3985 = vmatprep.subr.mxu0 0.0
    %3986 = vmatpush1.msra.mxu0 0.0
    %3987 = vmatprep.subr.mxu0 0.0
    %3988 = vmatpush1.msra.mxu0 0.0
    %3989 = vmatprep.subr.mxu0 0.0
    %3990 = vmatpush1.msra.mxu0 0.0
    %3991 = vmatprep.subr.mxu0 0.0
    %3992 = vmatpush1.msra.mxu0 0.0
    %3993 = vmatprep.subr.mxu0 0.0
    %3994 = vmatpush1.msra.mxu0 0.0
    %3995 = vmatprep.subr.mxu0 0.0
    %3996 = vmatpush1.msra.mxu0 0.0
    %3997 = vmatprep.mubr.f32.mxu0 0.0
    %3998 = vmatmul.mubr.f32.gmra.mrb[0].mxu0 %v3931
    %v3999 = vpop.f32.mrb[0].mxu0
    %v4000 = vadd.f32 %v3929, %v3999
    %v4001 = vpop.f32.mrb[0].mxu0
    %4002 = vdwg.mxu0
    %v4003 = vrot.slane %v2629, 1
    %v4005 = vmul.f32 %v4000, %v4003
    %v4006 = vsel %vm2253, %v4005, 0.0
    %4007 = vadd.xlane.f32.xlu0 %v4006
    %v4008 = vpop.xlane.xlu0 %4007
    %v4010 = vrot.slane %v4008, 7
    %v4012 = vmul.f32 %v2236, %v4010
    %v4014 = vrot.slane %v4012, 1
    %4015 = vrot.lane.b32.xlu0 %v4014, 125
    %v4016 = vpop.permute.xlu0 %4015
    %v4018 = vadd.f32 %v3839, %v4016
    %v4019 = vsel %vm3840, %v3928, -inf
    %4020 = vmax.xlane.f32.xlu0 %v4019
    %v4021 = vpop.xlane.xlu0 %4020
    %v4022 = vsub.f32 %v3928, %v4021
    %v4023 = vmul.f32 %v4022, 1.442695
    %v4024 = vpow.pop %v4023
    %v4026 = vrot.slane %v4024, 1
    %v4027 = vsel %vm2266, %v4026, 0
    %4029 = vmatprep.subr.mxu0 0.0
    %4030 = vmatpush1.msra.mxu0 %v2367
    %4031 = vmatprep.subr.mxu0 0.0
    %4032 = vmatpush1.msra.mxu0 0.0
    %4033 = vmatprep.subr.mxu0 0.0
    %4034 = vmatpush1.msra.mxu0 0.0
    %4035 = vmatprep.subr.mxu0 0.0
    %4036 = vmatpush1.msra.mxu0 0.0
    %4037 = vmatprep.subr.mxu0 0.0
    %4038 = vmatpush1.msra.mxu0 0.0
    %4039 = vmatprep.subr.mxu0 0.0
    %4040 = vmatpush1.msra.mxu0 0.0
    %4041 = vmatprep.subr.mxu0 0.0
    %4042 = vmatpush1.msra.mxu0 0.0
    %4043 = vmatprep.subr.mxu0 0.0
    %4044 = vmatpush1.msra.mxu0 0.0
    %4045 = vmatprep.subr.mxu0 0.0
    %4046 = vmatpush1.msra.mxu0 0.0
    %4047 = vmatprep.subr.mxu0 0.0
    %4048 = vmatpush1.msra.mxu0 0.0
    %4049 = vmatprep.subr.mxu0 0.0
    %4050 = vmatpush1.msra.mxu0 0.0
    %4051 = vmatprep.subr.mxu0 0.0
    %4052 = vmatpush1.msra.mxu0 0.0
    %4053 = vmatprep.subr.mxu0 0.0
    %4054 = vmatpush1.msra.mxu0 0.0
    %4055 = vmatprep.subr.mxu0 0.0
    %4056 = vmatpush1.msra.mxu0 0.0
    %4057 = vmatprep.subr.mxu0 0.0
    %4058 = vmatpush1.msra.mxu0 0.0
    %4059 = vmatprep.subr.mxu0 0.0
    %4060 = vmatpush1.msra.mxu0 0.0
    %4061 = vmatprep.subr.mxu0 0.0
    %4062 = vmatpush1.msra.mxu0 0.0
    %4063 = vmatprep.subr.mxu0 0.0
    %4064 = vmatpush1.msra.mxu0 0.0
    %4065 = vmatprep.subr.mxu0 0.0
    %4066 = vmatpush1.msra.mxu0 0.0
    %4067 = vmatprep.subr.mxu0 0.0
    %4068 = vmatpush1.msra.mxu0 0.0
    %4069 = vmatprep.subr.mxu0 0.0
    %4070 = vmatpush1.msra.mxu0 0.0
    %4071 = vmatprep.subr.mxu0 0.0
    %4072 = vmatpush1.msra.mxu0 0.0
    %4073 = vmatprep.subr.mxu0 0.0
    %4074 = vmatpush1.msra.mxu0 0.0
    %4075 = vmatprep.subr.mxu0 0.0
    %4076 = vmatpush1.msra.mxu0 0.0
    %4077 = vmatprep.subr.mxu0 0.0
    %4078 = vmatpush1.msra.mxu0 0.0
    %4079 = vmatprep.subr.mxu0 0.0
    %4080 = vmatpush1.msra.mxu0 0.0
    %4081 = vmatprep.subr.mxu0 0.0
    %4082 = vmatpush1.msra.mxu0 0.0
    %4083 = vmatprep.subr.mxu0 0.0
    %4084 = vmatpush1.msra.mxu0 0.0
    %4085 = vmatprep.subr.mxu0 0.0
    %4086 = vmatpush1.msra.mxu0 0.0
    %4087 = vmatprep.subr.mxu0 0.0
    %4088 = vmatpush1.msra.mxu0 0.0
    %4089 = vmatprep.subr.mxu0 0.0
    %4090 = vmatpush1.msra.mxu0 0.0
    %4091 = vmatprep.subr.mxu0 0.0
    %4092 = vmatpush1.msra.mxu0 0.0
    %4093 = vmatprep.mubr.f32.mxu0 0.0
    %4094 = vmatmul.mubr.f32.gmra.mrb[0].mxu0 %v4027
    %v4095 = vpop.f32.mrb[0].mxu0
    %v4096 = vadd.f32 0.0, %v4095
    %v4097 = vpop.f32.mrb[0].mxu0
    %4098 = vdwg.mxu0
    %v4099 = vlog2.pop %v4096
    %v4100 = vmul.f32 %v4099, 0.6931472
    %v4102 = vrot.slane %v4100, 7
    %v4104 = vadd.f32 %v4021, %v4102
    %v4105 = vadd.f32 %v4104, %v3750
    %v4106 = vsel %vm2718, %v4105, %v3928
    %v4107 = vrot.slane %v2233, 4
    %v4109 = vsel %vm2266, %v4003, 0
    %4111 = vmatprep.subr.mxu0 0.0
    %4112 = vmatpush1.msra.mxu0 %v2272
    %4113 = vmatprep.subr.mxu0 0.0
    %4114 = vmatpush1.msra.mxu0 0.0
    %4115 = vmatprep.subr.mxu0 0.0
    %4116 = vmatpush1.msra.mxu0 0.0
    %4117 = vmatprep.subr.mxu0 0.0
    %4118 = vmatpush1.msra.mxu0 0.0
    %4119 = vmatprep.subr.mxu0 0.0
    %4120 = vmatpush1.msra.mxu0 0.0
    %4121 = vmatprep.subr.mxu0 0.0
    %4122 = vmatpush1.msra.mxu0 0.0
    %4123 = vmatprep.subr.mxu0 0.0
    %4124 = vmatpush1.msra.mxu0 0.0
    %4125 = vmatprep.subr.mxu0 0.0
    %4126 = vmatpush1.msra.mxu0 0.0
    %4127 = vmatprep.subr.mxu0 0.0
    %4128 = vmatpush1.msra.mxu0 0.0
    %4129 = vmatprep.subr.mxu0 0.0
    %4130 = vmatpush1.msra.mxu0 0.0
    %4131 = vmatprep.subr.mxu0 0.0
    %4132 = vmatpush1.msra.mxu0 0.0
    %4133 = vmatprep.subr.mxu0 0.0
    %4134 = vmatpush1.msra.mxu0 0.0
    %4135 = vmatprep.subr.mxu0 0.0
    %4136 = vmatpush1.msra.mxu0 0.0
    %4137 = vmatprep.subr.mxu0 0.0
    %4138 = vmatpush1.msra.mxu0 0.0
    %4139 = vmatprep.subr.mxu0 0.0
    %4140 = vmatpush1.msra.mxu0 0.0
    %4141 = vmatprep.subr.mxu0 0.0
    %4142 = vmatpush1.msra.mxu0 0.0
    %4143 = vmatprep.subr.mxu0 0.0
    %4144 = vmatpush1.msra.mxu0 0.0
    %4145 = vmatprep.subr.mxu0 0.0
    %4146 = vmatpush1.msra.mxu0 0.0
    %4147 = vmatprep.subr.mxu0 0.0
    %4148 = vmatpush1.msra.mxu0 0.0
    %4149 = vmatprep.subr.mxu0 0.0
    %4150 = vmatpush1.msra.mxu0 0.0
    %4151 = vmatprep.subr.mxu0 0.0
    %4152 = vmatpush1.msra.mxu0 0.0
    %4153 = vmatprep.subr.mxu0 0.0
    %4154 = vmatpush1.msra.mxu0 0.0
    %4155 = vmatprep.subr.mxu0 0.0
    %4156 = vmatpush1.msra.mxu0 0.0
    %4157 = vmatprep.subr.mxu0 0.0
    %4158 = vmatpush1.msra.mxu0 0.0
    %4159 = vmatprep.subr.mxu0 0.0
    %4160 = vmatpush1.msra.mxu0 0.0
    %4161 = vmatprep.subr.mxu0 0.0
    %4162 = vmatpush1.msra.mxu0 0.0
    %4163 = vmatprep.subr.mxu0 0.0
    %4164 = vmatpush1.msra.mxu0 0.0
    %4165 = vmatprep.subr.mxu0 0.0
    %4166 = vmatpush1.msra.mxu0 0.0
    %4167 = vmatprep.subr.mxu0 0.0
    %4168 = vmatpush1.msra.mxu0 0.0
    %4169 = vmatprep.subr.mxu0 0.0
    %4170 = vmatpush1.msra.mxu0 0.0
    %4171 = vmatprep.subr.mxu0 0.0
    %4172 = vmatpush1.msra.mxu0 0.0
    %4173 = vmatprep.subr.mxu0 0.0
    %4174 = vmatpush1.msra.mxu0 0.0
    %4175 = vmatprep.mubr.f32.mxu0 0.0
    %4176 = vmatmul.mubr.f32.gmra.mrb[0].mxu0 %v4109
    %v4177 = vpop.f32.mrb[0].mxu0
    %v4178 = vadd.f32 %v4107, %v4177
    %v4179 = vpop.f32.mrb[0].mxu0
    %4180 = vdwg.mxu0
    %v4181 = vrot.slane %v2809, 1
    %v4183 = vmul.f32 %v4178, %v4181
    %v4184 = vsel %vm2253, %v4183, 0.0
    %4185 = vadd.xlane.f32.xlu0 %v4184
    %v4186 = vpop.xlane.xlu0 %4185
    %v4188 = vrot.slane %v4186, 7
    %v4190 = vmul.f32 %v2236, %v4188
    %v4192 = vrot.slane %v4190, 1
    %4193 = vrot.lane.b32.xlu0 %v4192, 124
    %v4194 = vpop.permute.xlu0 %4193
    %v4196 = vadd.f32 %v4018, %v4194
    %v4197 = vsel %vm3840, %v4106, -inf
    %4198 = vmax.xlane.f32.xlu0 %v4197
    %v4199 = vpop.xlane.xlu0 %4198
    %v4200 = vsub.f32 %v4106, %v4199
    %v4201 = vmul.f32 %v4200, 1.442695
    %v4202 = vpow.pop %v4201
    %v4204 = vrot.slane %v4202, 1
    %v4205 = vsel %vm2266, %v4204, 0
    %4207 = vmatprep.subr.mxu0 0.0
    %4208 = vmatpush1.msra.mxu0 %v2367
    %4209 = vmatprep.subr.mxu0 0.0
    %4210 = vmatpush1.msra.mxu0 0.0
    %4211 = vmatprep.subr.mxu0 0.0
    %4212 = vmatpush1.msra.mxu0 0.0
    %4213 = vmatprep.subr.mxu0 0.0
    %4214 = vmatpush1.msra.mxu0 0.0
    %4215 = vmatprep.subr.mxu0 0.0
    %4216 = vmatpush1.msra.mxu0 0.0
    %4217 = vmatprep.subr.mxu0 0.0
    %4218 = vmatpush1.msra.mxu0 0.0
    %4219 = vmatprep.subr.mxu0 0.0
    %4220 = vmatpush1.msra.mxu0 0.0
    %4221 = vmatprep.subr.mxu0 0.0
    %4222 = vmatpush1.msra.mxu0 0.0
    %4223 = vmatprep.subr.mxu0 0.0
    %4224 = vmatpush1.msra.mxu0 0.0
    %4225 = vmatprep.subr.mxu0 0.0
    %4226 = vmatpush1.msra.mxu0 0.0
    %4227 = vmatprep.subr.mxu0 0.0
    %4228 = vmatpush1.msra.mxu0 0.0
    %4229 = vmatprep.subr.mxu0 0.0
    %4230 = vmatpush1.msra.mxu0 0.0
    %4231 = vmatprep.subr.mxu0 0.0
    %4232 = vmatpush1.msra.mxu0 0.0
    %4233 = vmatprep.subr.mxu0 0.0
    %4234 = vmatpush1.msra.mxu0 0.0
    %4235 = vmatprep.subr.mxu0 0.0
    %4236 = vmatpush1.msra.mxu0 0.0
    %4237 = vmatprep.subr.mxu0 0.0
    %4238 = vmatpush1.msra.mxu0 0.0
    %4239 = vmatprep.subr.mxu0 0.0
    %4240 = vmatpush1.msra.mxu0 0.0
    %4241 = vmatprep.subr.mxu0 0.0
    %4242 = vmatpush1.msra.mxu0 0.0
    %4243 = vmatprep.subr.mxu0 0.0
    %4244 = vmatpush1.msra.mxu0 0.0
    %4245 = vmatprep.subr.mxu0 0.0
    %4246 = vmatpush1.msra.mxu0 0.0
    %4247 = vmatprep.subr.mxu0 0.0
    %4248 = vmatpush1.msra.mxu0 0.0
    %4249 = vmatprep.subr.mxu0 0.0
    %4250 = vmatpush1.msra.mxu0 0.0
    %4251 = vmatprep.subr.mxu0 0.0
    %4252 = vmatpush1.msra.mxu0 0.0
    %4253 = vmatprep.subr.mxu0 0.0
    %4254 = vmatpush1.msra.mxu0 0.0
    %4255 = vmatprep.subr.mxu0 0.0
    %4256 = vmatpush1.msra.mxu0 0.0
    %4257 = vmatprep.subr.mxu0 0.0
    %4258 = vmatpush1.msra.mxu0 0.0
    %4259 = vmatprep.subr.mxu0 0.0
    %4260 = vmatpush1.msra.mxu0 0.0
    %4261 = vmatprep.subr.mxu0 0.0
    %4262 = vmatpush1.msra.mxu0 0.0
    %4263 = vmatprep.subr.mxu0 0.0
    %4264 = vmatpush1.msra.mxu0 0.0
    %4265 = vmatprep.subr.mxu0 0.0
    %4266 = vmatpush1.msra.mxu0 0.0
    %4267 = vmatprep.subr.mxu0 0.0
    %4268 = vmatpush1.msra.mxu0 0.0
    %4269 = vmatprep.subr.mxu0 0.0
    %4270 = vmatpush1.msra.mxu0 0.0
    %4271 = vmatprep.mubr.f32.mxu0 0.0
    %4272 = vmatmul.mubr.f32.gmra.mrb[0].mxu0 %v4205
    %v4273 = vpop.f32.mrb[0].mxu0
    %v4274 = vadd.f32 0.0, %v4273
    %v4275 = vpop.f32.mrb[0].mxu0
    %4276 = vdwg.mxu0
    %v4277 = vlog2.pop %v4274
    %v4278 = vmul.f32 %v4277, 0.6931472
    %v4280 = vrot.slane %v4278, 7
    %v4282 = vadd.f32 %v4199, %v4280
    %v4283 = vadd.f32 %v4282, %v3929
    %v4284 = vsel %vm2898, %v4283, %v4106
    %v4285 = vrot.slane %v2233, 5
    %v4287 = vsel %vm2266, %v4181, 0
    %4289 = vmatprep.subr.mxu0 0.0
    %4290 = vmatpush1.msra.mxu0 %v2272
    %4291 = vmatprep.subr.mxu0 0.0
    %4292 = vmatpush1.msra.mxu0 0.0
    %4293 = vmatprep.subr.mxu0 0.0
    %4294 = vmatpush1.msra.mxu0 0.0
    %4295 = vmatprep.subr.mxu0 0.0
    %4296 = vmatpush1.msra.mxu0 0.0
    %4297 = vmatprep.subr.mxu0 0.0
    %4298 = vmatpush1.msra.mxu0 0.0
    %4299 = vmatprep.subr.mxu0 0.0
    %4300 = vmatpush1.msra.mxu0 0.0
    %4301 = vmatprep.subr.mxu0 0.0
    %4302 = vmatpush1.msra.mxu0 0.0
    %4303 = vmatprep.subr.mxu0 0.0
    %4304 = vmatpush1.msra.mxu0 0.0
    %4305 = vmatprep.subr.mxu0 0.0
    %4306 = vmatpush1.msra.mxu0 0.0
    %4307 = vmatprep.subr.mxu0 0.0
    %4308 = vmatpush1.msra.mxu0 0.0
    %4309 = vmatprep.subr.mxu0 0.0
    %4310 = vmatpush1.msra.mxu0 0.0
    %4311 = vmatprep.subr.mxu0 0.0
    %4312 = vmatpush1.msra.mxu0 0.0
    %4313 = vmatprep.subr.mxu0 0.0
    %4314 = vmatpush1.msra.mxu0 0.0
    %4315 = vmatprep.subr.mxu0 0.0
    %4316 = vmatpush1.msra.mxu0 0.0
    %4317 = vmatprep.subr.mxu0 0.0
    %4318 = vmatpush1.msra.mxu0 0.0
    %4319 = vmatprep.subr.mxu0 0.0
    %4320 = vmatpush1.msra.mxu0 0.0
    %4321 = vmatprep.subr.mxu0 0.0
    %4322 = vmatpush1.msra.mxu0 0.0
    %4323 = vmatprep.subr.mxu0 0.0
    %4324 = vmatpush1.msra.mxu0 0.0
    %4325 = vmatprep.subr.mxu0 0.0
    %4326 = vmatpush1.msra.mxu0 0.0
    %4327 = vmatprep.subr.mxu0 0.0
    %4328 = vmatpush1.msra.mxu0 0.0
    %4329 = vmatprep.subr.mxu0 0.0
    %4330 = vmatpush1.msra.mxu0 0.0
    %4331 = vmatprep.subr.mxu0 0.0
    %4332 = vmatpush1.msra.mxu0 0.0
    %4333 = vmatprep.subr.mxu0 0.0
    %4334 = vmatpush1.msra.mxu0 0.0
    %4335 = vmatprep.subr.mxu0 0.0
    %4336 = vmatpush1.msra.mxu0 0.0
    %4337 = vmatprep.subr.mxu0 0.0
    %4338 = vmatpush1.msra.mxu0 0.0
    %4339 = vmatprep.subr.mxu0 0.0
    %4340 = vmatpush1.msra.mxu0 0.0
    %4341 = vmatprep.subr.mxu0 0.0
    %4342 = vmatpush1.msra.mxu0 0.0
    %4343 = vmatprep.subr.mxu0 0.0
    %4344 = vmatpush1.msra.mxu0 0.0
    %4345 = vmatprep.subr.mxu0 0.0
    %4346 = vmatpush1.msra.mxu0 0.0
    %4347 = vmatprep.subr.mxu0 0.0
    %4348 = vmatpush1.msra.mxu0 0.0
    %4349 = vmatprep.subr.mxu0 0.0
    %4350 = vmatpush1.msra.mxu0 0.0
    %4351 = vmatprep.subr.mxu0 0.0
    %4352 = vmatpush1.msra.mxu0 0.0
    %4353 = vmatprep.mubr.f32.mxu0 0.0
    %4354 = vmatmul.mubr.f32.gmra.mrb[0].mxu0 %v4287
    %v4355 = vpop.f32.mrb[0].mxu0
    %v4356 = vadd.f32 %v4285, %v4355
    %v4357 = vpop.f32.mrb[0].mxu0
    %4358 = vdwg.mxu0
    %v4359 = vrot.slane %v2989, 1
    %v4361 = vmul.f32 %v4356, %v4359
    %v4362 = vsel %vm2253, %v4361, 0.0
    %4363 = vadd.xlane.f32.xlu0 %v4362
    %v4364 = vpop.xlane.xlu0 %4363
    %v4366 = vrot.slane %v4364, 7
    %v4368 = vmul.f32 %v2236, %v4366
    %v4370 = vrot.slane %v4368, 1
    %4371 = vrot.lane.b32.xlu0 %v4370, 123
    %v4372 = vpop.permute.xlu0 %4371
    %v4374 = vadd.f32 %v4196, %v4372
    %v4375 = vsel %vm3840, %v4284, -inf
    %4376 = vmax.xlane.f32.xlu0 %v4375
    %v4377 = vpop.xlane.xlu0 %4376
    %v4378 = vsub.f32 %v4284, %v4377
    %v4379 = vmul.f32 %v4378, 1.442695
    %v4380 = vpow.pop %v4379
    %v4382 = vrot.slane %v4380, 1
    %v4383 = vsel %vm2266, %v4382, 0
    %4385 = vmatprep.subr.mxu0 0.0
    %4386 = vmatpush1.msra.mxu0 %v2367
    %4387 = vmatprep.subr.mxu0 0.0
    %4388 = vmatpush1.msra.mxu0 0.0
    %4389 = vmatprep.subr.mxu0 0.0
    %4390 = vmatpush1.msra.mxu0 0.0
    %4391 = vmatprep.subr.mxu0 0.0
    %4392 = vmatpush1.msra.mxu0 0.0
    %4393 = vmatprep.subr.mxu0 0.0
    %4394 = vmatpush1.msra.mxu0 0.0
    %4395 = vmatprep.subr.mxu0 0.0
    %4396 = vmatpush1.msra.mxu0 0.0
    %4397 = vmatprep.subr.mxu0 0.0
    %4398 = vmatpush1.msra.mxu0 0.0
    %4399 = vmatprep.subr.mxu0 0.0
    %4400 = vmatpush1.msra.mxu0 0.0
    %4401 = vmatprep.subr.mxu0 0.0
    %4402 = vmatpush1.msra.mxu0 0.0
    %4403 = vmatprep.subr.mxu0 0.0
    %4404 = vmatpush1.msra.mxu0 0.0
    %4405 = vmatprep.subr.mxu0 0.0
    %4406 = vmatpush1.msra.mxu0 0.0
    %4407 = vmatprep.subr.mxu0 0.0
    %4408 = vmatpush1.msra.mxu0 0.0
    %4409 = vmatprep.subr.mxu0 0.0
    %4410 = vmatpush1.msra.mxu0 0.0
    %4411 = vmatprep.subr.mxu0 0.0
    %4412 = vmatpush1.msra.mxu0 0.0
    %4413 = vmatprep.subr.mxu0 0.0
    %4414 = vmatpush1.msra.mxu0 0.0
    %4415 = vmatprep.subr.mxu0 0.0
    %4416 = vmatpush1.msra.mxu0 0.0
    %4417 = vmatprep.subr.mxu0 0.0
    %4418 = vmatpush1.msra.mxu0 0.0
    %4419 = vmatprep.subr.mxu0 0.0
    %4420 = vmatpush1.msra.mxu0 0.0
    %4421 = vmatprep.subr.mxu0 0.0
    %4422 = vmatpush1.msra.mxu0 0.0
    %4423 = vmatprep.subr.mxu0 0.0
    %4424 = vmatpush1.msra.mxu0 0.0
    %4425 = vmatprep.subr.mxu0 0.0
    %4426 = vmatpush1.msra.mxu0 0.0
    %4427 = vmatprep.subr.mxu0 0.0
    %4428 = vmatpush1.msra.mxu0 0.0
    %4429 = vmatprep.subr.mxu0 0.0
    %4430 = vmatpush1.msra.mxu0 0.0
    %4431 = vmatprep.subr.mxu0 0.0
    %4432 = vmatpush1.msra.mxu0 0.0
    %4433 = vmatprep.subr.mxu0 0.0
    %4434 = vmatpush1.msra.mxu0 0.0
    %4435 = vmatprep.subr.mxu0 0.0
    %4436 = vmatpush1.msra.mxu0 0.0
    %4437 = vmatprep.subr.mxu0 0.0
    %4438 = vmatpush1.msra.mxu0 0.0
    %4439 = vmatprep.subr.mxu0 0.0
    %4440 = vmatpush1.msra.mxu0 0.0
    %4441 = vmatprep.subr.mxu0 0.0
    %4442 = vmatpush1.msra.mxu0 0.0
    %4443 = vmatprep.subr.mxu0 0.0
    %4444 = vmatpush1.msra.mxu0 0.0
    %4445 = vmatprep.subr.mxu0 0.0
    %4446 = vmatpush1.msra.mxu0 0.0
    %4447 = vmatprep.subr.mxu0 0.0
    %4448 = vmatpush1.msra.mxu0 0.0
    %4449 = vmatprep.mubr.f32.mxu0 0.0
    %4450 = vmatmul.mubr.f32.gmra.mrb[0].mxu0 %v4383
    %v4451 = vpop.f32.mrb[0].mxu0
    %v4452 = vadd.f32 0.0, %v4451
    %v4453 = vpop.f32.mrb[0].mxu0
    %4454 = vdwg.mxu0
    %v4455 = vlog2.pop %v4452
    %v4456 = vmul.f32 %v4455, 0.6931472
    %v4458 = vrot.slane %v4456, 7
    %v4460 = vadd.f32 %v4377, %v4458
    %v4461 = vadd.f32 %v4460, %v4107
    %v4462 = vsel %vm3078, %v4461, %v4284
    %v4463 = vrot.slane %v2233, 6
    %v4465 = vsel %vm2266, %v4359, 0
    %4467 = vmatprep.subr.mxu0 0.0
    %4468 = vmatpush1.msra.mxu0 %v2272
    %4469 = vmatprep.subr.mxu0 0.0
    %4470 = vmatpush1.msra.mxu0 0.0
    %4471 = vmatprep.subr.mxu0 0.0
    %4472 = vmatpush1.msra.mxu0 0.0
    %4473 = vmatprep.subr.mxu0 0.0
    %4474 = vmatpush1.msra.mxu0 0.0
    %4475 = vmatprep.subr.mxu0 0.0
    %4476 = vmatpush1.msra.mxu0 0.0
    %4477 = vmatprep.subr.mxu0 0.0
    %4478 = vmatpush1.msra.mxu0 0.0
    %4479 = vmatprep.subr.mxu0 0.0
    %4480 = vmatpush1.msra.mxu0 0.0
    %4481 = vmatprep.subr.mxu0 0.0
    %4482 = vmatpush1.msra.mxu0 0.0
    %4483 = vmatprep.subr.mxu0 0.0
    %4484 = vmatpush1.msra.mxu0 0.0
    %4485 = vmatprep.subr.mxu0 0.0
    %4486 = vmatpush1.msra.mxu0 0.0
    %4487 = vmatprep.subr.mxu0 0.0
    %4488 = vmatpush1.msra.mxu0 0.0
    %4489 = vmatprep.subr.mxu0 0.0
    %4490 = vmatpush1.msra.mxu0 0.0
    %4491 = vmatprep.subr.mxu0 0.0
    %4492 = vmatpush1.msra.mxu0 0.0
    %4493 = vmatprep.subr.mxu0 0.0
    %4494 = vmatpush1.msra.mxu0 0.0
    %4495 = vmatprep.subr.mxu0 0.0
    %4496 = vmatpush1.msra.mxu0 0.0
    %4497 = vmatprep.subr.mxu0 0.0
    %4498 = vmatpush1.msra.mxu0 0.0
    %4499 = vmatprep.subr.mxu0 0.0
    %4500 = vmatpush1.msra.mxu0 0.0
    %4501 = vmatprep.subr.mxu0 0.0
    %4502 = vmatpush1.msra.mxu0 0.0
    %4503 = vmatprep.subr.mxu0 0.0
    %4504 = vmatpush1.msra.mxu0 0.0
    %4505 = vmatprep.subr.mxu0 0.0
    %4506 = vmatpush1.msra.mxu0 0.0
    %4507 = vmatprep.subr.mxu0 0.0
    %4508 = vmatpush1.msra.mxu0 0.0
    %4509 = vmatprep.subr.mxu0 0.0
    %4510 = vmatpush1.msra.mxu0 0.0
    %4511 = vmatprep.subr.mxu0 0.0
    %4512 = vmatpush1.msra.mxu0 0.0
    %4513 = vmatprep.subr.mxu0 0.0
    %4514 = vmatpush1.msra.mxu0 0.0
    %4515 = vmatprep.subr.mxu0 0.0
    %4516 = vmatpush1.msra.mxu0 0.0
    %4517 = vmatprep.subr.mxu0 0.0
    %4518 = vmatpush1.msra.mxu0 0.0
    %4519 = vmatprep.subr.mxu0 0.0
    %4520 = vmatpush1.msra.mxu0 0.0
    %4521 = vmatprep.subr.mxu0 0.0
    %4522 = vmatpush1.msra.mxu0 0.0
    %4523 = vmatprep.subr.mxu0 0.0
    %4524 = vmatpush1.msra.mxu0 0.0
    %4525 = vmatprep.subr.mxu0 0.0
    %4526 = vmatpush1.msra.mxu0 0.0
    %4527 = vmatprep.subr.mxu0 0.0
    %4528 = vmatpush1.msra.mxu0 0.0
    %4529 = vmatprep.subr.mxu0 0.0
    %4530 = vmatpush1.msra.mxu0 0.0
    %4531 = vmatprep.mubr.f32.mxu0 0.0
    %4532 = vmatmul.mubr.f32.gmra.mrb[0].mxu0 %v4465
    %v4533 = vpop.f32.mrb[0].mxu0
    %v4534 = vadd.f32 %v4463, %v4533
    %v4535 = vpop.f32.mrb[0].mxu0
    %4536 = vdwg.mxu0
    %v4537 = vrot.slane %v3169, 1
    %v4539 = vmul.f32 %v4534, %v4537
    %v4540 = vsel %vm2253, %v4539, 0.0
    %4541 = vadd.xlane.f32.xlu0 %v4540
    %v4542 = vpop.xlane.xlu0 %4541
    %v4544 = vrot.slane %v4542, 7
    %v4546 = vmul.f32 %v2236, %v4544
    %v4548 = vrot.slane %v4546, 1
    %4549 = vrot.lane.b32.xlu0 %v4548, 122
    %v4550 = vpop.permute.xlu0 %4549
    %v4552 = vadd.f32 %v4374, %v4550
    %v4553 = vsel %vm3840, %v4462, -inf
    %4554 = vmax.xlane.f32.xlu0 %v4553
    %v4555 = vpop.xlane.xlu0 %4554
    %v4556 = vsub.f32 %v4462, %v4555
    %v4557 = vmul.f32 %v4556, 1.442695
    %v4558 = vpow.pop %v4557
    %v4560 = vrot.slane %v4558, 1
    %v4561 = vsel %vm2266, %v4560, 0
    %4563 = vmatprep.subr.mxu0 0.0
    %4564 = vmatpush1.msra.mxu0 %v2367
    %4565 = vmatprep.subr.mxu0 0.0
    %4566 = vmatpush1.msra.mxu0 0.0
    %4567 = vmatprep.subr.mxu0 0.0
    %4568 = vmatpush1.msra.mxu0 0.0
    %4569 = vmatprep.subr.mxu0 0.0
    %4570 = vmatpush1.msra.mxu0 0.0
    %4571 = vmatprep.subr.mxu0 0.0
    %4572 = vmatpush1.msra.mxu0 0.0
    %4573 = vmatprep.subr.mxu0 0.0
    %4574 = vmatpush1.msra.mxu0 0.0
    %4575 = vmatprep.subr.mxu0 0.0
    %4576 = vmatpush1.msra.mxu0 0.0
    %4577 = vmatprep.subr.mxu0 0.0
    %4578 = vmatpush1.msra.mxu0 0.0
    %4579 = vmatprep.subr.mxu0 0.0
    %4580 = vmatpush1.msra.mxu0 0.0
    %4581 = vmatprep.subr.mxu0 0.0
    %4582 = vmatpush1.msra.mxu0 0.0
    %4583 = vmatprep.subr.mxu0 0.0
    %4584 = vmatpush1.msra.mxu0 0.0
    %4585 = vmatprep.subr.mxu0 0.0
    %4586 = vmatpush1.msra.mxu0 0.0
    %4587 = vmatprep.subr.mxu0 0.0
    %4588 = vmatpush1.msra.mxu0 0.0
    %4589 = vmatprep.subr.mxu0 0.0
    %4590 = vmatpush1.msra.mxu0 0.0
    %4591 = vmatprep.subr.mxu0 0.0
    %4592 = vmatpush1.msra.mxu0 0.0
    %4593 = vmatprep.subr.mxu0 0.0
    %4594 = vmatpush1.msra.mxu0 0.0
    %4595 = vmatprep.subr.mxu0 0.0
    %4596 = vmatpush1.msra.mxu0 0.0
    %4597 = vmatprep.subr.mxu0 0.0
    %4598 = vmatpush1.msra.mxu0 0.0
    %4599 = vmatprep.subr.mxu0 0.0
    %4600 = vmatpush1.msra.mxu0 0.0
    %4601 = vmatprep.subr.mxu0 0.0
    %4602 = vmatpush1.msra.mxu0 0.0
    %4603 = vmatprep.subr.mxu0 0.0
    %4604 = vmatpush1.msra.mxu0 0.0
    %4605 = vmatprep.subr.mxu0 0.0
    %4606 = vmatpush1.msra.mxu0 0.0
    %4607 = vmatprep.subr.mxu0 0.0
    %4608 = vmatpush1.msra.mxu0 0.0
    %4609 = vmatprep.subr.mxu0 0.0
    %4610 = vmatpush1.msra.mxu0 0.0
    %4611 = vmatprep.subr.mxu0 0.0
    %4612 = vmatpush1.msra.mxu0 0.0
    %4613 = vmatprep.subr.mxu0 0.0
    %4614 = vmatpush1.msra.mxu0 0.0
    %4615 = vmatprep.subr.mxu0 0.0
    %4616 = vmatpush1.msra.mxu0 0.0
    %4617 = vmatprep.subr.mxu0 0.0
    %4618 = vmatpush1.msra.mxu0 0.0
    %4619 = vmatprep.subr.mxu0 0.0
    %4620 = vmatpush1.msra.mxu0 0.0
    %4621 = vmatprep.subr.mxu0 0.0
    %4622 = vmatpush1.msra.mxu0 0.0
    %4623 = vmatprep.subr.mxu0 0.0
    %4624 = vmatpush1.msra.mxu0 0.0
    %4625 = vmatprep.subr.mxu0 0.0
    %4626 = vmatpush1.msra.mxu0 0.0
    %4627 = vmatprep.mubr.f32.mxu0 0.0
    %4628 = vmatmul.mubr.f32.gmra.mrb[0].mxu0 %v4561
    %v4629 = vpop.f32.mrb[0].mxu0
    %v4630 = vadd.f32 0.0, %v4629
    %v4631 = vpop.f32.mrb[0].mxu0
    %4632 = vdwg.mxu0
    %v4633 = vlog2.pop %v4630
    %v4634 = vmul.f32 %v4633, 0.6931472
    %v4636 = vrot.slane %v4634, 7
    %v4638 = vadd.f32 %v4555, %v4636
    %v4639 = vadd.f32 %v4638, %v4285
    %v4640 = vsel %vm3258, %v4639, %v4462
    %v4641 = vrot.slane %v2233, 7
    %v4643 = vsel %vm2266, %v4537, 0
    %4645 = vmatprep.subr.mxu0 0.0
    %4646 = vmatpush1.msra.mxu0 %v2272
    %4647 = vmatprep.subr.mxu0 0.0
    %4648 = vmatpush1.msra.mxu0 0.0
    %4649 = vmatprep.subr.mxu0 0.0
    %4650 = vmatpush1.msra.mxu0 0.0
    %4651 = vmatprep.subr.mxu0 0.0
    %4652 = vmatpush1.msra.mxu0 0.0
    %4653 = vmatprep.subr.mxu0 0.0
    %4654 = vmatpush1.msra.mxu0 0.0
    %4655 = vmatprep.subr.mxu0 0.0
    %4656 = vmatpush1.msra.mxu0 0.0
    %4657 = vmatprep.subr.mxu0 0.0
    %4658 = vmatpush1.msra.mxu0 0.0
    %4659 = vmatprep.subr.mxu0 0.0
    %4660 = vmatpush1.msra.mxu0 0.0
    %4661 = vmatprep.subr.mxu0 0.0
    %4662 = vmatpush1.msra.mxu0 0.0
    %4663 = vmatprep.subr.mxu0 0.0
    %4664 = vmatpush1.msra.mxu0 0.0
    %4665 = vmatprep.subr.mxu0 0.0
    %4666 = vmatpush1.msra.mxu0 0.0
    %4667 = vmatprep.subr.mxu0 0.0
    %4668 = vmatpush1.msra.mxu0 0.0
    %4669 = vmatprep.subr.mxu0 0.0
    %4670 = vmatpush1.msra.mxu0 0.0
    %4671 = vmatprep.subr.mxu0 0.0
    %4672 = vmatpush1.msra.mxu0 0.0
    %4673 = vmatprep.subr.mxu0 0.0
    %4674 = vmatpush1.msra.mxu0 0.0
    %4675 = vmatprep.subr.mxu0 0.0
    %4676 = vmatpush1.msra.mxu0 0.0
    %4677 = vmatprep.subr.mxu0 0.0
    %4678 = vmatpush1.msra.mxu0 0.0
    %4679 = vmatprep.subr.mxu0 0.0
    %4680 = vmatpush1.msra.mxu0 0.0
    %4681 = vmatprep.subr.mxu0 0.0
    %4682 = vmatpush1.msra.mxu0 0.0
    %4683 = vmatprep.subr.mxu0 0.0
    %4684 = vmatpush1.msra.mxu0 0.0
    %4685 = vmatprep.subr.mxu0 0.0
    %4686 = vmatpush1.msra.mxu0 0.0
    %4687 = vmatprep.subr.mxu0 0.0
    %4688 = vmatpush1.msra.mxu0 0.0
    %4689 = vmatprep.subr.mxu0 0.0
    %4690 = vmatpush1.msra.mxu0 0.0
    %4691 = vmatprep.subr.mxu0 0.0
    %4692 = vmatpush1.msra.mxu0 0.0
    %4693 = vmatprep.subr.mxu0 0.0
    %4694 = vmatpush1.msra.mxu0 0.0
    %4695 = vmatprep.subr.mxu0 0.0
    %4696 = vmatpush1.msra.mxu0 0.0
    %4697 = vmatprep.subr.mxu0 0.0
    %4698 = vmatpush1.msra.mxu0 0.0
    %4699 = vmatprep.subr.mxu0 0.0
    %4700 = vmatpush1.msra.mxu0 0.0
    %4701 = vmatprep.subr.mxu0 0.0
    %4702 = vmatpush1.msra.mxu0 0.0
    %4703 = vmatprep.subr.mxu0 0.0
    %4704 = vmatpush1.msra.mxu0 0.0
    %4705 = vmatprep.subr.mxu0 0.0
    %4706 = vmatpush1.msra.mxu0 0.0
    %4707 = vmatprep.subr.mxu0 0.0
    %4708 = vmatpush1.msra.mxu0 0.0
    %4709 = vmatprep.mubr.f32.mxu0 0.0
    %4710 = vmatmul.mubr.f32.gmra.mrb[0].mxu0 %v4643
    %v4711 = vpop.f32.mrb[0].mxu0
    %v4712 = vadd.f32 %v4641, %v4711
    %v4713 = vpop.f32.mrb[0].mxu0
    %4714 = vdwg.mxu0
    %v4716 = vrot.slane %v3349, 1
    %v4718 = vmul.f32 %v4712, %v4716
    %v4719 = vsel %vm2253, %v4718, 0.0
    %4720 = vadd.xlane.f32.xlu0 %v4719
    %v4721 = vpop.xlane.xlu0 %4720
    %v4723 = vrot.slane %v4721, 7
    %v4725 = vmul.f32 %v2236, %v4723
    %v4727 = vrot.slane %v4725, 1
    %4728 = vrot.lane.b32.xlu0 %v4727, 121
    %v4729 = vpop.permute.xlu0 %4728
    %v4731 = vadd.f32 %v4552, %v4729
    %v4732 = vsel %vm3840, %v4640, -inf
    %4733 = vmax.xlane.f32.xlu0 %v4732
    %v4734 = vpop.xlane.xlu0 %4733
    %v4735 = vsub.f32 %v4640, %v4734
    %v4736 = vmul.f32 %v4735, 1.442695
    %v4737 = vpow.pop %v4736
    %v4739 = vrot.slane %v4737, 1
    %v4740 = vsel %vm2266, %v4739, 0
    %4742 = vmatprep.subr.mxu0 0.0
    %4743 = vmatpush1.msra.mxu0 %v2367
    %4744 = vmatprep.subr.mxu0 0.0
    %4745 = vmatpush1.msra.mxu0 0.0
    %4746 = vmatprep.subr.mxu0 0.0
    %4747 = vmatpush1.msra.mxu0 0.0
    %4748 = vmatprep.subr.mxu0 0.0
    %4749 = vmatpush1.msra.mxu0 0.0
    %4750 = vmatprep.subr.mxu0 0.0
    %4751 = vmatpush1.msra.mxu0 0.0
    %4752 = vmatprep.subr.mxu0 0.0
    %4753 = vmatpush1.msra.mxu0 0.0
    %4754 = vmatprep.subr.mxu0 0.0
    %4755 = vmatpush1.msra.mxu0 0.0
    %4756 = vmatprep.subr.mxu0 0.0
    %4757 = vmatpush1.msra.mxu0 0.0
    %4758 = vmatprep.subr.mxu0 0.0
    %4759 = vmatpush1.msra.mxu0 0.0
    %4760 = vmatprep.subr.mxu0 0.0
    %4761 = vmatpush1.msra.mxu0 0.0
    %4762 = vmatprep.subr.mxu0 0.0
    %4763 = vmatpush1.msra.mxu0 0.0
    %4764 = vmatprep.subr.mxu0 0.0
    %4765 = vmatpush1.msra.mxu0 0.0
    %4766 = vmatprep.subr.mxu0 0.0
    %4767 = vmatpush1.msra.mxu0 0.0
    %4768 = vmatprep.subr.mxu0 0.0
    %4769 = vmatpush1.msra.mxu0 0.0
    %4770 = vmatprep.subr.mxu0 0.0
    %4771 = vmatpush1.msra.mxu0 0.0
    %4772 = vmatprep.subr.mxu0 0.0
    %4773 = vmatpush1.msra.mxu0 0.0
    %4774 = vmatprep.subr.mxu0 0.0
    %4775 = vmatpush1.msra.mxu0 0.0
    %4776 = vmatprep.subr.mxu0 0.0
    %4777 = vmatpush1.msra.mxu0 0.0
    %4778 = vmatprep.subr.mxu0 0.0
    %4779 = vmatpush1.msra.mxu0 0.0
    %4780 = vmatprep.subr.mxu0 0.0
    %4781 = vmatpush1.msra.mxu0 0.0
    %4782 = vmatprep.subr.mxu0 0.0
    %4783 = vmatpush1.msra.mxu0 0.0
    %4784 = vmatprep.subr.mxu0 0.0
    %4785 = vmatpush1.msra.mxu0 0.0
    %4786 = vmatprep.subr.mxu0 0.0
    %4787 = vmatpush1.msra.mxu0 0.0
    %4788 = vmatprep.subr.mxu0 0.0
    %4789 = vmatpush1.msra.mxu0 0.0
    %4790 = vmatprep.subr.mxu0 0.0
    %4791 = vmatpush1.msra.mxu0 0.0
    %4792 = vmatprep.subr.mxu0 0.0
    %4793 = vmatpush1.msra.mxu0 0.0
    %4794 = vmatprep.subr.mxu0 0.0
    %4795 = vmatpush1.msra.mxu0 0.0
    %4796 = vmatprep.subr.mxu0 0.0
    %4797 = vmatpush1.msra.mxu0 0.0
    %4798 = vmatprep.subr.mxu0 0.0
    %4799 = vmatpush1.msra.mxu0 0.0
    %4800 = vmatprep.subr.mxu0 0.0
    %4801 = vmatpush1.msra.mxu0 0.0
    %4802 = vmatprep.subr.mxu0 0.0
    %4803 = vmatpush1.msra.mxu0 0.0
    %4804 = vmatprep.subr.mxu0 0.0
    %4805 = vmatpush1.msra.mxu0 0.0
    %4806 = vmatprep.mubr.f32.mxu0 0.0
    %4807 = vmatmul.mubr.f32.gmra.mrb[0].mxu0 %v4740
    %v4808 = vpop.f32.mrb[0].mxu0
    %v4809 = vadd.f32 0.0, %v4808
    %v4810 = vpop.f32.mrb[0].mxu0
    %4811 = vdwg.mxu0
    %v4812 = vlog2.pop %v4809
    %v4813 = vmul.f32 %v4812, 0.6931472
    %v4815 = vrot.slane %v4813, 7
    %v4817 = vadd.f32 %v4734, %v4815
    %v4818 = vadd.f32 %v4817, %v4463
    %v4819 = vsel %vm3438, %v4818, %v4640
    %v4822 = vunpack.c.l.s4 1966171168
    %v4823 = vunpack.c.0.s8 %v4822
    %v4824 = vlaneseq
    %v4825 = vshrl.u32 %v4824, 7
    %v4826 = vsub.s32 %v4823, %v4825
    %v4827 = vrot.slane %v3439, %v4826
    %v4828 = vcombine.high %v4827, %v4827
    %v4830 = vunpack.c.l.s4 1966171168
    %v4831 = vunpack.c.0.s8 %v4830
    %v4832 = vlaneseq
    %v4833 = vshrl.u32 %v4832, 7
    %v4834 = vsub.s32 %v4831, %v4833
    %v4835 = vrot.slane %v4828, %v4834
    %v4837 = vmul.f32 %v2239, %v4835
    %v4838 = vsel %vm2253, %v4837, 0.0
    %4839 = vadd.xlane.f32.xlu0 %v4838
    %v4840 = vpop.xlane.xlu0 %4839
    %v4841 = vadd.f32 %v4731, %v4840
    %v4843 = vlaneseq
    %v4844 = vshrl.u32 %v4843, 7
    %v4845 = vsub.s32 0, %v4844
    %v4846 = vrot.slane %v2239, %v4845
    %v4848 = vadd.f32 %v4819, %v4846
    %v4849 = vsel %vm3840, %v4848, -inf
    %4850 = vmax.xlane.f32.xlu0 %v4849
    %v4851 = vpop.xlane.xlu0 %4850
    %v4852 = vsub.f32 %v4848, %v4851
    %v4853 = vmul.f32 %v4852, 1.442695
    %v4854 = vpow.pop %v4853
    %v4855 = vsel %vm3840, %v4854, 0.0
    %4856 = vadd.xlane.f32.xlu0 %v4855
    %v4857 = vpop.xlane.xlu0 %4856
    %v4858 = vlog2.pop %v4857
    %v4859 = vmul.f32 %v4858, 0.6931472
    %v4860 = vadd.f32 %v4859, %v4851
    %v4862 = vrot.slane %v4860, 1
    %v4864 = vsub.f32 %v4841, %v4862
    %4866 = vrot.lane.b32.xlu0 %v4864, 1
    %v4867 = vpop.permute.xlu0 %4866
    %v4869 = vadd.f32 %v3543, %v4867
    %v4870 = vrcp.pop 2.0
    %v4871 = vmul.f32 %v4869, %v4870
    %v4872 = vsub.f32 0.0, %v4871
    %4874 = vrot.lane.b32.xlu0 %v4872, 127
    %v4875 = vpop.permute.xlu0 %4874
    %vm4877 = vcmask 0
    %4878 = vst.msk [vmem:[#allocation2] sm:$0x1] %vm4877, %v4875
    // Predicated region
    $region142: #{_nll_fn.1} parent=1 // pred_check
      _
    $region143: #{_nll_fn.1} parent=1 // pred_check_branch
      %4880 = sbr.rel (0) target = $region145
    $region144: #{_nll_fn.1} parent=1 // pred_region
      %s4882 = ssub.s32 16, 16
      %4883 = vsyncadd [#allocation3], %s4882
      %s4885 = sshll.u32 [#allocation2], 4
      %s4886 = int_to_ptr.vmem [resolvable:$true] %s4885
      %4888 = dma.vmem_to_hbm [thread:$0]  %s4886, 16, %s71, [#allocation3]
    $region145: #{_nll_fn.1} parent=1 // pred_fallthru
      _
    // Predicated region
    $region146: #{_nll_fn.1} parent=1 // pred_check
      _
    $region147: #{_nll_fn.1} parent=1 // pred_check_branch
      %4890 = sbr.rel (0) target = $region149
    $region148: #{_nll_fn.1} parent=1 // pred_region
      %4891 = dma.done [#allocation3], 16
    $region149: #{_nll_fn.1} parent=1 // pred_fallthru
      _
    %4892 = vsyncpa [#allocation3], 1

</llo_original>
